<compile_context>
chip_gen: v7x
topology: tpu7x:2x2x1
jax: 0.10.0
libtpu: 0.0.40
codegen_flags: <defaults>
</compile_context>

<pallas_src>
import functools
import math

import jax
import jax.numpy as jnp
from jax import lax
from jax.experimental import pallas as pl
from jax.experimental.pallas import tpu as pltpu


def _layer_norm_f32(x, gamma, beta, eps):
    """LayerNorm over the last dim, all math in f32. gamma/beta are (1, D)."""
    mu = jnp.mean(x, axis=-1, keepdims=True)
    xc = x - mu
    var = jnp.mean(xc * xc, axis=-1, keepdims=True)
    inv = lax.rsqrt(var + eps)              # EUP slot
    return xc * inv * gamma + beta


def _mha_f32(q_in, kv_in, w_ref, b_ref, *, n_heads, head_dim, mask=None):
    """Multi-head attention for one query tile.

    q_in : (TQ, D) f32, kv_in : (S_kv, D) f32
    w_ref: (4, D, D) stacked [Wq, Wk, Wv, Wo]; b_ref: (4, D) stacked biases.
    Softmax is computed per q-tile in f32 (no (S, S) logits are ever materialized).
    """
    f32 = jnp.float32
    wq, wk, wv, wo = w_ref[0], w_ref[1], w_ref[2], w_ref[3]
    bq, bk, bv, bo = b_ref[0:1, :], b_ref[1:2, :], b_ref[2:3, :], b_ref[3:4, :]

    q = jnp.dot(q_in, wq, preferred_element_type=f32) + bq      # (TQ, D)
    k = jnp.dot(kv_in, wk, preferred_element_type=f32) + bk     # (S_kv, D)
    v = jnp.dot(kv_in, wv, preferred_element_type=f32) + bv     # (S_kv, D)

    scale = 1.0 / math.sqrt(head_dim)
    attn = None
    for h in range(n_heads):                                    # static unroll over heads
        lo = h * head_dim
        hi = lo + head_dim
        qh = q[:, lo:hi] * scale                                 # (TQ, hd)
        kh = k[:, lo:hi]                                         # (S_kv, hd)
        vh = v[:, lo:hi]
        # QK^T: contract over head_dim (no explicit transpose of K).
        s = lax.dot_general(qh, kh, (((1,), (1,)), ((), ())),
                            preferred_element_type=f32)          # (TQ, S_kv) f32
        if mask is not None:
            s = jnp.where(mask, s, -1e30)
        m = jnp.max(s, axis=-1, keepdims=True)
        p = jnp.exp(s - m)                                       # EUP
        l = jnp.sum(p, axis=-1, keepdims=True)
        oh = lax.dot_general(p, vh, (((1,), (0,)), ((), ())),
                             preferred_element_type=f32)         # (TQ, hd)
        oh = oh * pl.reciprocal(l, approx=True)
        # Fold the output projection per head (avoids a lane-dim concatenate):
        #   concat_h(oh) @ Wo == sum_h oh @ Wo[h*hd:(h+1)*hd, :]
        ph = jnp.dot(oh, wo[lo:hi, :], preferred_element_type=f32)
        attn = ph if attn is None else attn + ph
    return attn + bo                                             # (TQ, D)


def _decoder_layer_kernel(
    xq_ref, xkv_ref, ctx_ref,
    w_self_ref, b_self_ref, w_cross_ref, b_cross_ref,
    w1_ref, b1_ref, w2_ref, b2_ref,
    ln_g_ref, ln_b_ref,
    o_ref,
    *, n_heads, head_dim, tq, s_tgt, eps1, eps2, eps3,
):
    f32 = jnp.float32
    xq = xq_ref[0].astype(f32)      # (TQ, D)  query tile
    xkv = xkv_ref[0].astype(f32)    # (S_tgt, D) self-attn keys/values
    ctx = ctx_ref[0].astype(f32)    # (S_ctx, D) cross-attn keys/values

    # Causal target mask generated in-kernel (no mask tensor shipped from HBM).
    q_start = pl.program_id(1) * tq
    row = lax.broadcasted_iota(jnp.int32, (tq, s_tgt), 0) + q_start
    col = lax.broadcasted_iota(jnp.int32, (tq, s_tgt), 1)
    causal = row >= col

    # --- self attention + add & norm (dropout1 = identity) --------------------
    sa = _mha_f32(xq, xkv, w_self_ref, b_self_ref,
                  n_heads=n_heads, head_dim=head_dim, mask=causal)
    h1 = _layer_norm_f32(xq + sa, ln_g_ref[0:1, :], ln_b_ref[0:1, :], eps1)

    # --- cross attention + add & norm (dropout2 = identity) -------------------
    ca = _mha_f32(h1, ctx, w_cross_ref, b_cross_ref,
                  n_heads=n_heads, head_dim=head_dim, mask=None)
    h2 = _layer_norm_f32(h1 + ca, ln_g_ref[1:2, :], ln_b_ref[1:2, :], eps2)

    # --- feed forward (Linear -> ReLU -> Linear) + add & norm -----------------
    hid = jnp.dot(h2, w1_ref[...], preferred_element_type=f32) + b1_ref[...]
    hid = jnp.maximum(hid, 0.0)
    ff = jnp.dot(hid, w2_ref[...], preferred_element_type=f32) + b2_ref[...]
    h3 = _layer_norm_f32(h2 + ff, ln_g_ref[2:3, :], ln_b_ref[2:3, :], eps3)

    o_ref[0] = h3.astype(o_ref.dtype)


def transformer_decoder_layer(x, context, params, *, n_heads, tq=None,
                              eps1=1e-6, eps2=1e-5, eps3=1e-6):
    """Fused decoder layer. x: (B, S_tgt, D), context: (B, S_ctx, D)."""
    B, S_tgt, D = x.shape
    _, S_ctx, _ = context.shape
    assert D % n_heads == 0
    head_dim = D // n_heads

    if tq is None:
        tq = S_tgt
        for cand in (256, 128, 64, 32, 16, 8):
            if S_tgt % cand == 0:
                tq = cand
                break
    assert S_tgt % tq == 0
    n_q = S_tgt // tq

    kernel = functools.partial(
        _decoder_layer_kernel,
        n_heads=n_heads, head_dim=head_dim, tq=tq, s_tgt=S_tgt,
        eps1=eps1, eps2=eps2, eps3=eps3)

    def const_map(ndim):
        return lambda b, q: (0,) * ndim

    in_specs = [
        # activations: query tile varies with (b, q); K/V slabs vary only with b.
        pl.BlockSpec((1, tq, D), lambda b, q: (b, q, 0)),
        pl.BlockSpec((1, S_tgt, D), lambda b, q: (b, 0, 0)),
        pl.BlockSpec((1, S_ctx, D), lambda b, q: (b, 0, 0)),
        # weights: grid-invariant index maps -> stay resident in VMEM across grid steps.
        pl.BlockSpec((4, D, D), const_map(3)),       # self-attn Wq/Wk/Wv/Wo
        pl.BlockSpec((4, D), const_map(2)),          # self-attn biases
        pl.BlockSpec((4, D, D), const_map(3)),       # cross-attn Wq/Wk/Wv/Wo
        pl.BlockSpec((4, D), const_map(2)),          # cross-attn biases
        pl.BlockSpec(params["w1"].shape, const_map(2)),
        pl.BlockSpec(params["b1"].shape, const_map(2)),
        pl.BlockSpec(params["w2"].shape, const_map(2)),
        pl.BlockSpec(params["b2"].shape, const_map(2)),
        pl.BlockSpec(params["ln_g"].shape, const_map(2)),
        pl.BlockSpec(params["ln_b"].shape, const_map(2)),
    ]
    out_spec = pl.BlockSpec((1, tq, D), lambda b, q: (b, q, 0))

    grid_spec = pltpu.PrefetchScalarGridSpec(
        num_scalar_prefetch=0,
        grid=(B, n_q),
        in_specs=in_specs,
        out_specs=out_spec,
    )

    return pl.pallas_call(
        kernel,
        grid_spec=grid_spec,
        out_shape=jax.ShapeDtypeStruct((B, S_tgt, D), x.dtype),
        compiler_params=pltpu.CompilerParams(
            dimension_semantics=("parallel", "parallel"),
            vmem_limit_bytes=64 * 1024 * 1024,
        ),
    )(x, x, context,
      params["w_self"], params["b_self"],
      params["w_cross"], params["b_cross"],
      params["w1"], params["b1"], params["w2"], params["b2"],
      params["ln_g"], params["ln_b"])


def init_params(key, d_model, dim_ff, dtype=jnp.float32):
    ks = jax.random.split(key, 6)
    sd = 1.0 / math.sqrt(d_model)
    sf = 1.0 / math.sqrt(dim_ff)
    return {
        "w_self": (jax.random.normal(ks[0], (4, d_model, d_model)) * sd).astype(dtype),
        "b_self": (jax.random.normal(ks[1], (4, d_model)) * 0.02).astype(dtype),
        "w_cross": (jax.random.normal(ks[2], (4, d_model, d_model)) * sd).astype(dtype),
        "b_cross": (jax.random.normal(ks[3], (4, d_model)) * 0.02).astype(dtype),
        "w1": (jax.random.normal(ks[4], (d_model, dim_ff)) * sd).astype(dtype),
        "b1": jnp.zeros((1, dim_ff), dtype),
        "w2": (jax.random.normal(ks[5], (dim_ff, d_model)) * sf).astype(dtype),
        "b2": jnp.zeros((1, d_model), dtype),
        "ln_g": jnp.ones((3, d_model), dtype),
        "ln_b": jnp.zeros((3, d_model), dtype),
    }


if __name__ == "__main__":
    B, S_TGT, S_CTX, D, H, F = 2, 16, 8, 128, 4, 256

    key = jax.random.PRNGKey(0)
    kx, kc, kp = jax.random.split(key, 3)
    x = jax.random.normal(kx, (B, S_TGT, D), dtype=jnp.float32)
    context = jax.random.normal(kc, (B, S_CTX, D), dtype=jnp.float32)
    params = init_params(kp, D, F, dtype=jnp.float32)

    out = transformer_decoder_layer(x, context, params, n_heads=H, tq=8)
    out = jax.block_until_ready(out)
    assert out.shape == (B, S_TGT, D)
    print("KERNEL_OK")
</pallas_src>

<mosaic_0001>
module attributes {stable_mosaic.version = 11 : i64} {
  func.func @_decoder_layer_kernel(%arg0: i32, %arg1: i32, %arg2: memref<1x8x128xf32, #tpu.memory_space<vmem>>, %arg3: memref<1x16x128xf32, #tpu.memory_space<vmem>>, %arg4: memref<1x8x128xf32, #tpu.memory_space<vmem>>, %arg5: memref<4x128x128xf32, #tpu.memory_space<vmem>>, %arg6: memref<4x128xf32, #tpu.memory_space<vmem>>, %arg7: memref<4x128x128xf32, #tpu.memory_space<vmem>>, %arg8: memref<4x128xf32, #tpu.memory_space<vmem>>, %arg9: memref<128x256xf32, #tpu.memory_space<vmem>>, %arg10: memref<1x256xf32, #tpu.memory_space<vmem>>, %arg11: memref<256x128xf32, #tpu.memory_space<vmem>>, %arg12: memref<1x128xf32, #tpu.memory_space<vmem>>, %arg13: memref<3x128xf32, #tpu.memory_space<vmem>>, %arg14: memref<3x128xf32, #tpu.memory_space<vmem>>, %arg15: memref<1x8x128xf32, #tpu.memory_space<vmem>>) attributes {dimension_semantics = [#tpu.dimension_semantics<parallel>, #tpu.dimension_semantics<parallel>], iteration_bounds = array<i64: 2, 2>, scalar_prefetch = 0 : i64, scratch_operands = 0 : i64, tpu.core_type = #tpu.core_type<tc>, window_params = [{transform_indices = @transform_0, window_bounds = array<i64: 1, 8, 128>}, {transform_indices = @transform_1, window_bounds = array<i64: 1, 16, 128>}, {transform_indices = @transform_2, window_bounds = array<i64: 1, 8, 128>}, {pipeline_mode = #tpu.pipeline_mode<synchronous>, transform_indices = @transform_3, window_bounds = array<i64: 4, 128, 128>}, {pipeline_mode = #tpu.pipeline_mode<synchronous>, transform_indices = @transform_4, window_bounds = array<i64: 4, 128>}, {pipeline_mode = #tpu.pipeline_mode<synchronous>, transform_indices = @transform_5, window_bounds = array<i64: 4, 128, 128>}, {pipeline_mode = #tpu.pipeline_mode<synchronous>, transform_indices = @transform_6, window_bounds = array<i64: 4, 128>}, {pipeline_mode = #tpu.pipeline_mode<synchronous>, transform_indices = @transform_7, window_bounds = array<i64: 128, 256>}, {pipeline_mode = #tpu.pipeline_mode<synchronous>, transform_indices = @transform_8, window_bounds = array<i64: 1, 256>}, {pipeline_mode = #tpu.pipeline_mode<synchronous>, transform_indices = @transform_9, window_bounds = array<i64: 256, 128>}, {pipeline_mode = #tpu.pipeline_mode<synchronous>, transform_indices = @transform_10, window_bounds = array<i64: 1, 128>}, {pipeline_mode = #tpu.pipeline_mode<synchronous>, transform_indices = @transform_11, window_bounds = array<i64: 3, 128>}, {pipeline_mode = #tpu.pipeline_mode<synchronous>, transform_indices = @transform_12, window_bounds = array<i64: 3, 128>}, {transform_indices = @transform_13, window_bounds = array<i64: 1, 8, 128>}]} {
    %c0 = arith.constant 0 : index
    %c0_0 = arith.constant 0 : index
    %c0_1 = arith.constant 0 : index
    %0 = vector.load %arg2[%c0, %c0_0, %c0_1] : memref<1x8x128xf32, #tpu.memory_space<vmem>>, vector<1x8x128xf32>
    %1 = vector.shape_cast %0 : vector<1x8x128xf32> to vector<8x128xf32>
    %c0_2 = arith.constant 0 : index
    %c0_3 = arith.constant 0 : index
    %c0_4 = arith.constant 0 : index
    %2 = vector.load %arg3[%c0_2, %c0_3, %c0_4] : memref<1x16x128xf32, #tpu.memory_space<vmem>>, vector<1x16x128xf32>
    %3 = vector.shape_cast %2 : vector<1x16x128xf32> to vector<16x128xf32>
    %c0_5 = arith.constant 0 : index
    %c0_6 = arith.constant 0 : index
    %c0_7 = arith.constant 0 : index
    %4 = vector.load %arg4[%c0_5, %c0_6, %c0_7] : memref<1x8x128xf32, #tpu.memory_space<vmem>>, vector<1x8x128xf32>
    %5 = vector.shape_cast %4 : vector<1x8x128xf32> to vector<8x128xf32>
    %c8_i32 = arith.constant 8 : i32
    %6 = arith.muli %arg1, %c8_i32 : i32
    %7 = tpu.iota {dimensions = array<i32: 0>} : vector<8x16xi32>
    %8 = vector.broadcast %6 : i32 to vector<8x16xi32>
    %9 = arith.addi %7, %8 : vector<8x16xi32>
    %10 = tpu.iota {dimensions = array<i32: 1>} : vector<8x16xi32>
    %11 = arith.cmpi sge, %9, %10 : vector<8x16xi32>
    %c0_8 = arith.constant 0 : index
    %c0_9 = arith.constant 0 : index
    %c0_10 = arith.constant 0 : index
    %12 = vector.load %arg5[%c0_8, %c0_9, %c0_10] : memref<4x128x128xf32, #tpu.memory_space<vmem>>, vector<1x128x128xf32>
    %13 = vector.shape_cast %12 : vector<1x128x128xf32> to vector<128x128xf32>
    %c1 = arith.constant 1 : index
    %c0_11 = arith.constant 0 : index
    %c0_12 = arith.constant 0 : index
    %14 = vector.load %arg5[%c1, %c0_11, %c0_12] : memref<4x128x128xf32, #tpu.memory_space<vmem>>, vector<1x128x128xf32>
    %15 = vector.shape_cast %14 : vector<1x128x128xf32> to vector<128x128xf32>
    %c2 = arith.constant 2 : index
    %c0_13 = arith.constant 0 : index
    %c0_14 = arith.constant 0 : index
    %16 = vector.load %arg5[%c2, %c0_13, %c0_14] : memref<4x128x128xf32, #tpu.memory_space<vmem>>, vector<1x128x128xf32>
    %17 = vector.shape_cast %16 : vector<1x128x128xf32> to vector<128x128xf32>
    %c3 = arith.constant 3 : index
    %c0_15 = arith.constant 0 : index
    %c0_16 = arith.constant 0 : index
    %18 = vector.load %arg5[%c3, %c0_15, %c0_16] : memref<4x128x128xf32, #tpu.memory_space<vmem>>, vector<1x128x128xf32>
    %19 = vector.shape_cast %18 : vector<1x128x128xf32> to vector<128x128xf32>
    %c0_17 = arith.constant 0 : index
    %c0_18 = arith.constant 0 : index
    %20 = vector.load %arg6[%c0_17, %c0_18] : memref<4x128xf32, #tpu.memory_space<vmem>>, vector<1x128xf32>
    %c1_19 = arith.constant 1 : index
    %c0_20 = arith.constant 0 : index
    %21 = vector.load %arg6[%c1_19, %c0_20] : memref<4x128xf32, #tpu.memory_space<vmem>>, vector<1x128xf32>
    %c2_21 = arith.constant 2 : index
    %c0_22 = arith.constant 0 : index
    %22 = vector.load %arg6[%c2_21, %c0_22] : memref<4x128xf32, #tpu.memory_space<vmem>>, vector<1x128xf32>
    %c3_23 = arith.constant 3 : index
    %c0_24 = arith.constant 0 : index
    %23 = vector.load %arg6[%c3_23, %c0_24] : memref<4x128xf32, #tpu.memory_space<vmem>>, vector<1x128xf32>
    %cst = arith.constant dense<0.000000e+00> : vector<8x128xf32>
    %24 = tpu.matmul %1, %13, %cst {dimension_numbers = #tpu.dot_dimension_numbers<[1], [0], [0], [1], [0, 0, 1, 1], [], []>} : vector<8x128xf32>, vector<128x128xf32>, vector<8x128xf32> -> vector<8x128xf32>
    %25 = vector.broadcast %20 : vector<1x128xf32> to vector<8x128xf32>
    %26 = arith.addf %24, %25 : vector<8x128xf32>
    %cst_25 = arith.constant dense<0.000000e+00> : vector<16x128xf32>
    %27 = tpu.matmul %3, %15, %cst_25 {dimension_numbers = #tpu.dot_dimension_numbers<[1], [0], [0], [1], [0, 0, 1, 1], [], []>} : vector<16x128xf32>, vector<128x128xf32>, vector<16x128xf32> -> vector<16x128xf32>
    %28 = vector.broadcast %21 : vector<1x128xf32> to vector<16x128xf32>
    %29 = arith.addf %27, %28 : vector<16x128xf32>
    %cst_26 = arith.constant dense<0.000000e+00> : vector<16x128xf32>
    %30 = tpu.matmul %3, %17, %cst_26 {dimension_numbers = #tpu.dot_dimension_numbers<[1], [0], [0], [1], [0, 0, 1, 1], [], []>} : vector<16x128xf32>, vector<128x128xf32>, vector<16x128xf32> -> vector<16x128xf32>
    %31 = vector.broadcast %22 : vector<1x128xf32> to vector<16x128xf32>
    %32 = arith.addf %30, %31 : vector<16x128xf32>
    %33 = vector.extract_strided_slice %26 {offsets = [0, 0], sizes = [8, 32], strides = [1, 1]} : vector<8x128xf32> to vector<8x32xf32>
    %cst_27 = arith.constant 0.176776692 : f32
    %34 = vector.broadcast %cst_27 : f32 to vector<8x32xf32>
    %35 = arith.mulf %33, %34 : vector<8x32xf32>
    %36 = vector.extract_strided_slice %29 {offsets = [0, 0], sizes = [16, 32], strides = [1, 1]} : vector<16x128xf32> to vector<16x32xf32>
    %37 = vector.extract_strided_slice %32 {offsets = [0, 0], sizes = [16, 32], strides = [1, 1]} : vector<16x128xf32> to vector<16x32xf32>
    %cst_28 = arith.constant dense<0.000000e+00> : vector<8x16xf32>
    %38 = tpu.matmul %35, %36, %cst_28 {dimension_numbers = #tpu.dot_dimension_numbers<[1], [1], [0], [0], [0, 0, 1, 0], [], []>} : vector<8x32xf32>, vector<16x32xf32>, vector<8x16xf32> -> vector<8x16xf32>
    %cst_29 = arith.constant -1.000000e+30 : f32
    %39 = vector.broadcast %cst_29 : f32 to vector<8x16xf32>
    %40 = arith.select %11, %38, %39 : vector<8x16xi1>, vector<8x16xf32>
    %cst_30 = arith.constant dense<0xFF800000> : vector<8xf32>
    %41 = vector.multi_reduction <maximumf>, %40, %cst_30 [1] : vector<8x16xf32> to vector<8xf32>
    %42 = vector.shape_cast %41 : vector<8xf32> to vector<8x1xf32>
    %43 = vector.broadcast %42 : vector<8x1xf32> to vector<8x16xf32>
    %44 = arith.subf %40, %43 : vector<8x16xf32>
    %45 = math.exp %44 : vector<8x16xf32>
    %cst_31 = arith.constant dense<0.000000e+00> : vector<8xf32>
    %46 = vector.multi_reduction <add>, %45, %cst_31 [1] : vector<8x16xf32> to vector<8xf32>
    %47 = vector.shape_cast %46 : vector<8xf32> to vector<8x1xf32>
    %cst_32 = arith.constant dense<0.000000e+00> : vector<8x32xf32>
    %48 = tpu.matmul %45, %37, %cst_32 {dimension_numbers = #tpu.dot_dimension_numbers<[1], [0], [0], [1], [0, 0, 1, 1], [], []>} : vector<8x16xf32>, vector<16x32xf32>, vector<8x32xf32> -> vector<8x32xf32>
    %49 = tpu.reciprocal %47 {approx = true} : vector<8x1xf32> -> vector<8x1xf32>
    %50 = vector.broadcast %49 : vector<8x1xf32> to vector<8x32xf32>
    %51 = arith.mulf %48, %50 : vector<8x32xf32>
    %52 = vector.extract_strided_slice %19 {offsets = [0, 0], sizes = [32, 128], strides = [1, 1]} : vector<128x128xf32> to vector<32x128xf32>
    %cst_33 = arith.constant dense<0.000000e+00> : vector<8x128xf32>
    %53 = tpu.matmul %51, %52, %cst_33 {dimension_numbers = #tpu.dot_dimension_numbers<[1], [0], [0], [1], [0, 0, 1, 1], [], []>} : vector<8x32xf32>, vector<32x128xf32>, vector<8x128xf32> -> vector<8x128xf32>
    %54 = vector.extract_strided_slice %26 {offsets = [0, 32], sizes = [8, 32], strides = [1, 1]} : vector<8x128xf32> to vector<8x32xf32>
    %cst_34 = arith.constant 0.176776692 : f32
    %55 = vector.broadcast %cst_34 : f32 to vector<8x32xf32>
    %56 = arith.mulf %54, %55 : vector<8x32xf32>
    %57 = vector.extract_strided_slice %29 {offsets = [0, 32], sizes = [16, 32], strides = [1, 1]} : vector<16x128xf32> to vector<16x32xf32>
    %58 = vector.extract_strided_slice %32 {offsets = [0, 32], sizes = [16, 32], strides = [1, 1]} : vector<16x128xf32> to vector<16x32xf32>
    %cst_35 = arith.constant dense<0.000000e+00> : vector<8x16xf32>
    %59 = tpu.matmul %56, %57, %cst_35 {dimension_numbers = #tpu.dot_dimension_numbers<[1], [1], [0], [0], [0, 0, 1, 0], [], []>} : vector<8x32xf32>, vector<16x32xf32>, vector<8x16xf32> -> vector<8x16xf32>
    %cst_36 = arith.constant -1.000000e+30 : f32
    %60 = vector.broadcast %cst_36 : f32 to vector<8x16xf32>
    %61 = arith.select %11, %59, %60 : vector<8x16xi1>, vector<8x16xf32>
    %cst_37 = arith.constant dense<0xFF800000> : vector<8xf32>
    %62 = vector.multi_reduction <maximumf>, %61, %cst_37 [1] : vector<8x16xf32> to vector<8xf32>
    %63 = vector.shape_cast %62 : vector<8xf32> to vector<8x1xf32>
    %64 = vector.broadcast %63 : vector<8x1xf32> to vector<8x16xf32>
    %65 = arith.subf %61, %64 : vector<8x16xf32>
    %66 = math.exp %65 : vector<8x16xf32>
    %cst_38 = arith.constant dense<0.000000e+00> : vector<8xf32>
    %67 = vector.multi_reduction <add>, %66, %cst_38 [1] : vector<8x16xf32> to vector<8xf32>
    %68 = vector.shape_cast %67 : vector<8xf32> to vector<8x1xf32>
    %cst_39 = arith.constant dense<0.000000e+00> : vector<8x32xf32>
    %69 = tpu.matmul %66, %58, %cst_39 {dimension_numbers = #tpu.dot_dimension_numbers<[1], [0], [0], [1], [0, 0, 1, 1], [], []>} : vector<8x16xf32>, vector<16x32xf32>, vector<8x32xf32> -> vector<8x32xf32>
    %70 = tpu.reciprocal %68 {approx = true} : vector<8x1xf32> -> vector<8x1xf32>
    %71 = vector.broadcast %70 : vector<8x1xf32> to vector<8x32xf32>
    %72 = arith.mulf %69, %71 : vector<8x32xf32>
    %73 = vector.extract_strided_slice %19 {offsets = [32, 0], sizes = [32, 128], strides = [1, 1]} : vector<128x128xf32> to vector<32x128xf32>
    %cst_40 = arith.constant dense<0.000000e+00> : vector<8x128xf32>
    %74 = tpu.matmul %72, %73, %cst_40 {dimension_numbers = #tpu.dot_dimension_numbers<[1], [0], [0], [1], [0, 0, 1, 1], [], []>} : vector<8x32xf32>, vector<32x128xf32>, vector<8x128xf32> -> vector<8x128xf32>
    %75 = arith.addf %53, %74 : vector<8x128xf32>
    %76 = vector.extract_strided_slice %26 {offsets = [0, 64], sizes = [8, 32], strides = [1, 1]} : vector<8x128xf32> to vector<8x32xf32>
    %cst_41 = arith.constant 0.176776692 : f32
    %77 = vector.broadcast %cst_41 : f32 to vector<8x32xf32>
    %78 = arith.mulf %76, %77 : vector<8x32xf32>
    %79 = vector.extract_strided_slice %29 {offsets = [0, 64], sizes = [16, 32], strides = [1, 1]} : vector<16x128xf32> to vector<16x32xf32>
    %80 = vector.extract_strided_slice %32 {offsets = [0, 64], sizes = [16, 32], strides = [1, 1]} : vector<16x128xf32> to vector<16x32xf32>
    %cst_42 = arith.constant dense<0.000000e+00> : vector<8x16xf32>
    %81 = tpu.matmul %78, %79, %cst_42 {dimension_numbers = #tpu.dot_dimension_numbers<[1], [1], [0], [0], [0, 0, 1, 0], [], []>} : vector<8x32xf32>, vector<16x32xf32>, vector<8x16xf32> -> vector<8x16xf32>
    %cst_43 = arith.constant -1.000000e+30 : f32
    %82 = vector.broadcast %cst_43 : f32 to vector<8x16xf32>
    %83 = arith.select %11, %81, %82 : vector<8x16xi1>, vector<8x16xf32>
    %cst_44 = arith.constant dense<0xFF800000> : vector<8xf32>
    %84 = vector.multi_reduction <maximumf>, %83, %cst_44 [1] : vector<8x16xf32> to vector<8xf32>
    %85 = vector.shape_cast %84 : vector<8xf32> to vector<8x1xf32>
    %86 = vector.broadcast %85 : vector<8x1xf32> to vector<8x16xf32>
    %87 = arith.subf %83, %86 : vector<8x16xf32>
    %88 = math.exp %87 : vector<8x16xf32>
    %cst_45 = arith.constant dense<0.000000e+00> : vector<8xf32>
    %89 = vector.multi_reduction <add>, %88, %cst_45 [1] : vector<8x16xf32> to vector<8xf32>
    %90 = vector.shape_cast %89 : vector<8xf32> to vector<8x1xf32>
    %cst_46 = arith.constant dense<0.000000e+00> : vector<8x32xf32>
    %91 = tpu.matmul %88, %80, %cst_46 {dimension_numbers = #tpu.dot_dimension_numbers<[1], [0], [0], [1], [0, 0, 1, 1], [], []>} : vector<8x16xf32>, vector<16x32xf32>, vector<8x32xf32> -> vector<8x32xf32>
    %92 = tpu.reciprocal %90 {approx = true} : vector<8x1xf32> -> vector<8x1xf32>
    %93 = vector.broadcast %92 : vector<8x1xf32> to vector<8x32xf32>
    %94 = arith.mulf %91, %93 : vector<8x32xf32>
    %95 = vector.extract_strided_slice %19 {offsets = [64, 0], sizes = [32, 128], strides = [1, 1]} : vector<128x128xf32> to vector<32x128xf32>
    %cst_47 = arith.constant dense<0.000000e+00> : vector<8x128xf32>
    %96 = tpu.matmul %94, %95, %cst_47 {dimension_numbers = #tpu.dot_dimension_numbers<[1], [0], [0], [1], [0, 0, 1, 1], [], []>} : vector<8x32xf32>, vector<32x128xf32>, vector<8x128xf32> -> vector<8x128xf32>
    %97 = arith.addf %75, %96 : vector<8x128xf32>
    %98 = vector.extract_strided_slice %26 {offsets = [0, 96], sizes = [8, 32], strides = [1, 1]} : vector<8x128xf32> to vector<8x32xf32>
    %cst_48 = arith.constant 0.176776692 : f32
    %99 = vector.broadcast %cst_48 : f32 to vector<8x32xf32>
    %100 = arith.mulf %98, %99 : vector<8x32xf32>
    %101 = vector.extract_strided_slice %29 {offsets = [0, 96], sizes = [16, 32], strides = [1, 1]} : vector<16x128xf32> to vector<16x32xf32>
    %102 = vector.extract_strided_slice %32 {offsets = [0, 96], sizes = [16, 32], strides = [1, 1]} : vector<16x128xf32> to vector<16x32xf32>
    %cst_49 = arith.constant dense<0.000000e+00> : vector<8x16xf32>
    %103 = tpu.matmul %100, %101, %cst_49 {dimension_numbers = #tpu.dot_dimension_numbers<[1], [1], [0], [0], [0, 0, 1, 0], [], []>} : vector<8x32xf32>, vector<16x32xf32>, vector<8x16xf32> -> vector<8x16xf32>
    %cst_50 = arith.constant -1.000000e+30 : f32
    %104 = vector.broadcast %cst_50 : f32 to vector<8x16xf32>
    %105 = arith.select %11, %103, %104 : vector<8x16xi1>, vector<8x16xf32>
    %cst_51 = arith.constant dense<0xFF800000> : vector<8xf32>
    %106 = vector.multi_reduction <maximumf>, %105, %cst_51 [1] : vector<8x16xf32> to vector<8xf32>
    %107 = vector.shape_cast %106 : vector<8xf32> to vector<8x1xf32>
    %108 = vector.broadcast %107 : vector<8x1xf32> to vector<8x16xf32>
    %109 = arith.subf %105, %108 : vector<8x16xf32>
    %110 = math.exp %109 : vector<8x16xf32>
    %cst_52 = arith.constant dense<0.000000e+00> : vector<8xf32>
    %111 = vector.multi_reduction <add>, %110, %cst_52 [1] : vector<8x16xf32> to vector<8xf32>
    %112 = vector.shape_cast %111 : vector<8xf32> to vector<8x1xf32>
    %cst_53 = arith.constant dense<0.000000e+00> : vector<8x32xf32>
    %113 = tpu.matmul %110, %102, %cst_53 {dimension_numbers = #tpu.dot_dimension_numbers<[1], [0], [0], [1], [0, 0, 1, 1], [], []>} : vector<8x16xf32>, vector<16x32xf32>, vector<8x32xf32> -> vector<8x32xf32>
    %114 = tpu.reciprocal %112 {approx = true} : vector<8x1xf32> -> vector<8x1xf32>
    %115 = vector.broadcast %114 : vector<8x1xf32> to vector<8x32xf32>
    %116 = arith.mulf %113, %115 : vector<8x32xf32>
    %117 = vector.extract_strided_slice %19 {offsets = [96, 0], sizes = [32, 128], strides = [1, 1]} : vector<128x128xf32> to vector<32x128xf32>
    %cst_54 = arith.constant dense<0.000000e+00> : vector<8x128xf32>
    %118 = tpu.matmul %116, %117, %cst_54 {dimension_numbers = #tpu.dot_dimension_numbers<[1], [0], [0], [1], [0, 0, 1, 1], [], []>} : vector<8x32xf32>, vector<32x128xf32>, vector<8x128xf32> -> vector<8x128xf32>
    %119 = arith.addf %97, %118 : vector<8x128xf32>
    %120 = vector.broadcast %23 : vector<1x128xf32> to vector<8x128xf32>
    %121 = arith.addf %119, %120 : vector<8x128xf32>
    %122 = arith.addf %1, %121 : vector<8x128xf32>
    %c0_55 = arith.constant 0 : index
    %c0_56 = arith.constant 0 : index
    %123 = vector.load %arg13[%c0_55, %c0_56] : memref<3x128xf32, #tpu.memory_space<vmem>>, vector<1x128xf32>
    %c0_57 = arith.constant 0 : index
    %c0_58 = arith.constant 0 : index
    %124 = vector.load %arg14[%c0_57, %c0_58] : memref<3x128xf32, #tpu.memory_space<vmem>>, vector<1x128xf32>
    %cst_59 = arith.constant dense<0.000000e+00> : vector<8xf32>
    %125 = vector.multi_reduction <add>, %122, %cst_59 [1] : vector<8x128xf32> to vector<8xf32>
    %126 = vector.shape_cast %125 : vector<8xf32> to vector<8x1xf32>
    %cst_60 = arith.constant 1.280000e+02 : f32
    %127 = vector.broadcast %cst_60 : f32 to vector<8x1xf32>
    %128 = arith.divf %126, %127 : vector<8x1xf32>
    %129 = vector.broadcast %128 : vector<8x1xf32> to vector<8x128xf32>
    %130 = arith.subf %122, %129 : vector<8x128xf32>
    %131 = arith.mulf %130, %130 : vector<8x128xf32>
    %cst_61 = arith.constant dense<0.000000e+00> : vector<8xf32>
    %132 = vector.multi_reduction <add>, %131, %cst_61 [1] : vector<8x128xf32> to vector<8xf32>
    %133 = vector.shape_cast %132 : vector<8xf32> to vector<8x1xf32>
    %cst_62 = arith.constant 1.280000e+02 : f32
    %134 = vector.broadcast %cst_62 : f32 to vector<8x1xf32>
    %135 = arith.divf %133, %134 : vector<8x1xf32>
    %cst_63 = arith.constant 9.99999997E-7 : f32
    %136 = vector.broadcast %cst_63 : f32 to vector<8x1xf32>
    %137 = arith.addf %135, %136 : vector<8x1xf32>
    %138 = math.rsqrt %137 : vector<8x1xf32>
    %139 = vector.broadcast %138 : vector<8x1xf32> to vector<8x128xf32>
    %140 = arith.mulf %130, %139 : vector<8x128xf32>
    %141 = vector.broadcast %123 : vector<1x128xf32> to vector<8x128xf32>
    %142 = arith.mulf %140, %141 : vector<8x128xf32>
    %143 = vector.broadcast %124 : vector<1x128xf32> to vector<8x128xf32>
    %144 = arith.addf %142, %143 : vector<8x128xf32>
    %c0_64 = arith.constant 0 : index
    %c0_65 = arith.constant 0 : index
    %c0_66 = arith.constant 0 : index
    %145 = vector.load %arg7[%c0_64, %c0_65, %c0_66] : memref<4x128x128xf32, #tpu.memory_space<vmem>>, vector<1x128x128xf32>
    %146 = vector.shape_cast %145 : vector<1x128x128xf32> to vector<128x128xf32>
    %c1_67 = arith.constant 1 : index
    %c0_68 = arith.constant 0 : index
    %c0_69 = arith.constant 0 : index
    %147 = vector.load %arg7[%c1_67, %c0_68, %c0_69] : memref<4x128x128xf32, #tpu.memory_space<vmem>>, vector<1x128x128xf32>
    %148 = vector.shape_cast %147 : vector<1x128x128xf32> to vector<128x128xf32>
    %c2_70 = arith.constant 2 : index
    %c0_71 = arith.constant 0 : index
    %c0_72 = arith.constant 0 : index
    %149 = vector.load %arg7[%c2_70, %c0_71, %c0_72] : memref<4x128x128xf32, #tpu.memory_space<vmem>>, vector<1x128x128xf32>
    %150 = vector.shape_cast %149 : vector<1x128x128xf32> to vector<128x128xf32>
    %c3_73 = arith.constant 3 : index
    %c0_74 = arith.constant 0 : index
    %c0_75 = arith.constant 0 : index
    %151 = vector.load %arg7[%c3_73, %c0_74, %c0_75] : memref<4x128x128xf32, #tpu.memory_space<vmem>>, vector<1x128x128xf32>
    %152 = vector.shape_cast %151 : vector<1x128x128xf32> to vector<128x128xf32>
    %c0_76 = arith.constant 0 : index
    %c0_77 = arith.constant 0 : index
    %153 = vector.load %arg8[%c0_76, %c0_77] : memref<4x128xf32, #tpu.memory_space<vmem>>, vector<1x128xf32>
    %c1_78 = arith.constant 1 : index
    %c0_79 = arith.constant 0 : index
    %154 = vector.load %arg8[%c1_78, %c0_79] : memref<4x128xf32, #tpu.memory_space<vmem>>, vector<1x128xf32>
    %c2_80 = arith.constant 2 : index
    %c0_81 = arith.constant 0 : index
    %155 = vector.load %arg8[%c2_80, %c0_81] : memref<4x128xf32, #tpu.memory_space<vmem>>, vector<1x128xf32>
    %c3_82 = arith.constant 3 : index
    %c0_83 = arith.constant 0 : index
    %156 = vector.load %arg8[%c3_82, %c0_83] : memref<4x128xf32, #tpu.memory_space<vmem>>, vector<1x128xf32>
    %cst_84 = arith.constant dense<0.000000e+00> : vector<8x128xf32>
    %157 = tpu.matmul %144, %146, %cst_84 {dimension_numbers = #tpu.dot_dimension_numbers<[1], [0], [0], [1], [0, 0, 1, 1], [], []>} : vector<8x128xf32>, vector<128x128xf32>, vector<8x128xf32> -> vector<8x128xf32>
    %158 = vector.broadcast %153 : vector<1x128xf32> to vector<8x128xf32>
    %159 = arith.addf %157, %158 : vector<8x128xf32>
    %cst_85 = arith.constant dense<0.000000e+00> : vector<8x128xf32>
    %160 = tpu.matmul %5, %148, %cst_85 {dimension_numbers = #tpu.dot_dimension_numbers<[1], [0], [0], [1], [0, 0, 1, 1], [], []>} : vector<8x128xf32>, vector<128x128xf32>, vector<8x128xf32> -> vector<8x128xf32>
    %161 = vector.broadcast %154 : vector<1x128xf32> to vector<8x128xf32>
    %162 = arith.addf %160, %161 : vector<8x128xf32>
    %cst_86 = arith.constant dense<0.000000e+00> : vector<8x128xf32>
    %163 = tpu.matmul %5, %150, %cst_86 {dimension_numbers = #tpu.dot_dimension_numbers<[1], [0], [0], [1], [0, 0, 1, 1], [], []>} : vector<8x128xf32>, vector<128x128xf32>, vector<8x128xf32> -> vector<8x128xf32>
    %164 = vector.broadcast %155 : vector<1x128xf32> to vector<8x128xf32>
    %165 = arith.addf %163, %164 : vector<8x128xf32>
    %166 = vector.extract_strided_slice %159 {offsets = [0, 0], sizes = [8, 32], strides = [1, 1]} : vector<8x128xf32> to vector<8x32xf32>
    %cst_87 = arith.constant 0.176776692 : f32
    %167 = vector.broadcast %cst_87 : f32 to vector<8x32xf32>
    %168 = arith.mulf %166, %167 : vector<8x32xf32>
    %169 = vector.extract_strided_slice %162 {offsets = [0, 0], sizes = [8, 32], strides = [1, 1]} : vector<8x128xf32> to vector<8x32xf32>
    %170 = vector.extract_strided_slice %165 {offsets = [0, 0], sizes = [8, 32], strides = [1, 1]} : vector<8x128xf32> to vector<8x32xf32>
    %cst_88 = arith.constant dense<0.000000e+00> : vector<8x8xf32>
    %171 = tpu.matmul %168, %169, %cst_88 {dimension_numbers = #tpu.dot_dimension_numbers<[1], [1], [0], [0], [0, 0, 1, 0], [], []>} : vector<8x32xf32>, vector<8x32xf32>, vector<8x8xf32> -> vector<8x8xf32>
    %cst_89 = arith.constant dense<0xFF800000> : vector<8xf32>
    %172 = vector.multi_reduction <maximumf>, %171, %cst_89 [1] : vector<8x8xf32> to vector<8xf32>
    %173 = vector.shape_cast %172 : vector<8xf32> to vector<8x1xf32>
    %174 = vector.broadcast %173 : vector<8x1xf32> to vector<8x8xf32>
    %175 = arith.subf %171, %174 : vector<8x8xf32>
    %176 = math.exp %175 : vector<8x8xf32>
    %cst_90 = arith.constant dense<0.000000e+00> : vector<8xf32>
    %177 = vector.multi_reduction <add>, %176, %cst_90 [1] : vector<8x8xf32> to vector<8xf32>
    %178 = vector.shape_cast %177 : vector<8xf32> to vector<8x1xf32>
    %cst_91 = arith.constant dense<0.000000e+00> : vector<8x32xf32>
    %179 = tpu.matmul %176, %170, %cst_91 {dimension_numbers = #tpu.dot_dimension_numbers<[1], [0], [0], [1], [0, 0, 1, 1], [], []>} : vector<8x8xf32>, vector<8x32xf32>, vector<8x32xf32> -> vector<8x32xf32>
    %180 = tpu.reciprocal %178 {approx = true} : vector<8x1xf32> -> vector<8x1xf32>
    %181 = vector.broadcast %180 : vector<8x1xf32> to vector<8x32xf32>
    %182 = arith.mulf %179, %181 : vector<8x32xf32>
    %183 = vector.extract_strided_slice %152 {offsets = [0, 0], sizes = [32, 128], strides = [1, 1]} : vector<128x128xf32> to vector<32x128xf32>
    %cst_92 = arith.constant dense<0.000000e+00> : vector<8x128xf32>
    %184 = tpu.matmul %182, %183, %cst_92 {dimension_numbers = #tpu.dot_dimension_numbers<[1], [0], [0], [1], [0, 0, 1, 1], [], []>} : vector<8x32xf32>, vector<32x128xf32>, vector<8x128xf32> -> vector<8x128xf32>
    %185 = vector.extract_strided_slice %159 {offsets = [0, 32], sizes = [8, 32], strides = [1, 1]} : vector<8x128xf32> to vector<8x32xf32>
    %cst_93 = arith.constant 0.176776692 : f32
    %186 = vector.broadcast %cst_93 : f32 to vector<8x32xf32>
    %187 = arith.mulf %185, %186 : vector<8x32xf32>
    %188 = vector.extract_strided_slice %162 {offsets = [0, 32], sizes = [8, 32], strides = [1, 1]} : vector<8x128xf32> to vector<8x32xf32>
    %189 = vector.extract_strided_slice %165 {offsets = [0, 32], sizes = [8, 32], strides = [1, 1]} : vector<8x128xf32> to vector<8x32xf32>
    %cst_94 = arith.constant dense<0.000000e+00> : vector<8x8xf32>
    %190 = tpu.matmul %187, %188, %cst_94 {dimension_numbers = #tpu.dot_dimension_numbers<[1], [1], [0], [0], [0, 0, 1, 0], [], []>} : vector<8x32xf32>, vector<8x32xf32>, vector<8x8xf32> -> vector<8x8xf32>
    %cst_95 = arith.constant dense<0xFF800000> : vector<8xf32>
    %191 = vector.multi_reduction <maximumf>, %190, %cst_95 [1] : vector<8x8xf32> to vector<8xf32>
    %192 = vector.shape_cast %191 : vector<8xf32> to vector<8x1xf32>
    %193 = vector.broadcast %192 : vector<8x1xf32> to vector<8x8xf32>
    %194 = arith.subf %190, %193 : vector<8x8xf32>
    %195 = math.exp %194 : vector<8x8xf32>
    %cst_96 = arith.constant dense<0.000000e+00> : vector<8xf32>
    %196 = vector.multi_reduction <add>, %195, %cst_96 [1] : vector<8x8xf32> to vector<8xf32>
    %197 = vector.shape_cast %196 : vector<8xf32> to vector<8x1xf32>
    %cst_97 = arith.constant dense<0.000000e+00> : vector<8x32xf32>
    %198 = tpu.matmul %195, %189, %cst_97 {dimension_numbers = #tpu.dot_dimension_numbers<[1], [0], [0], [1], [0, 0, 1, 1], [], []>} : vector<8x8xf32>, vector<8x32xf32>, vector<8x32xf32> -> vector<8x32xf32>
    %199 = tpu.reciprocal %197 {approx = true} : vector<8x1xf32> -> vector<8x1xf32>
    %200 = vector.broadcast %199 : vector<8x1xf32> to vector<8x32xf32>
    %201 = arith.mulf %198, %200 : vector<8x32xf32>
    %202 = vector.extract_strided_slice %152 {offsets = [32, 0], sizes = [32, 128], strides = [1, 1]} : vector<128x128xf32> to vector<32x128xf32>
    %cst_98 = arith.constant dense<0.000000e+00> : vector<8x128xf32>
    %203 = tpu.matmul %201, %202, %cst_98 {dimension_numbers = #tpu.dot_dimension_numbers<[1], [0], [0], [1], [0, 0, 1, 1], [], []>} : vector<8x32xf32>, vector<32x128xf32>, vector<8x128xf32> -> vector<8x128xf32>
    %204 = arith.addf %184, %203 : vector<8x128xf32>
    %205 = vector.extract_strided_slice %159 {offsets = [0, 64], sizes = [8, 32], strides = [1, 1]} : vector<8x128xf32> to vector<8x32xf32>
    %cst_99 = arith.constant 0.176776692 : f32
    %206 = vector.broadcast %cst_99 : f32 to vector<8x32xf32>
    %207 = arith.mulf %205, %206 : vector<8x32xf32>
    %208 = vector.extract_strided_slice %162 {offsets = [0, 64], sizes = [8, 32], strides = [1, 1]} : vector<8x128xf32> to vector<8x32xf32>
    %209 = vector.extract_strided_slice %165 {offsets = [0, 64], sizes = [8, 32], strides = [1, 1]} : vector<8x128xf32> to vector<8x32xf32>
    %cst_100 = arith.constant dense<0.000000e+00> : vector<8x8xf32>
    %210 = tpu.matmul %207, %208, %cst_100 {dimension_numbers = #tpu.dot_dimension_numbers<[1], [1], [0], [0], [0, 0, 1, 0], [], []>} : vector<8x32xf32>, vector<8x32xf32>, vector<8x8xf32> -> vector<8x8xf32>
    %cst_101 = arith.constant dense<0xFF800000> : vector<8xf32>
    %211 = vector.multi_reduction <maximumf>, %210, %cst_101 [1] : vector<8x8xf32> to vector<8xf32>
    %212 = vector.shape_cast %211 : vector<8xf32> to vector<8x1xf32>
    %213 = vector.broadcast %212 : vector<8x1xf32> to vector<8x8xf32>
    %214 = arith.subf %210, %213 : vector<8x8xf32>
    %215 = math.exp %214 : vector<8x8xf32>
    %cst_102 = arith.constant dense<0.000000e+00> : vector<8xf32>
    %216 = vector.multi_reduction <add>, %215, %cst_102 [1] : vector<8x8xf32> to vector<8xf32>
    %217 = vector.shape_cast %216 : vector<8xf32> to vector<8x1xf32>
    %cst_103 = arith.constant dense<0.000000e+00> : vector<8x32xf32>
    %218 = tpu.matmul %215, %209, %cst_103 {dimension_numbers = #tpu.dot_dimension_numbers<[1], [0], [0], [1], [0, 0, 1, 1], [], []>} : vector<8x8xf32>, vector<8x32xf32>, vector<8x32xf32> -> vector<8x32xf32>
    %219 = tpu.reciprocal %217 {approx = true} : vector<8x1xf32> -> vector<8x1xf32>
    %220 = vector.broadcast %219 : vector<8x1xf32> to vector<8x32xf32>
    %221 = arith.mulf %218, %220 : vector<8x32xf32>
    %222 = vector.extract_strided_slice %152 {offsets = [64, 0], sizes = [32, 128], strides = [1, 1]} : vector<128x128xf32> to vector<32x128xf32>
    %cst_104 = arith.constant dense<0.000000e+00> : vector<8x128xf32>
    %223 = tpu.matmul %221, %222, %cst_104 {dimension_numbers = #tpu.dot_dimension_numbers<[1], [0], [0], [1], [0, 0, 1, 1], [], []>} : vector<8x32xf32>, vector<32x128xf32>, vector<8x128xf32> -> vector<8x128xf32>
    %224 = arith.addf %204, %223 : vector<8x128xf32>
    %225 = vector.extract_strided_slice %159 {offsets = [0, 96], sizes = [8, 32], strides = [1, 1]} : vector<8x128xf32> to vector<8x32xf32>
    %cst_105 = arith.constant 0.176776692 : f32
    %226 = vector.broadcast %cst_105 : f32 to vector<8x32xf32>
    %227 = arith.mulf %225, %226 : vector<8x32xf32>
    %228 = vector.extract_strided_slice %162 {offsets = [0, 96], sizes = [8, 32], strides = [1, 1]} : vector<8x128xf32> to vector<8x32xf32>
    %229 = vector.extract_strided_slice %165 {offsets = [0, 96], sizes = [8, 32], strides = [1, 1]} : vector<8x128xf32> to vector<8x32xf32>
    %cst_106 = arith.constant dense<0.000000e+00> : vector<8x8xf32>
    %230 = tpu.matmul %227, %228, %cst_106 {dimension_numbers = #tpu.dot_dimension_numbers<[1], [1], [0], [0], [0, 0, 1, 0], [], []>} : vector<8x32xf32>, vector<8x32xf32>, vector<8x8xf32> -> vector<8x8xf32>
    %cst_107 = arith.constant dense<0xFF800000> : vector<8xf32>
    %231 = vector.multi_reduction <maximumf>, %230, %cst_107 [1] : vector<8x8xf32> to vector<8xf32>
    %232 = vector.shape_cast %231 : vector<8xf32> to vector<8x1xf32>
    %233 = vector.broadcast %232 : vector<8x1xf32> to vector<8x8xf32>
    %234 = arith.subf %230, %233 : vector<8x8xf32>
    %235 = math.exp %234 : vector<8x8xf32>
    %cst_108 = arith.constant dense<0.000000e+00> : vector<8xf32>
    %236 = vector.multi_reduction <add>, %235, %cst_108 [1] : vector<8x8xf32> to vector<8xf32>
    %237 = vector.shape_cast %236 : vector<8xf32> to vector<8x1xf32>
    %cst_109 = arith.constant dense<0.000000e+00> : vector<8x32xf32>
    %238 = tpu.matmul %235, %229, %cst_109 {dimension_numbers = #tpu.dot_dimension_numbers<[1], [0], [0], [1], [0, 0, 1, 1], [], []>} : vector<8x8xf32>, vector<8x32xf32>, vector<8x32xf32> -> vector<8x32xf32>
    %239 = tpu.reciprocal %237 {approx = true} : vector<8x1xf32> -> vector<8x1xf32>
    %240 = vector.broadcast %239 : vector<8x1xf32> to vector<8x32xf32>
    %241 = arith.mulf %238, %240 : vector<8x32xf32>
    %242 = vector.extract_strided_slice %152 {offsets = [96, 0], sizes = [32, 128], strides = [1, 1]} : vector<128x128xf32> to vector<32x128xf32>
    %cst_110 = arith.constant dense<0.000000e+00> : vector<8x128xf32>
    %243 = tpu.matmul %241, %242, %cst_110 {dimension_numbers = #tpu.dot_dimension_numbers<[1], [0], [0], [1], [0, 0, 1, 1], [], []>} : vector<8x32xf32>, vector<32x128xf32>, vector<8x128xf32> -> vector<8x128xf32>
    %244 = arith.addf %224, %243 : vector<8x128xf32>
    %245 = vector.broadcast %156 : vector<1x128xf32> to vector<8x128xf32>
    %246 = arith.addf %244, %245 : vector<8x128xf32>
    %247 = arith.addf %144, %246 : vector<8x128xf32>
    %c1_111 = arith.constant 1 : index
    %c0_112 = arith.constant 0 : index
    %248 = vector.load %arg13[%c1_111, %c0_112] : memref<3x128xf32, #tpu.memory_space<vmem>>, vector<1x128xf32>
    %c1_113 = arith.constant 1 : index
    %c0_114 = arith.constant 0 : index
    %249 = vector.load %arg14[%c1_113, %c0_114] : memref<3x128xf32, #tpu.memory_space<vmem>>, vector<1x128xf32>
    %cst_115 = arith.constant dense<0.000000e+00> : vector<8xf32>
    %250 = vector.multi_reduction <add>, %247, %cst_115 [1] : vector<8x128xf32> to vector<8xf32>
    %251 = vector.shape_cast %250 : vector<8xf32> to vector<8x1xf32>
    %cst_116 = arith.constant 1.280000e+02 : f32
    %252 = vector.broadcast %cst_116 : f32 to vector<8x1xf32>
    %253 = arith.divf %251, %252 : vector<8x1xf32>
    %254 = vector.broadcast %253 : vector<8x1xf32> to vector<8x128xf32>
    %255 = arith.subf %247, %254 : vector<8x128xf32>
    %256 = arith.mulf %255, %255 : vector<8x128xf32>
    %cst_117 = arith.constant dense<0.000000e+00> : vector<8xf32>
    %257 = vector.multi_reduction <add>, %256, %cst_117 [1] : vector<8x128xf32> to vector<8xf32>
    %258 = vector.shape_cast %257 : vector<8xf32> to vector<8x1xf32>
    %cst_118 = arith.constant 1.280000e+02 : f32
    %259 = vector.broadcast %cst_118 : f32 to vector<8x1xf32>
    %260 = arith.divf %258, %259 : vector<8x1xf32>
    %cst_119 = arith.constant 9.99999974E-6 : f32
    %261 = vector.broadcast %cst_119 : f32 to vector<8x1xf32>
    %262 = arith.addf %260, %261 : vector<8x1xf32>
    %263 = math.rsqrt %262 : vector<8x1xf32>
    %264 = vector.broadcast %263 : vector<8x1xf32> to vector<8x128xf32>
    %265 = arith.mulf %255, %264 : vector<8x128xf32>
    %266 = vector.broadcast %248 : vector<1x128xf32> to vector<8x128xf32>
    %267 = arith.mulf %265, %266 : vector<8x128xf32>
    %268 = vector.broadcast %249 : vector<1x128xf32> to vector<8x128xf32>
    %269 = arith.addf %267, %268 : vector<8x128xf32>
    %c0_120 = arith.constant 0 : index
    %c0_121 = arith.constant 0 : index
    %270 = vector.load %arg9[%c0_120, %c0_121] : memref<128x256xf32, #tpu.memory_space<vmem>>, vector<128x256xf32>
    %cst_122 = arith.constant dense<0.000000e+00> : vector<8x256xf32>
    %271 = tpu.matmul %269, %270, %cst_122 {dimension_numbers = #tpu.dot_dimension_numbers<[1], [0], [0], [1], [0, 0, 1, 1], [], []>} : vector<8x128xf32>, vector<128x256xf32>, vector<8x256xf32> -> vector<8x256xf32>
    %c0_123 = arith.constant 0 : index
    %c0_124 = arith.constant 0 : index
    %272 = vector.load %arg10[%c0_123, %c0_124] : memref<1x256xf32, #tpu.memory_space<vmem>>, vector<1x256xf32>
    %273 = vector.broadcast %272 : vector<1x256xf32> to vector<8x256xf32>
    %274 = arith.addf %271, %273 : vector<8x256xf32>
    %cst_125 = arith.constant 0.000000e+00 : f32
    %275 = vector.broadcast %cst_125 : f32 to vector<8x256xf32>
    %276 = arith.maximumf %274, %275 : vector<8x256xf32>
    %c0_126 = arith.constant 0 : index
    %c0_127 = arith.constant 0 : index
    %277 = vector.load %arg11[%c0_126, %c0_127] : memref<256x128xf32, #tpu.memory_space<vmem>>, vector<256x128xf32>
    %cst_128 = arith.constant dense<0.000000e+00> : vector<8x128xf32>
    %278 = tpu.matmul %276, %277, %cst_128 {dimension_numbers = #tpu.dot_dimension_numbers<[1], [0], [0], [1], [0, 0, 1, 1], [], []>} : vector<8x256xf32>, vector<256x128xf32>, vector<8x128xf32> -> vector<8x128xf32>
    %c0_129 = arith.constant 0 : index
    %c0_130 = arith.constant 0 : index
    %279 = vector.load %arg12[%c0_129, %c0_130] : memref<1x128xf32, #tpu.memory_space<vmem>>, vector<1x128xf32>
    %280 = vector.broadcast %279 : vector<1x128xf32> to vector<8x128xf32>
    %281 = arith.addf %278, %280 : vector<8x128xf32>
    %282 = arith.addf %269, %281 : vector<8x128xf32>
    %c2_131 = arith.constant 2 : index
    %c0_132 = arith.constant 0 : index
    %283 = vector.load %arg13[%c2_131, %c0_132] : memref<3x128xf32, #tpu.memory_space<vmem>>, vector<1x128xf32>
    %c2_133 = arith.constant 2 : index
    %c0_134 = arith.constant 0 : index
    %284 = vector.load %arg14[%c2_133, %c0_134] : memref<3x128xf32, #tpu.memory_space<vmem>>, vector<1x128xf32>
    %cst_135 = arith.constant dense<0.000000e+00> : vector<8xf32>
    %285 = vector.multi_reduction <add>, %282, %cst_135 [1] : vector<8x128xf32> to vector<8xf32>
    %286 = vector.shape_cast %285 : vector<8xf32> to vector<8x1xf32>
    %cst_136 = arith.constant 1.280000e+02 : f32
    %287 = vector.broadcast %cst_136 : f32 to vector<8x1xf32>
    %288 = arith.divf %286, %287 : vector<8x1xf32>
    %289 = vector.broadcast %288 : vector<8x1xf32> to vector<8x128xf32>
    %290 = arith.subf %282, %289 : vector<8x128xf32>
    %291 = arith.mulf %290, %290 : vector<8x128xf32>
    %cst_137 = arith.constant dense<0.000000e+00> : vector<8xf32>
    %292 = vector.multi_reduction <add>, %291, %cst_137 [1] : vector<8x128xf32> to vector<8xf32>
    %293 = vector.shape_cast %292 : vector<8xf32> to vector<8x1xf32>
    %cst_138 = arith.constant 1.280000e+02 : f32
    %294 = vector.broadcast %cst_138 : f32 to vector<8x1xf32>
    %295 = arith.divf %293, %294 : vector<8x1xf32>
    %cst_139 = arith.constant 9.99999997E-7 : f32
    %296 = vector.broadcast %cst_139 : f32 to vector<8x1xf32>
    %297 = arith.addf %295, %296 : vector<8x1xf32>
    %298 = math.rsqrt %297 : vector<8x1xf32>
    %299 = vector.broadcast %298 : vector<8x1xf32> to vector<8x128xf32>
    %300 = arith.mulf %290, %299 : vector<8x128xf32>
    %301 = vector.broadcast %283 : vector<1x128xf32> to vector<8x128xf32>
    %302 = arith.mulf %300, %301 : vector<8x128xf32>
    %303 = vector.broadcast %284 : vector<1x128xf32> to vector<8x128xf32>
    %304 = arith.addf %302, %303 : vector<8x128xf32>
    %c0_140 = arith.constant 0 : index
    %c0_141 = arith.constant 0 : index
    %c0_142 = arith.constant 0 : index
    %305 = vector.load %arg15[%c0_140, %c0_141, %c0_142] : memref<1x8x128xf32, #tpu.memory_space<vmem>>, vector<1x8x128xf32>
    %306 = vector.shape_cast %305 : vector<1x8x128xf32> to vector<8x128xf32>
    %307 = vector.shape_cast %304 : vector<8x128xf32> to vector<1x8x128xf32>
    tpu.vector_store %arg15[%c0_140, %c0_141, %c0_142], %307 {strides = array<i32>} : memref<1x8x128xf32, #tpu.memory_space<vmem>>, vector<1x8x128xf32>,
    return
  }
  func.func @transform_0(%arg0: i32, %arg1: i32) -> (i32, i32, i32) {
    %c0_i32 = arith.constant 0 : i32
    %c0_i32_0 = arith.constant 0 : i32
    return %arg0, %arg1, %c0_i32 : i32, i32, i32
  }
  func.func @transform_1(%arg0: i32, %arg1: i32) -> (i32, i32, i32) {
    %c0_i32 = arith.constant 0 : i32
    %c0_i32_0 = arith.constant 0 : i32
    %c0_i32_1 = arith.constant 0 : i32
    return %arg0, %c0_i32, %c0_i32_0 : i32, i32, i32
  }
  func.func @transform_2(%arg0: i32, %arg1: i32) -> (i32, i32, i32) {
    %c0_i32 = arith.constant 0 : i32
    %c0_i32_0 = arith.constant 0 : i32
    %c0_i32_1 = arith.constant 0 : i32
    return %arg0, %c0_i32, %c0_i32_0 : i32, i32, i32
  }
  func.func @transform_3(%arg0: i32, %arg1: i32) -> (i32, i32, i32) {
    %c0_i32 = arith.constant 0 : i32
    %c0_i32_0 = arith.constant 0 : i32
    %c0_i32_1 = arith.constant 0 : i32
    %c0_i32_2 = arith.constant 0 : i32
    return %c0_i32, %c0_i32_0, %c0_i32_1 : i32, i32, i32
  }
  func.func @transform_4(%arg0: i32, %arg1: i32) -> (i32, i32) {
    %c0_i32 = arith.constant 0 : i32
    %c0_i32_0 = arith.constant 0 : i32
    %c0_i32_1 = arith.constant 0 : i32
    return %c0_i32, %c0_i32_0 : i32, i32
  }
  func.func @transform_5(%arg0: i32, %arg1: i32) -> (i32, i32, i32) {
    %c0_i32 = arith.constant 0 : i32
    %c0_i32_0 = arith.constant 0 : i32
    %c0_i32_1 = arith.constant 0 : i32
    %c0_i32_2 = arith.constant 0 : i32
    return %c0_i32, %c0_i32_0, %c0_i32_1 : i32, i32, i32
  }
  func.func @transform_6(%arg0: i32, %arg1: i32) -> (i32, i32) {
    %c0_i32 = arith.constant 0 : i32
    %c0_i32_0 = arith.constant 0 : i32
    %c0_i32_1 = arith.constant 0 : i32
    return %c0_i32, %c0_i32_0 : i32, i32
  }
  func.func @transform_7(%arg0: i32, %arg1: i32) -> (i32, i32) {
    %c0_i32 = arith.constant 0 : i32
    %c0_i32_0 = arith.constant 0 : i32
    %c0_i32_1 = arith.constant 0 : i32
    return %c0_i32, %c0_i32_0 : i32, i32
  }
  func.func @transform_8(%arg0: i32, %arg1: i32) -> (i32, i32) {
    %c0_i32 = arith.constant 0 : i32
    %c0_i32_0 = arith.constant 0 : i32
    %c0_i32_1 = arith.constant 0 : i32
    return %c0_i32, %c0_i32_0 : i32, i32
  }
  func.func @transform_9(%arg0: i32, %arg1: i32) -> (i32, i32) {
    %c0_i32 = arith.constant 0 : i32
    %c0_i32_0 = arith.constant 0 : i32
    %c0_i32_1 = arith.constant 0 : i32
    return %c0_i32, %c0_i32_0 : i32, i32
  }
  func.func @transform_10(%arg0: i32, %arg1: i32) -> (i32, i32) {
    %c0_i32 = arith.constant 0 : i32
    %c0_i32_0 = arith.constant 0 : i32
    %c0_i32_1 = arith.constant 0 : i32
    return %c0_i32, %c0_i32_0 : i32, i32
  }
  func.func @transform_11(%arg0: i32, %arg1: i32) -> (i32, i32) {
    %c0_i32 = arith.constant 0 : i32
    %c0_i32_0 = arith.constant 0 : i32
    %c0_i32_1 = arith.constant 0 : i32
    return %c0_i32, %c0_i32_0 : i32, i32
  }
  func.func @transform_12(%arg0: i32, %arg1: i32) -> (i32, i32) {
    %c0_i32 = arith.constant 0 : i32
    %c0_i32_0 = arith.constant 0 : i32
    %c0_i32_1 = arith.constant 0 : i32
    return %c0_i32, %c0_i32_0 : i32, i32
  }
  func.func @transform_13(%arg0: i32, %arg1: i32) -> (i32, i32, i32) {
    %c0_i32 = arith.constant 0 : i32
    %c0_i32_0 = arith.constant 0 : i32
    return %arg0, %arg1, %c0_i32 : i32, i32, i32
  }
}

</mosaic_0001>

<llo_original>
// kernel: tpu_custom_call.1
$region0: #{tpu_custom_call.1}
  #allocation0 [shape = 'u32[]', space=smem, size = 0x4, offset = 0x4, fixed_abs, tag = 'smem constant byte address 0x4 - core index']
  #allocation1 [shape = 'u32[144,128]{1,0:T(1,128)}', space=vmem, size = 0x12000, scoped, tag = 'internal scratch']
  %s0 = inlined_call_operand.hbm [shape: f32[2,16,128], index: 0, kind: input, shape index: {}]
  %s1 = inlined_call_operand.hbm [shape: f32[2,16,128], index: 1, kind: input, shape index: {}]
  %s2 = inlined_call_operand.hbm [shape: f32[2,8,128], index: 2, kind: input, shape index: {}]
  %s3 = inlined_call_operand.hbm [shape: f32[4,128,128], index: 3, kind: input, shape index: {}]
  %s4 = inlined_call_operand.hbm [shape: f32[4,128], index: 4, kind: input, shape index: {}]
  %s5 = inlined_call_operand.hbm [shape: f32[4,128,128], index: 5, kind: input, shape index: {}]
  %s6 = inlined_call_operand.hbm [shape: f32[4,128], index: 6, kind: input, shape index: {}]
  %s7 = inlined_call_operand.hbm [shape: f32[128,256], index: 7, kind: input, shape index: {}]
  %s8 = inlined_call_operand.hbm [shape: f32[1,256], index: 8, kind: input, shape index: {}]
  %s9 = inlined_call_operand.hbm [shape: f32[256,128], index: 9, kind: input, shape index: {}]
  %s10 = inlined_call_operand.hbm [shape: f32[1,128], index: 10, kind: input, shape index: {}]
  %s11 = inlined_call_operand.hbm [shape: f32[3,128], index: 11, kind: input, shape index: {}]
  %s12 = inlined_call_operand.hbm [shape: f32[3,128], index: 12, kind: input, shape index: {}]
  %s13 = inlined_call_operand.hbm [shape: f32[2,16,128], index: 13, kind: output, shape index: {}]
  %s14 = sld [smem:[#allocation0]]
  $region137: #{tpu_custom_call.1} parent=0
    _
  %s16 = ssub.s32 1, %s14
  %s17 = scalar_select 0, %s16, %s14
  $region1: #{tpu_custom_call.1} parent=0
    #allocation2 [shape = 'u8[8192]{0}', space=vmem, size = 0x2000, scoped, tag = 'input window, operand 0']
    #allocation3 [shape = 's32[2]{0}', space=sflag, size = 0x8, scoped, tag = 'scoped memory for tpu_custom_call.1']
    #allocation4 [shape = 's32[2]{0}', space=sflag, size = 0x8, scoped, tag = 'scoped memory for tpu_custom_call.1']
    #allocation5 [shape = 'u8[16384]{0}', space=vmem, size = 0x4000, scoped, tag = 'input window, operand 1']
    #allocation6 [shape = 's32[2]{0}', space=sflag, size = 0x8, scoped, tag = 'scoped memory for tpu_custom_call.1']
    #allocation7 [shape = 'u8[8192]{0}', space=vmem, size = 0x2000, scoped, tag = 'input window, operand 2']
    #allocation8 [shape = 'u8[262144]{0}', space=vmem, size = 0x40000, scoped, tag = 'input window, operand 3, single buffered']
    #allocation9 [shape = 's32[1]{0}', space=sflag, size = 0x4, scoped, tag = 'scoped memory for tpu_custom_call.1']
    #allocation10 [shape = 'u8[2048]{0}', space=vmem, size = 0x800, scoped, tag = 'input window, operand 4, single buffered']
    #allocation11 [shape = 'u8[262144]{0}', space=vmem, size = 0x40000, scoped, tag = 'input window, operand 5, single buffered']
    #allocation12 [shape = 's32[1]{0}', space=sflag, size = 0x4, scoped, tag = 'scoped memory for tpu_custom_call.1']
    #allocation13 [shape = 'u8[2048]{0}', space=vmem, size = 0x800, scoped, tag = 'input window, operand 6, single buffered']
    #allocation14 [shape = 'u8[131072]{0}', space=vmem, size = 0x20000, scoped, tag = 'input window, operand 7, single buffered']
    #allocation15 [shape = 's32[1]{0}', space=sflag, size = 0x4, scoped, tag = 'scoped memory for tpu_custom_call.1']
    #allocation16 [shape = 'u8[1024]{0}', space=vmem, size = 0x400, scoped, tag = 'input window, operand 8, single buffered']
    #allocation17 [shape = 'u8[131072]{0}', space=vmem, size = 0x20000, scoped, tag = 'input window, operand 9, single buffered']
    #allocation18 [shape = 's32[1]{0}', space=sflag, size = 0x4, scoped, tag = 'scoped memory for tpu_custom_call.1']
    #allocation19 [shape = 'u8[512]{0}', space=vmem, size = 0x400, scoped, tag = 'input window, operand 10, single buffered']
    #allocation20 [shape = 'u8[2048]{0}', space=vmem, size = 0x800, scoped, tag = 'input window, operand 11, single buffered']
    #allocation21 [shape = 's32[1]{0}', space=sflag, size = 0x4, scoped, tag = 'scoped memory for tpu_custom_call.1']
    #allocation22 [shape = 'u8[2048]{0}', space=vmem, size = 0x800, scoped, tag = 'input window, operand 12, single buffered']
    #allocation23 [shape = 'u8[8192]{0}', space=vmem, size = 0x2000, scoped, tag = 'output window, operand 0']
    %18 = vsyncpa [#allocation3], 0
    %s19 = scalar_lea.sflag [#allocation3], 1
    %20 = vsyncpa %s19, 0
    %21 = vsyncpa [#allocation6], 0
    %s22 = scalar_lea.sflag [#allocation6], 1
    %23 = vsyncpa %s22, 0
    %24 = vsyncpa [#allocation9], 0
    %25 = vsyncpa [#allocation12], 0
    %26 = vsyncpa [#allocation15], 0
    %27 = vsyncpa [#allocation18], 0
    %28 = vsyncpa [#allocation21], 0
    %29 = vsyncpa [#allocation4], 0
    %s30 = scalar_lea.sflag [#allocation4], 1
    %31 = vsyncpa %s30, 0
    loop: start=0, step=1, limit=6
    $region2: #{tpu_custom_call.1} parent=1 // loop_pre_header
      _
    $region3: #{tpu_custom_call.1} parent=1 // loop_header
      %s33 = sphi 0, %s37
      %p34 = scmp.ge.s32.totalorder %s33, 6
      %s40 = sphi 0, %s52
      %s41 = sphi 0, %s48
      %s42 = sphi 0, %s40
      %s43 = sphi 0, %s41
      %s44 = sphi 0, %s42
      %s45 = sphi 0, %s43
      %s57 = sphi 0, %s59
      %s60 = sphi 0, %s57
      %s61 = sphi 0, %s60
      %s77 = sphi 0, %s61
      %s83 = sphi 0, %s85
      %s86 = sphi 0, %s83
      %s87 = sphi 0, %s86
      %s103 = sphi 0, %s87
      %s109 = sphi 0, %s111
      %s112 = sphi 0, %s109
      %s113 = sphi 0, %s112
      %s129 = sphi 0, %s113
      %s133 = sphi 0, %s133
      %s135 = sphi 0, %s133
      %s136 = sphi 0, %s135
      %s150 = sphi 0, %s136
      %s154 = sphi 0, %s154
      %s156 = sphi 0, %s154
      %s157 = sphi 0, %s156
      %s171 = sphi 0, %s157
      %s175 = sphi 0, %s175
      %s177 = sphi 0, %s175
      %s178 = sphi 0, %s177
      %s192 = sphi 0, %s178
      %s196 = sphi 0, %s196
      %s198 = sphi 0, %s196
      %s199 = sphi 0, %s198
      %s213 = sphi 0, %s199
      %s217 = sphi 0, %s217
      %s219 = sphi 0, %s217
      %s220 = sphi 0, %s219
      %s234 = sphi 0, %s220
      %s238 = sphi 0, %s238
      %s240 = sphi 0, %s238
      %s241 = sphi 0, %s240
      %s255 = sphi 0, %s241
      %s259 = sphi 0, %s259
      %s261 = sphi 0, %s259
      %s262 = sphi 0, %s261
      %s276 = sphi 0, %s262
      %s280 = sphi 0, %s280
      %s282 = sphi 0, %s280
      %s283 = sphi 0, %s282
      %s297 = sphi 0, %s283
      %s301 = sphi 0, %s301
      %s303 = sphi 0, %s301
      %s304 = sphi 0, %s303
      %s318 = sphi 0, %s304
      %s322 = sphi 0, %s322
      %s324 = sphi 0, %s322
      %s325 = sphi 0, %s324
      %s339 = sphi 0, %s325
      %s347 = sphi 0, %s349
      %s350 = sphi 0, %s347
      %s351 = sphi 0, %s350
      %s367 = sphi 0, %s351
    $region4: #{tpu_custom_call.1} parent=1 // loop_header_branch
      %36 = sbr.rel (%p34) target = $region8
    $region5: #{tpu_custom_call.1} parent=1 // loop_body
      %s38 = ssub.s32 %s33, 1
      %s39 = ssub.s32 %s33, 2
      %s46 = sadd.s32 1, %s41
      %p47 = scmp.ge.s32.totalorder %s46, 2
      %s48 = scalar_select %p47, 0, %s46
      %s49 = sadd.s32 1, %s40
      %s50 = scalar_select %p47, %s49, %s40
      %p51 = scmp.ge.s32.totalorder %s50, 2
      %s52 = scalar_select %p51, 0, %s50
      %s53 = ssub.s32 %s40, %s52
      %s54 = ssub.s32 %s41, %s48
      %s55 = sor.u32 %s53, %s54
      %p56 = scmp.eq.s32.totalorder %s55, 0
      %s58 = sadd.s32 %s57, 1
      %s59 = scalar_select %p56, %s57, %s58
      %p62 = pneg %p56
      %p63 = scmp.eq.s32.totalorder %s33, 3
      %p64 = por %p62, %p63
      %p65 = scmp.ne.s32.totalorder %s57, %s60
      %p66 = scmp.eq.s32.totalorder %s33, 0
      %p67 = por %p65, %p66
      %p68 = scmp.ne.s32.totalorder %s57, %s60
      %p69 = scmp.eq.s32.totalorder %s38, 3
      %p70 = por %p68, %p69
      %p71 = scmp.ne.s32.totalorder %s60, %s61
      %p72 = scmp.eq.s32.totalorder %s38, 0
      %p73 = por %p71, %p72
      %p74 = scmp.ne.s32.totalorder %s60, %s61
      %p75 = scmp.eq.s32.totalorder %s39, 3
      %p76 = por %p74, %p75
      %p78 = scmp.ne.s32.totalorder %s61, %s77
      %p79 = scmp.eq.s32.totalorder %s39, 0
      %p80 = por %p78, %p79
      %s81 = ssub.s32 %s40, %s52
      %p82 = scmp.eq.s32.totalorder %s81, 0
      %s84 = sadd.s32 %s83, 1
      %s85 = scalar_select %p82, %s83, %s84
      %p88 = pneg %p82
      %p89 = scmp.eq.s32.totalorder %s33, 3
      %p90 = por %p88, %p89
      %p91 = scmp.ne.s32.totalorder %s83, %s86
      %p92 = scmp.eq.s32.totalorder %s33, 0
      %p93 = por %p91, %p92
      %p94 = scmp.ne.s32.totalorder %s83, %s86
      %p95 = scmp.eq.s32.totalorder %s38, 3
      %p96 = por %p94, %p95
      %p97 = scmp.ne.s32.totalorder %s86, %s87
      %p98 = scmp.eq.s32.totalorder %s38, 0
      %p99 = por %p97, %p98
      %p100 = scmp.ne.s32.totalorder %s86, %s87
      %p101 = scmp.eq.s32.totalorder %s39, 3
      %p102 = por %p100, %p101
      %p104 = scmp.ne.s32.totalorder %s87, %s103
      %p105 = scmp.eq.s32.totalorder %s39, 0
      %p106 = por %p104, %p105
      %s107 = ssub.s32 %s40, %s52
      %p108 = scmp.eq.s32.totalorder %s107, 0
      %s110 = sadd.s32 %s109, 1
      %s111 = scalar_select %p108, %s109, %s110
      %p114 = pneg %p108
      %p115 = scmp.eq.s32.totalorder %s33, 3
      %p116 = por %p114, %p115
      %p117 = scmp.ne.s32.totalorder %s109, %s112
      %p118 = scmp.eq.s32.totalorder %s33, 0
      %p119 = por %p117, %p118
      %p120 = scmp.ne.s32.totalorder %s109, %s112
      %p121 = scmp.eq.s32.totalorder %s38, 3
      %p122 = por %p120, %p121
      %p123 = scmp.ne.s32.totalorder %s112, %s113
      %p124 = scmp.eq.s32.totalorder %s38, 0
      %p125 = por %p123, %p124
      %p126 = scmp.ne.s32.totalorder %s112, %s113
      %p127 = scmp.eq.s32.totalorder %s39, 3
      %p128 = por %p126, %p127
      %p130 = scmp.ne.s32.totalorder %s113, %s129
      %p131 = scmp.eq.s32.totalorder %s39, 0
      %p132 = por %p130, %p131
      %s134 = sadd.s32 %s133, 1
      %p137 = scmp.eq.s32.totalorder %s33, 3
      %p138 = scmp.ne.s32.totalorder %s133, %s135
      %p139 = scmp.eq.s32.totalorder %s33, 0
      %p140 = por %p138, %p139
      %p141 = scmp.ne.s32.totalorder %s133, %s135
      %p142 = scmp.eq.s32.totalorder %s38, 3
      %p143 = por %p141, %p142
      %p144 = scmp.ne.s32.totalorder %s135, %s136
      %p145 = scmp.eq.s32.totalorder %s38, 0
      %p146 = por %p144, %p145
      %p147 = scmp.ne.s32.totalorder %s135, %s136
      %p148 = scmp.eq.s32.totalorder %s39, 3
      %p149 = por %p147, %p148
      %p151 = scmp.ne.s32.totalorder %s136, %s150
      %p152 = scmp.eq.s32.totalorder %s39, 0
      %p153 = por %p151, %p152
      %s155 = sadd.s32 %s154, 1
      %p158 = scmp.eq.s32.totalorder %s33, 3
      %p159 = scmp.ne.s32.totalorder %s154, %s156
      %p160 = scmp.eq.s32.totalorder %s33, 0
      %p161 = por %p159, %p160
      %p162 = scmp.ne.s32.totalorder %s154, %s156
      %p163 = scmp.eq.s32.totalorder %s38, 3
      %p164 = por %p162, %p163
      %p165 = scmp.ne.s32.totalorder %s156, %s157
      %p166 = scmp.eq.s32.totalorder %s38, 0
      %p167 = por %p165, %p166
      %p168 = scmp.ne.s32.totalorder %s156, %s157
      %p169 = scmp.eq.s32.totalorder %s39, 3
      %p170 = por %p168, %p169
      %p172 = scmp.ne.s32.totalorder %s157, %s171
      %p173 = scmp.eq.s32.totalorder %s39, 0
      %p174 = por %p172, %p173
      %s176 = sadd.s32 %s175, 1
      %p179 = scmp.eq.s32.totalorder %s33, 3
      %p180 = scmp.ne.s32.totalorder %s175, %s177
      %p181 = scmp.eq.s32.totalorder %s33, 0
      %p182 = por %p180, %p181
      %p183 = scmp.ne.s32.totalorder %s175, %s177
      %p184 = scmp.eq.s32.totalorder %s38, 3
      %p185 = por %p183, %p184
      %p186 = scmp.ne.s32.totalorder %s177, %s178
      %p187 = scmp.eq.s32.totalorder %s38, 0
      %p188 = por %p186, %p187
      %p189 = scmp.ne.s32.totalorder %s177, %s178
      %p190 = scmp.eq.s32.totalorder %s39, 3
      %p191 = por %p189, %p190
      %p193 = scmp.ne.s32.totalorder %s178, %s192
      %p194 = scmp.eq.s32.totalorder %s39, 0
      %p195 = por %p193, %p194
      %s197 = sadd.s32 %s196, 1
      %p200 = scmp.eq.s32.totalorder %s33, 3
      %p201 = scmp.ne.s32.totalorder %s196, %s198
      %p202 = scmp.eq.s32.totalorder %s33, 0
      %p203 = por %p201, %p202
      %p204 = scmp.ne.s32.totalorder %s196, %s198
      %p205 = scmp.eq.s32.totalorder %s38, 3
      %p206 = por %p204, %p205
      %p207 = scmp.ne.s32.totalorder %s198, %s199
      %p208 = scmp.eq.s32.totalorder %s38, 0
      %p209 = por %p207, %p208
      %p210 = scmp.ne.s32.totalorder %s198, %s199
      %p211 = scmp.eq.s32.totalorder %s39, 3
      %p212 = por %p210, %p211
      %p214 = scmp.ne.s32.totalorder %s199, %s213
      %p215 = scmp.eq.s32.totalorder %s39, 0
      %p216 = por %p214, %p215
      %s218 = sadd.s32 %s217, 1
      %p221 = scmp.eq.s32.totalorder %s33, 3
      %p222 = scmp.ne.s32.totalorder %s217, %s219
      %p223 = scmp.eq.s32.totalorder %s33, 0
      %p224 = por %p222, %p223
      %p225 = scmp.ne.s32.totalorder %s217, %s219
      %p226 = scmp.eq.s32.totalorder %s38, 3
      %p227 = por %p225, %p226
      %p228 = scmp.ne.s32.totalorder %s219, %s220
      %p229 = scmp.eq.s32.totalorder %s38, 0
      %p230 = por %p228, %p229
      %p231 = scmp.ne.s32.totalorder %s219, %s220
      %p232 = scmp.eq.s32.totalorder %s39, 3
      %p233 = por %p231, %p232
      %p235 = scmp.ne.s32.totalorder %s220, %s234
      %p236 = scmp.eq.s32.totalorder %s39, 0
      %p237 = por %p235, %p236
      %s239 = sadd.s32 %s238, 1
      %p242 = scmp.eq.s32.totalorder %s33, 3
      %p243 = scmp.ne.s32.totalorder %s238, %s240
      %p244 = scmp.eq.s32.totalorder %s33, 0
      %p245 = por %p243, %p244
      %p246 = scmp.ne.s32.totalorder %s238, %s240
      %p247 = scmp.eq.s32.totalorder %s38, 3
      %p248 = por %p246, %p247
      %p249 = scmp.ne.s32.totalorder %s240, %s241
      %p250 = scmp.eq.s32.totalorder %s38, 0
      %p251 = por %p249, %p250
      %p252 = scmp.ne.s32.totalorder %s240, %s241
      %p253 = scmp.eq.s32.totalorder %s39, 3
      %p254 = por %p252, %p253
      %p256 = scmp.ne.s32.totalorder %s241, %s255
      %p257 = scmp.eq.s32.totalorder %s39, 0
      %p258 = por %p256, %p257
      %s260 = sadd.s32 %s259, 1
      %p263 = scmp.eq.s32.totalorder %s33, 3
      %p264 = scmp.ne.s32.totalorder %s259, %s261
      %p265 = scmp.eq.s32.totalorder %s33, 0
      %p266 = por %p264, %p265
      %p267 = scmp.ne.s32.totalorder %s259, %s261
      %p268 = scmp.eq.s32.totalorder %s38, 3
      %p269 = por %p267, %p268
      %p270 = scmp.ne.s32.totalorder %s261, %s262
      %p271 = scmp.eq.s32.totalorder %s38, 0
      %p272 = por %p270, %p271
      %p273 = scmp.ne.s32.totalorder %s261, %s262
      %p274 = scmp.eq.s32.totalorder %s39, 3
      %p275 = por %p273, %p274
      %p277 = scmp.ne.s32.totalorder %s262, %s276
      %p278 = scmp.eq.s32.totalorder %s39, 0
      %p279 = por %p277, %p278
      %s281 = sadd.s32 %s280, 1
      %p284 = scmp.eq.s32.totalorder %s33, 3
      %p285 = scmp.ne.s32.totalorder %s280, %s282
      %p286 = scmp.eq.s32.totalorder %s33, 0
      %p287 = por %p285, %p286
      %p288 = scmp.ne.s32.totalorder %s280, %s282
      %p289 = scmp.eq.s32.totalorder %s38, 3
      %p290 = por %p288, %p289
      %p291 = scmp.ne.s32.totalorder %s282, %s283
      %p292 = scmp.eq.s32.totalorder %s38, 0
      %p293 = por %p291, %p292
      %p294 = scmp.ne.s32.totalorder %s282, %s283
      %p295 = scmp.eq.s32.totalorder %s39, 3
      %p296 = por %p294, %p295
      %p298 = scmp.ne.s32.totalorder %s283, %s297
      %p299 = scmp.eq.s32.totalorder %s39, 0
      %p300 = por %p298, %p299
      %s302 = sadd.s32 %s301, 1
      %p305 = scmp.eq.s32.totalorder %s33, 3
      %p306 = scmp.ne.s32.totalorder %s301, %s303
      %p307 = scmp.eq.s32.totalorder %s33, 0
      %p308 = por %p306, %p307
      %p309 = scmp.ne.s32.totalorder %s301, %s303
      %p310 = scmp.eq.s32.totalorder %s38, 3
      %p311 = por %p309, %p310
      %p312 = scmp.ne.s32.totalorder %s303, %s304
      %p313 = scmp.eq.s32.totalorder %s38, 0
      %p314 = por %p312, %p313
      %p315 = scmp.ne.s32.totalorder %s303, %s304
      %p316 = scmp.eq.s32.totalorder %s39, 3
      %p317 = por %p315, %p316
      %p319 = scmp.ne.s32.totalorder %s304, %s318
      %p320 = scmp.eq.s32.totalorder %s39, 0
      %p321 = por %p319, %p320
      %s323 = sadd.s32 %s322, 1
      %p326 = scmp.eq.s32.totalorder %s33, 3
      %p327 = scmp.ne.s32.totalorder %s322, %s324
      %p328 = scmp.eq.s32.totalorder %s33, 0
      %p329 = por %p327, %p328
      %p330 = scmp.ne.s32.totalorder %s322, %s324
      %p331 = scmp.eq.s32.totalorder %s38, 3
      %p332 = por %p330, %p331
      %p333 = scmp.ne.s32.totalorder %s324, %s325
      %p334 = scmp.eq.s32.totalorder %s38, 0
      %p335 = por %p333, %p334
      %p336 = scmp.ne.s32.totalorder %s324, %s325
      %p337 = scmp.eq.s32.totalorder %s39, 3
      %p338 = por %p336, %p337
      %p340 = scmp.ne.s32.totalorder %s325, %s339
      %p341 = scmp.eq.s32.totalorder %s39, 0
      %p342 = por %p340, %p341
      %s343 = ssub.s32 %s40, %s52
      %s344 = ssub.s32 %s41, %s48
      %s345 = sor.u32 %s343, %s344
      %p346 = scmp.eq.s32.totalorder %s345, 0
      %s348 = sadd.s32 %s347, 1
      %s349 = scalar_select %p346, %s347, %s348
      %p352 = pneg %p346
      %p353 = scmp.eq.s32.totalorder %s33, 3
      %p354 = por %p352, %p353
      %p355 = scmp.ne.s32.totalorder %s347, %s350
      %p356 = scmp.eq.s32.totalorder %s33, 0
      %p357 = por %p355, %p356
      %p358 = scmp.ne.s32.totalorder %s347, %s350
      %p359 = scmp.eq.s32.totalorder %s38, 3
      %p360 = por %p358, %p359
      %p361 = scmp.ne.s32.totalorder %s350, %s351
      %p362 = scmp.eq.s32.totalorder %s38, 0
      %p363 = por %p361, %p362
      %p364 = scmp.ne.s32.totalorder %s350, %s351
      %p365 = scmp.eq.s32.totalorder %s39, 3
      %p366 = por %p364, %p365
      %p368 = scmp.ne.s32.totalorder %s351, %s367
      %p369 = scmp.eq.s32.totalorder %s39, 0
      %p370 = por %p368, %p369
      %p371 = scmp.le.s32.totalorder 1, %s33
      %p372 = scmp.lt.s32.totalorder %s33, 5
      %p373 = pnand %p371, %p372
      %p374 = pneg %p373
      // Predicated region
      $region9: #{tpu_custom_call.1} parent=5 // pred_check
        _
      $region10: #{tpu_custom_call.1} parent=5 // pred_check_branch
        %376 = sbr.rel (%p373) target = $region12
      $region11: #{tpu_custom_call.1} parent=5 // pred_region
        %s377 = ssub.s32 %s33, 1
        // Predicated region
        $region13: #{tpu_custom_call.1} parent=11 // pred_check
          %p378 = pneg %p146
        $region14: #{tpu_custom_call.1} parent=11 // pred_check_branch
          %380 = sbr.rel (%p378) target = $region16
        $region15: #{tpu_custom_call.1} parent=11 // pred_region
          %s382 = ssub.s32 8192, 8192
          %383 = vsyncadd [#allocation9], %s382
          %s384 = sshll.u32 [#allocation8], 4
          %s385 = int_to_ptr.vmem [resolvable:$true] %s384
          %390 = dma.hbm_to_vmem [thread:$0]  %s3, 8192, %s385, [#allocation9], 128, 128, 8
        $region16: #{tpu_custom_call.1} parent=11 // pred_fallthru
          _
        // Predicated region
        $region17: #{tpu_custom_call.1} parent=11 // pred_check
          %p391 = pneg %p167
        $region18: #{tpu_custom_call.1} parent=11 // pred_check_branch
          %393 = sbr.rel (%p391) target = $region20
        $region19: #{tpu_custom_call.1} parent=11 // pred_region
          %s395 = ssub.s32 64, 64
          %396 = vsyncadd [#allocation9], %s395
          %s398 = sshll.u32 [#allocation10], 4
          %s399 = int_to_ptr.vmem [resolvable:$true] %s398
          %401 = dma.hbm_to_vmem [thread:$0]  %s4, 64, %s399, [#allocation9]
        $region20: #{tpu_custom_call.1} parent=11 // pred_fallthru
          _
        // Predicated region
        $region21: #{tpu_custom_call.1} parent=11 // pred_check
          %p402 = pneg %p188
        $region22: #{tpu_custom_call.1} parent=11 // pred_check_branch
          %404 = sbr.rel (%p402) target = $region24
        $region23: #{tpu_custom_call.1} parent=11 // pred_region
          %s406 = ssub.s32 8192, 8192
          %407 = vsyncadd [#allocation12], %s406
          %s408 = sshll.u32 [#allocation11], 4
          %s409 = int_to_ptr.vmem [resolvable:$true] %s408
          %414 = dma.hbm_to_vmem [thread:$0]  %s5, 8192, %s409, [#allocation12], 128, 128, 8
        $region24: #{tpu_custom_call.1} parent=11 // pred_fallthru
          _
        // Predicated region
        $region25: #{tpu_custom_call.1} parent=11 // pred_check
          %p415 = pneg %p209
        $region26: #{tpu_custom_call.1} parent=11 // pred_check_branch
          %417 = sbr.rel (%p415) target = $region28
        $region27: #{tpu_custom_call.1} parent=11 // pred_region
          %s419 = ssub.s32 64, 64
          %420 = vsyncadd [#allocation12], %s419
          %s422 = sshll.u32 [#allocation13], 4
          %s423 = int_to_ptr.vmem [resolvable:$true] %s422
          %425 = dma.hbm_to_vmem [thread:$0]  %s6, 64, %s423, [#allocation12]
        $region28: #{tpu_custom_call.1} parent=11 // pred_fallthru
          _
        // Predicated region
        $region29: #{tpu_custom_call.1} parent=11 // pred_check
          %p426 = pneg %p230
        $region30: #{tpu_custom_call.1} parent=11 // pred_check_branch
          %428 = sbr.rel (%p426) target = $region32
        $region31: #{tpu_custom_call.1} parent=11 // pred_region
          %s430 = ssub.s32 4096, 4096
          %431 = vsyncadd [#allocation15], %s430
          %s432 = sshll.u32 [#allocation14], 4
          %s433 = int_to_ptr.vmem [resolvable:$true] %s432
          %438 = dma.hbm_to_vmem [thread:$0]  %s7, 4096, %s433, [#allocation15], 256, 256, 16
        $region32: #{tpu_custom_call.1} parent=11 // pred_fallthru
          _
        // Predicated region
        $region33: #{tpu_custom_call.1} parent=11 // pred_check
          %p439 = pneg %p251
        $region34: #{tpu_custom_call.1} parent=11 // pred_check_branch
          %441 = sbr.rel (%p439) target = $region36
        $region35: #{tpu_custom_call.1} parent=11 // pred_region
          %s443 = ssub.s32 32, 32
          %444 = vsyncadd [#allocation15], %s443
          %s446 = sshll.u32 [#allocation16], 4
          %s447 = int_to_ptr.vmem [resolvable:$true] %s446
          %449 = dma.hbm_to_vmem [thread:$0]  %s8, 32, %s447, [#allocation15]
        $region36: #{tpu_custom_call.1} parent=11 // pred_fallthru
          _
        // Predicated region
        $region37: #{tpu_custom_call.1} parent=11 // pred_check
          %p450 = pneg %p272
        $region38: #{tpu_custom_call.1} parent=11 // pred_check_branch
          %452 = sbr.rel (%p450) target = $region40
        $region39: #{tpu_custom_call.1} parent=11 // pred_region
          %s454 = ssub.s32 4096, 4096
          %455 = vsyncadd [#allocation18], %s454
          %s456 = sshll.u32 [#allocation17], 4
          %s457 = int_to_ptr.vmem [resolvable:$true] %s456
          %462 = dma.hbm_to_vmem [thread:$0]  %s9, 4096, %s457, [#allocation18], 128, 128, 8
        $region40: #{tpu_custom_call.1} parent=11 // pred_fallthru
          _
        // Predicated region
        $region41: #{tpu_custom_call.1} parent=11 // pred_check
          %p463 = pneg %p293
        $region42: #{tpu_custom_call.1} parent=11 // pred_check_branch
          %465 = sbr.rel (%p463) target = $region44
        $region43: #{tpu_custom_call.1} parent=11 // pred_region
          %s467 = ssub.s32 16, 16
          %468 = vsyncadd [#allocation18], %s467
          %s470 = sshll.u32 [#allocation19], 4
          %s471 = int_to_ptr.vmem [resolvable:$true] %s470
          %473 = dma.hbm_to_vmem [thread:$0]  %s10, 16, %s471, [#allocation18]
        $region44: #{tpu_custom_call.1} parent=11 // pred_fallthru
          _
        // Predicated region
        $region45: #{tpu_custom_call.1} parent=11 // pred_check
          %p474 = pneg %p314
        $region46: #{tpu_custom_call.1} parent=11 // pred_check_branch
          %476 = sbr.rel (%p474) target = $region48
        $region47: #{tpu_custom_call.1} parent=11 // pred_region
          %s478 = ssub.s32 64, 64
          %479 = vsyncadd [#allocation21], %s478
          %s481 = sshll.u32 [#allocation20], 4
          %s482 = int_to_ptr.vmem [resolvable:$true] %s481
          %484 = dma.hbm_to_vmem [thread:$0]  %s11, 64, %s482, [#allocation21]
        $region48: #{tpu_custom_call.1} parent=11 // pred_fallthru
          _
        // Predicated region
        $region49: #{tpu_custom_call.1} parent=11 // pred_check
          %p485 = pneg %p335
        $region50: #{tpu_custom_call.1} parent=11 // pred_check_branch
          %487 = sbr.rel (%p485) target = $region52
        $region51: #{tpu_custom_call.1} parent=11 // pred_region
          %s489 = ssub.s32 64, 64
          %490 = vsyncadd [#allocation21], %s489
          %s492 = sshll.u32 [#allocation22], 4
          %s493 = int_to_ptr.vmem [resolvable:$true] %s492
          %495 = dma.hbm_to_vmem [thread:$0]  %s12, 64, %s493, [#allocation21]
        $region52: #{tpu_custom_call.1} parent=11 // pred_fallthru
          _
      $region12: #{tpu_custom_call.1} parent=5 // pred_fallthru
        _
      %p496 = scmp.lt.s32.totalorder %s33, 4
      // Predicated region
      $region53: #{tpu_custom_call.1} parent=5 // pred_check
        %p497 = pneg %p496
      $region54: #{tpu_custom_call.1} parent=5 // pred_check_branch
        %499 = sbr.rel (%p497) target = $region56
      $region55: #{tpu_custom_call.1} parent=5 // pred_region
        // Predicated region
        $region57: #{tpu_custom_call.1} parent=55 // pred_check
          %p500 = pneg %p67
        $region58: #{tpu_custom_call.1} parent=55 // pred_check_branch
          %502 = sbr.rel (%p500) target = $region60
        $region59: #{tpu_custom_call.1} parent=55 // pred_region
          %s503 = sand.u32 %s57, 1
          %s504 = scalar_lea.sflag [#allocation3], %s503
          %s505 = sand.u32 %s57, 1
          %s506 = smul.addr %s505, 8
          %s507 = scalar_lea.vmem [#allocation2], %s506
          %s509 = ssub.s32 128, 128
          %510 = vsyncadd %s504, %s509
          %s511 = smul.addr %s40, 2
          %s512 = sadd.s32 %s41, %s511
          %s513 = smul.addr %s512, 128
          %s514 = scalar_lea.hbm %s0, %s513
          %s516 = sshll.u32 %s507, 4
          %s517 = int_to_ptr.vmem [resolvable:$true] %s516
          %519 = dma.hbm_to_vmem [thread:$0]  %s514, 128, %s517, %s504
        $region60: #{tpu_custom_call.1} parent=55 // pred_fallthru
          _
        // Predicated region
        $region61: #{tpu_custom_call.1} parent=55 // pred_check
          %p520 = pneg %p93
        $region62: #{tpu_custom_call.1} parent=55 // pred_check_branch
          %522 = sbr.rel (%p520) target = $region64
        $region63: #{tpu_custom_call.1} parent=55 // pred_region
          %s523 = sand.u32 %s33, 1
          %s524 = scalar_lea.sflag [#allocation6], %s523
          %s525 = sand.u32 %s83, 1
          %s526 = smul.addr %s525, 16
          %s527 = scalar_lea.vmem [#allocation5], %s526
          %s529 = ssub.s32 256, 256
          %530 = vsyncadd %s524, %s529
          %s531 = smul.addr %s40, 2
          %s532 = smul.addr %s531, 128
          %s533 = scalar_lea.hbm %s1, %s532
          %s534 = sshll.u32 %s527, 4
          %s535 = int_to_ptr.vmem [resolvable:$true] %s534
          %540 = dma.hbm_to_vmem [thread:$0]  %s533, 256, %s535, %s524, 128, 128, 8
        $region64: #{tpu_custom_call.1} parent=55 // pred_fallthru
          _
        // Predicated region
        $region65: #{tpu_custom_call.1} parent=55 // pred_check
          %p541 = pneg %p119
        $region66: #{tpu_custom_call.1} parent=55 // pred_check_branch
          %543 = sbr.rel (%p541) target = $region68
        $region67: #{tpu_custom_call.1} parent=55 // pred_region
          %s544 = sand.u32 %s33, 1
          %s545 = scalar_lea.sflag [#allocation6], %s544
          %s546 = sand.u32 %s109, 1
          %s547 = smul.addr %s546, 8
          %s548 = scalar_lea.vmem [#allocation7], %s547
          %s550 = ssub.s32 128, 128
          %551 = vsyncadd %s545, %s550
          %s552 = smul.addr %s40, 128
          %s553 = scalar_lea.hbm %s2, %s552
          %s555 = sshll.u32 %s548, 4
          %s556 = int_to_ptr.vmem [resolvable:$true] %s555
          %558 = dma.hbm_to_vmem [thread:$0]  %s553, 128, %s556, %s545
        $region68: #{tpu_custom_call.1} parent=55 // pred_fallthru
          _
      $region56: #{tpu_custom_call.1} parent=5 // pred_fallthru
        _
      %p559 = scmp.le.s32.totalorder 1, %s33
      %p560 = scmp.lt.s32.totalorder %s33, 5
      %p561 = pnand %p559, %p560
      %p562 = pneg %p561
      // Predicated region
      $region69: #{tpu_custom_call.1} parent=5 // pred_check
        _
      $region70: #{tpu_custom_call.1} parent=5 // pred_check_branch
        %564 = sbr.rel (%p561) target = $region72
      $region71: #{tpu_custom_call.1} parent=5 // pred_region
        %s565 = ssub.s32 %s33, 1
        %s566 = sand.u32 %s60, 1
        %s567 = scalar_lea.sflag [#allocation3], %s566
        %s568 = sand.u32 %s60, 1
        %s569 = smul.addr %s568, 8
        %s570 = scalar_lea.vmem [#allocation2], %s569
        // Predicated region
        $region73: #{tpu_custom_call.1} parent=71 // pred_check
          %p571 = pneg %p73
        $region74: #{tpu_custom_call.1} parent=71 // pred_check_branch
          %573 = sbr.rel (%p571) target = $region76
        $region75: #{tpu_custom_call.1} parent=71 // pred_region
          %574 = dma.done %s567, 128
        $region76: #{tpu_custom_call.1} parent=71 // pred_fallthru
          _
        %s575 = sand.u32 %s38, 1
        %s576 = scalar_lea.sflag [#allocation6], %s575
        %s577 = sand.u32 %s86, 1
        %s578 = smul.addr %s577, 16
        %s579 = scalar_lea.vmem [#allocation5], %s578
        // Predicated region
        $region77: #{tpu_custom_call.1} parent=71 // pred_check
          %p580 = pneg %p99
        $region78: #{tpu_custom_call.1} parent=71 // pred_check_branch
          %582 = sbr.rel (%p580) target = $region80
        $region79: #{tpu_custom_call.1} parent=71 // pred_region
          %583 = dma.done %s576, 256
        $region80: #{tpu_custom_call.1} parent=71 // pred_fallthru
          _
        %s584 = sand.u32 %s38, 1
        %s585 = scalar_lea.sflag [#allocation6], %s584
        %s586 = sand.u32 %s112, 1
        %s587 = smul.addr %s586, 8
        %s588 = scalar_lea.vmem [#allocation7], %s587
        // Predicated region
        $region81: #{tpu_custom_call.1} parent=71 // pred_check
          %p589 = pneg %p125
        $region82: #{tpu_custom_call.1} parent=71 // pred_check_branch
          %591 = sbr.rel (%p589) target = $region84
        $region83: #{tpu_custom_call.1} parent=71 // pred_region
          %592 = dma.done %s585, 128
        $region84: #{tpu_custom_call.1} parent=71 // pred_fallthru
          _
        // Predicated region
        $region85: #{tpu_custom_call.1} parent=71 // pred_check
          %p593 = pneg %p146
        $region86: #{tpu_custom_call.1} parent=71 // pred_check_branch
          %595 = sbr.rel (%p593) target = $region88
        $region87: #{tpu_custom_call.1} parent=71 // pred_region
          %596 = dma.done [#allocation9], 8192
        $region88: #{tpu_custom_call.1} parent=71 // pred_fallthru
          _
        // Predicated region
        $region89: #{tpu_custom_call.1} parent=71 // pred_check
          %p597 = pneg %p167
        $region90: #{tpu_custom_call.1} parent=71 // pred_check_branch
          %599 = sbr.rel (%p597) target = $region92
        $region91: #{tpu_custom_call.1} parent=71 // pred_region
          %600 = dma.done [#allocation9], 64
        $region92: #{tpu_custom_call.1} parent=71 // pred_fallthru
          _
        // Predicated region
        $region93: #{tpu_custom_call.1} parent=71 // pred_check
          %p601 = pneg %p188
        $region94: #{tpu_custom_call.1} parent=71 // pred_check_branch
          %603 = sbr.rel (%p601) target = $region96
        $region95: #{tpu_custom_call.1} parent=71 // pred_region
          %604 = dma.done [#allocation12], 8192
        $region96: #{tpu_custom_call.1} parent=71 // pred_fallthru
          _
        // Predicated region
        $region97: #{tpu_custom_call.1} parent=71 // pred_check
          %p605 = pneg %p209
        $region98: #{tpu_custom_call.1} parent=71 // pred_check_branch
          %607 = sbr.rel (%p605) target = $region100
        $region99: #{tpu_custom_call.1} parent=71 // pred_region
          %608 = dma.done [#allocation12], 64
        $region100: #{tpu_custom_call.1} parent=71 // pred_fallthru
          _
        // Predicated region
        $region101: #{tpu_custom_call.1} parent=71 // pred_check
          %p609 = pneg %p230
        $region102: #{tpu_custom_call.1} parent=71 // pred_check_branch
          %611 = sbr.rel (%p609) target = $region104
        $region103: #{tpu_custom_call.1} parent=71 // pred_region
          %612 = dma.done [#allocation15], 4096
        $region104: #{tpu_custom_call.1} parent=71 // pred_fallthru
          _
        // Predicated region
        $region105: #{tpu_custom_call.1} parent=71 // pred_check
          %p613 = pneg %p251
        $region106: #{tpu_custom_call.1} parent=71 // pred_check_branch
          %615 = sbr.rel (%p613) target = $region108
        $region107: #{tpu_custom_call.1} parent=71 // pred_region
          %616 = dma.done [#allocation15], 32
        $region108: #{tpu_custom_call.1} parent=71 // pred_fallthru
          _
        // Predicated region
        $region109: #{tpu_custom_call.1} parent=71 // pred_check
          %p617 = pneg %p272
        $region110: #{tpu_custom_call.1} parent=71 // pred_check_branch
          %619 = sbr.rel (%p617) target = $region112
        $region111: #{tpu_custom_call.1} parent=71 // pred_region
          %620 = dma.done [#allocation18], 4096
        $region112: #{tpu_custom_call.1} parent=71 // pred_fallthru
          _
        // Predicated region
        $region113: #{tpu_custom_call.1} parent=71 // pred_check
          %p621 = pneg %p293
        $region114: #{tpu_custom_call.1} parent=71 // pred_check_branch
          %623 = sbr.rel (%p621) target = $region116
        $region115: #{tpu_custom_call.1} parent=71 // pred_region
          %624 = dma.done [#allocation18], 16
        $region116: #{tpu_custom_call.1} parent=71 // pred_fallthru
          _
        // Predicated region
        $region117: #{tpu_custom_call.1} parent=71 // pred_check
          %p625 = pneg %p314
        $region118: #{tpu_custom_call.1} parent=71 // pred_check_branch
          %627 = sbr.rel (%p625) target = $region120
        $region119: #{tpu_custom_call.1} parent=71 // pred_region
          %628 = dma.done [#allocation21], 64
        $region120: #{tpu_custom_call.1} parent=71 // pred_fallthru
          _
        // Predicated region
        $region121: #{tpu_custom_call.1} parent=71 // pred_check
          %p629 = pneg %p335
        $region122: #{tpu_custom_call.1} parent=71 // pred_check_branch
          %631 = sbr.rel (%p629) target = $region124
        $region123: #{tpu_custom_call.1} parent=71 // pred_region
          %632 = dma.done [#allocation21], 64
        $region124: #{tpu_custom_call.1} parent=71 // pred_fallthru
          _
        %s633 = sand.u32 %s60, 1
        %s634 = scalar_lea.sflag [#allocation3], %s633
        %s635 = sand.u32 %s60, 1
        %s636 = smul.addr %s635, 8
        %s637 = scalar_lea.vmem [#allocation2], %s636
        %p638 = pneg %p73
        %p639 = pneg %p70
        %s640 = sand.u32 %s38, 1
        %s641 = scalar_lea.sflag [#allocation6], %s640
        %s642 = sand.u32 %s86, 1
        %s643 = smul.addr %s642, 16
        %s644 = scalar_lea.vmem [#allocation5], %s643
        %p645 = pneg %p99
        %p646 = pneg %p96
        %s647 = sand.u32 %s38, 1
        %s648 = scalar_lea.sflag [#allocation6], %s647
        %s649 = sand.u32 %s112, 1
        %s650 = smul.addr %s649, 8
        %s651 = scalar_lea.vmem [#allocation7], %s650
        %p652 = pneg %p125
        %p653 = pneg %p122
        %p654 = pneg %p146
        %p655 = pneg %p143
        %p656 = pneg %p167
        %p657 = pneg %p164
        %p658 = pneg %p188
        %p659 = pneg %p185
        %p660 = pneg %p209
        %p661 = pneg %p206
        %p662 = pneg %p230
        %p663 = pneg %p227
        %p664 = pneg %p251
        %p665 = pneg %p248
        %p666 = pneg %p272
        %p667 = pneg %p269
        %p668 = pneg %p293
        %p669 = pneg %p290
        %p670 = pneg %p314
        %p671 = pneg %p311
        %p672 = pneg %p335
        %p673 = pneg %p332
        %p674 = pneg %p363
        %p675 = pneg %p360
        %s676 = sand.u32 %s350, 1
        %s677 = scalar_lea.sflag [#allocation4], %s676
        %s678 = sand.u32 %s350, 1
        %s679 = smul.addr %s678, 8
        %s680 = scalar_lea.vmem [#allocation23], %s679
        %v681 = vld [vmem:[%s570] sm:$0xff]
        %v682 = vld [vmem:[%s579] sm:$0xff]
        %v683 = vld [vmem:[%s579 + $0x8] sm:$0xff]
        %v684 = vld [vmem:[%s588] sm:$0xff]
        %s685 = smul.u32 %s43, 8
        %v686 = vlaneseq
        %v687 = vshrl.u32 %v686, 7
        %v688 = vstv %s685
        %v689 = vadd.s32 %v687, %v688
        %v690 = vlaneseq
        %v691 = vand.u32 %v690, 127
        %vm692 = vcmp.ge.s32.totalorder %v689, %v691
        %v693 = vld [vmem:[#allocation8] sm:$0xff]
        %v694 = vld [vmem:[#allocation8 + $0x8] sm:$0xff]
        %v695 = vld [vmem:[#allocation8 + $0x10] sm:$0xff]
        %v696 = vld [vmem:[#allocation8 + $0x18] sm:$0xff]
        %v697 = vld [vmem:[#allocation8 + $0x20] sm:$0xff]
        %v698 = vld [vmem:[#allocation8 + $0x28] sm:$0xff]
        %v699 = vld [vmem:[#allocation8 + $0x30] sm:$0xff]
        %v700 = vld [vmem:[#allocation8 + $0x38] sm:$0xff]
        %v701 = vld [vmem:[#allocation8 + $0x40] sm:$0xff]
        %v702 = vld [vmem:[#allocation8 + $0x48] sm:$0xff]
        %v703 = vld [vmem:[#allocation8 + $0x50] sm:$0xff]
        %v704 = vld [vmem:[#allocation8 + $0x58] sm:$0xff]
        %v705 = vld [vmem:[#allocation8 + $0x60] sm:$0xff]
        %v706 = vld [vmem:[#allocation8 + $0x68] sm:$0xff]
        %v707 = vld [vmem:[#allocation8 + $0x70] sm:$0xff]
        %v708 = vld [vmem:[#allocation8 + $0x78] sm:$0xff]
        %s709 = scalar_lea.vmem [#allocation8], 128
        %v710 = vld [vmem:[%s709] sm:$0xff]
        %v711 = vld [vmem:[%s709 + $0x8] sm:$0xff]
        %v712 = vld [vmem:[%s709 + $0x10] sm:$0xff]
        %v713 = vld [vmem:[%s709 + $0x18] sm:$0xff]
        %v714 = vld [vmem:[%s709 + $0x20] sm:$0xff]
        %v715 = vld [vmem:[%s709 + $0x28] sm:$0xff]
        %v716 = vld [vmem:[%s709 + $0x30] sm:$0xff]
        %v717 = vld [vmem:[%s709 + $0x38] sm:$0xff]
        %v718 = vld [vmem:[%s709 + $0x40] sm:$0xff]
        %v719 = vld [vmem:[%s709 + $0x48] sm:$0xff]
        %v720 = vld [vmem:[%s709 + $0x50] sm:$0xff]
        %v721 = vld [vmem:[%s709 + $0x58] sm:$0xff]
        %v722 = vld [vmem:[%s709 + $0x60] sm:$0xff]
        %v723 = vld [vmem:[%s709 + $0x68] sm:$0xff]
        %v724 = vld [vmem:[%s709 + $0x70] sm:$0xff]
        %v725 = vld [vmem:[%s709 + $0x78] sm:$0xff]
        %s726 = scalar_lea.vmem [#allocation8], 256
        %v727 = vld [vmem:[%s726] sm:$0xff]
        %v728 = vld [vmem:[%s726 + $0x8] sm:$0xff]
        %v729 = vld [vmem:[%s726 + $0x10] sm:$0xff]
        %v730 = vld [vmem:[%s726 + $0x18] sm:$0xff]
        %v731 = vld [vmem:[%s726 + $0x20] sm:$0xff]
        %v732 = vld [vmem:[%s726 + $0x28] sm:$0xff]
        %v733 = vld [vmem:[%s726 + $0x30] sm:$0xff]
        %v734 = vld [vmem:[%s726 + $0x38] sm:$0xff]
        %v735 = vld [vmem:[%s726 + $0x40] sm:$0xff]
        %v736 = vld [vmem:[%s726 + $0x48] sm:$0xff]
        %v737 = vld [vmem:[%s726 + $0x50] sm:$0xff]
        %v738 = vld [vmem:[%s726 + $0x58] sm:$0xff]
        %v739 = vld [vmem:[%s726 + $0x60] sm:$0xff]
        %v740 = vld [vmem:[%s726 + $0x68] sm:$0xff]
        %v741 = vld [vmem:[%s726 + $0x70] sm:$0xff]
        %v742 = vld [vmem:[%s726 + $0x78] sm:$0xff]
        %s743 = scalar_lea.vmem [#allocation8], 384
        %v744 = vld [vmem:[%s743] sm:$0xff]
        %v745 = vld [vmem:[%s743 + $0x8] sm:$0xff]
        %v746 = vld [vmem:[%s743 + $0x10] sm:$0xff]
        %v747 = vld [vmem:[%s743 + $0x18] sm:$0xff]
        %v748 = vld [vmem:[%s743 + $0x20] sm:$0xff]
        %v749 = vld [vmem:[%s743 + $0x28] sm:$0xff]
        %v750 = vld [vmem:[%s743 + $0x30] sm:$0xff]
        %v751 = vld [vmem:[%s743 + $0x38] sm:$0xff]
        %v752 = vld [vmem:[%s743 + $0x40] sm:$0xff]
        %v753 = vld [vmem:[%s743 + $0x48] sm:$0xff]
        %v754 = vld [vmem:[%s743 + $0x50] sm:$0xff]
        %v755 = vld [vmem:[%s743 + $0x58] sm:$0xff]
        %v756 = vld [vmem:[%s743 + $0x60] sm:$0xff]
        %v757 = vld [vmem:[%s743 + $0x68] sm:$0xff]
        %v758 = vld [vmem:[%s743 + $0x70] sm:$0xff]
        %v759 = vld [vmem:[%s743 + $0x78] sm:$0xff]
        %v760 = vld [vmem:[#allocation10] sm:$0x1]
        %v761 = vld [vmem:[#allocation10 + $0x1] sm:$0x1]
        %v762 = vld [vmem:[#allocation10 + $0x2] sm:$0x1]
        %v763 = vld [vmem:[#allocation10 + $0x3] sm:$0x1]
        %v764 = vlaneseq
        %v765 = vshrl.u32 %v764, 7
        %v766 = vsub.s32 0, %v765
        %v767 = vrot.slane %v760, %v766
        %768 = vmatprep.subr.mxu0 0.0
        %769 = vmatpush1.msra.mxu0 %v693
        %770 = vmatprep.subr.mxu0 0.0
        %771 = vmatpush1.msra.mxu0 %v694
        %772 = vmatprep.subr.mxu0 0.0
        %773 = vmatpush1.msra.mxu0 %v695
        %774 = vmatprep.subr.mxu0 0.0
        %775 = vmatpush1.msra.mxu0 %v696
        %776 = vmatprep.subr.mxu0 0.0
        %777 = vmatpush1.msra.mxu0 %v697
        %778 = vmatprep.subr.mxu0 0.0
        %779 = vmatpush1.msra.mxu0 %v698
        %780 = vmatprep.subr.mxu0 0.0
        %781 = vmatpush1.msra.mxu0 %v699
        %782 = vmatprep.subr.mxu0 0.0
        %783 = vmatpush1.msra.mxu0 %v700
        %784 = vmatprep.subr.mxu0 0.0
        %785 = vmatpush1.msra.mxu0 %v701
        %786 = vmatprep.subr.mxu0 0.0
        %787 = vmatpush1.msra.mxu0 %v702
        %788 = vmatprep.subr.mxu0 0.0
        %789 = vmatpush1.msra.mxu0 %v703
        %790 = vmatprep.subr.mxu0 0.0
        %791 = vmatpush1.msra.mxu0 %v704
        %792 = vmatprep.subr.mxu0 0.0
        %793 = vmatpush1.msra.mxu0 %v705
        %794 = vmatprep.subr.mxu0 0.0
        %795 = vmatpush1.msra.mxu0 %v706
        %796 = vmatprep.subr.mxu0 0.0
        %797 = vmatpush1.msra.mxu0 %v707
        %798 = vmatprep.subr.mxu0 0.0
        %799 = vmatpush1.msra.mxu0 %v708
        %800 = vmatprep.subr.mxu0 0.0
        %801 = vmatpush1.msra.mxu0 0.0
        %802 = vmatprep.subr.mxu0 0.0
        %803 = vmatpush1.msra.mxu0 0.0
        %804 = vmatprep.subr.mxu0 0.0
        %805 = vmatpush1.msra.mxu0 0.0
        %806 = vmatprep.subr.mxu0 0.0
        %807 = vmatpush1.msra.mxu0 0.0
        %808 = vmatprep.subr.mxu0 0.0
        %809 = vmatpush1.msra.mxu0 0.0
        %810 = vmatprep.subr.mxu0 0.0
        %811 = vmatpush1.msra.mxu0 0.0
        %812 = vmatprep.subr.mxu0 0.0
        %813 = vmatpush1.msra.mxu0 0.0
        %814 = vmatprep.subr.mxu0 0.0
        %815 = vmatpush1.msra.mxu0 0.0
        %816 = vmatprep.subr.mxu0 0.0
        %817 = vmatpush1.msra.mxu0 0.0
        %818 = vmatprep.subr.mxu0 0.0
        %819 = vmatpush1.msra.mxu0 0.0
        %820 = vmatprep.subr.mxu0 0.0
        %821 = vmatpush1.msra.mxu0 0.0
        %822 = vmatprep.subr.mxu0 0.0
        %823 = vmatpush1.msra.mxu0 0.0
        %824 = vmatprep.subr.mxu0 0.0
        %825 = vmatpush1.msra.mxu0 0.0
        %826 = vmatprep.subr.mxu0 0.0
        %827 = vmatpush1.msra.mxu0 0.0
        %828 = vmatprep.subr.mxu0 0.0
        %829 = vmatpush1.msra.mxu0 0.0
        %830 = vmatprep.subr.mxu0 0.0
        %831 = vmatpush1.msra.mxu0 0.0
        %832 = vmatprep.mubr.f32.mxu0 0.0
        %833 = vmatmul.mubr.f32.gmra.mrb[0].mxu0 %v681
        %v834 = vpop.f32.mrb[0].mxu0
        %v835 = vadd.f32 %v767, %v834
        %v836 = vpop.f32.mrb[0].mxu0
        %837 = vdwg.mxu0
        %v838 = vlaneseq
        %v839 = vshrl.u32 %v838, 7
        %v840 = vsub.s32 0, %v839
        %v841 = vrot.slane %v761, %v840
        %842 = vmatprep.subr.mxu0 0.0
        %843 = vmatpush1.msra.mxu0 %v710
        %844 = vmatprep.subr.mxu0 0.0
        %845 = vmatpush1.msra.mxu0 %v711
        %846 = vmatprep.subr.mxu0 0.0
        %847 = vmatpush1.msra.mxu0 %v712
        %848 = vmatprep.subr.mxu0 0.0
        %849 = vmatpush1.msra.mxu0 %v713
        %850 = vmatprep.subr.mxu0 0.0
        %851 = vmatpush1.msra.mxu0 %v714
        %852 = vmatprep.subr.mxu0 0.0
        %853 = vmatpush1.msra.mxu0 %v715
        %854 = vmatprep.subr.mxu0 0.0
        %855 = vmatpush1.msra.mxu0 %v716
        %856 = vmatprep.subr.mxu0 0.0
        %857 = vmatpush1.msra.mxu0 %v717
        %858 = vmatprep.subr.mxu0 0.0
        %859 = vmatpush1.msra.mxu0 %v718
        %860 = vmatprep.subr.mxu0 0.0
        %861 = vmatpush1.msra.mxu0 %v719
        %862 = vmatprep.subr.mxu0 0.0
        %863 = vmatpush1.msra.mxu0 %v720
        %864 = vmatprep.subr.mxu0 0.0
        %865 = vmatpush1.msra.mxu0 %v721
        %866 = vmatprep.subr.mxu0 0.0
        %867 = vmatpush1.msra.mxu0 %v722
        %868 = vmatprep.subr.mxu0 0.0
        %869 = vmatpush1.msra.mxu0 %v723
        %870 = vmatprep.subr.mxu0 0.0
        %871 = vmatpush1.msra.mxu0 %v724
        %872 = vmatprep.subr.mxu0 0.0
        %873 = vmatpush1.msra.mxu0 %v725
        %874 = vmatprep.subr.mxu0 0.0
        %875 = vmatpush1.msra.mxu0 0.0
        %876 = vmatprep.subr.mxu0 0.0
        %877 = vmatpush1.msra.mxu0 0.0
        %878 = vmatprep.subr.mxu0 0.0
        %879 = vmatpush1.msra.mxu0 0.0
        %880 = vmatprep.subr.mxu0 0.0
        %881 = vmatpush1.msra.mxu0 0.0
        %882 = vmatprep.subr.mxu0 0.0
        %883 = vmatpush1.msra.mxu0 0.0
        %884 = vmatprep.subr.mxu0 0.0
        %885 = vmatpush1.msra.mxu0 0.0
        %886 = vmatprep.subr.mxu0 0.0
        %887 = vmatpush1.msra.mxu0 0.0
        %888 = vmatprep.subr.mxu0 0.0
        %889 = vmatpush1.msra.mxu0 0.0
        %890 = vmatprep.subr.mxu0 0.0
        %891 = vmatpush1.msra.mxu0 0.0
        %892 = vmatprep.subr.mxu0 0.0
        %893 = vmatpush1.msra.mxu0 0.0
        %894 = vmatprep.subr.mxu0 0.0
        %895 = vmatpush1.msra.mxu0 0.0
        %896 = vmatprep.subr.mxu0 0.0
        %897 = vmatpush1.msra.mxu0 0.0
        %898 = vmatprep.subr.mxu0 0.0
        %899 = vmatpush1.msra.mxu0 0.0
        %900 = vmatprep.subr.mxu0 0.0
        %901 = vmatpush1.msra.mxu0 0.0
        %902 = vmatprep.subr.mxu0 0.0
        %903 = vmatpush1.msra.mxu0 0.0
        %904 = vmatprep.subr.mxu0 0.0
        %905 = vmatpush1.msra.mxu0 0.0
        %906 = vmatprep.mubr.f32.mxu0 0.0
        %907 = vmatmul.mubr.f32.gmra.mrb[0].mxu0 %v682
        %v908 = vpop.f32.mrb[0].mxu0
        %v909 = vadd.f32 %v841, %v908
        %v910 = vpop.f32.mrb[0].mxu0
        %911 = vmatprep.mubr.f32.mxu0 0.0
        %912 = vmatmul.mubr.f32.gmra.mrb[0].mxu0 %v683
        %v913 = vpop.f32.mrb[0].mxu0
        %v914 = vadd.f32 %v841, %v913
        %v915 = vpop.f32.mrb[0].mxu0
        %916 = vdwg.mxu0
        %v917 = vlaneseq
        %v918 = vshrl.u32 %v917, 7
        %v919 = vsub.s32 0, %v918
        %v920 = vrot.slane %v762, %v919
        %921 = vmatprep.subr.mxu0 0.0
        %922 = vmatpush1.msra.mxu0 %v727
        %923 = vmatprep.subr.mxu0 0.0
        %924 = vmatpush1.msra.mxu0 %v728
        %925 = vmatprep.subr.mxu0 0.0
        %926 = vmatpush1.msra.mxu0 %v729
        %927 = vmatprep.subr.mxu0 0.0
        %928 = vmatpush1.msra.mxu0 %v730
        %929 = vmatprep.subr.mxu0 0.0
        %930 = vmatpush1.msra.mxu0 %v731
        %931 = vmatprep.subr.mxu0 0.0
        %932 = vmatpush1.msra.mxu0 %v732
        %933 = vmatprep.subr.mxu0 0.0
        %934 = vmatpush1.msra.mxu0 %v733
        %935 = vmatprep.subr.mxu0 0.0
        %936 = vmatpush1.msra.mxu0 %v734
        %937 = vmatprep.subr.mxu0 0.0
        %938 = vmatpush1.msra.mxu0 %v735
        %939 = vmatprep.subr.mxu0 0.0
        %940 = vmatpush1.msra.mxu0 %v736
        %941 = vmatprep.subr.mxu0 0.0
        %942 = vmatpush1.msra.mxu0 %v737
        %943 = vmatprep.subr.mxu0 0.0
        %944 = vmatpush1.msra.mxu0 %v738
        %945 = vmatprep.subr.mxu0 0.0
        %946 = vmatpush1.msra.mxu0 %v739
        %947 = vmatprep.subr.mxu0 0.0
        %948 = vmatpush1.msra.mxu0 %v740
        %949 = vmatprep.subr.mxu0 0.0
        %950 = vmatpush1.msra.mxu0 %v741
        %951 = vmatprep.subr.mxu0 0.0
        %952 = vmatpush1.msra.mxu0 %v742
        %953 = vmatprep.subr.mxu0 0.0
        %954 = vmatpush1.msra.mxu0 0.0
        %955 = vmatprep.subr.mxu0 0.0
        %956 = vmatpush1.msra.mxu0 0.0
        %957 = vmatprep.subr.mxu0 0.0
        %958 = vmatpush1.msra.mxu0 0.0
        %959 = vmatprep.subr.mxu0 0.0
        %960 = vmatpush1.msra.mxu0 0.0
        %961 = vmatprep.subr.mxu0 0.0
        %962 = vmatpush1.msra.mxu0 0.0
        %963 = vmatprep.subr.mxu0 0.0
        %964 = vmatpush1.msra.mxu0 0.0
        %965 = vmatprep.subr.mxu0 0.0
        %966 = vmatpush1.msra.mxu0 0.0
        %967 = vmatprep.subr.mxu0 0.0
        %968 = vmatpush1.msra.mxu0 0.0
        %969 = vmatprep.subr.mxu0 0.0
        %970 = vmatpush1.msra.mxu0 0.0
        %971 = vmatprep.subr.mxu0 0.0
        %972 = vmatpush1.msra.mxu0 0.0
        %973 = vmatprep.subr.mxu0 0.0
        %974 = vmatpush1.msra.mxu0 0.0
        %975 = vmatprep.subr.mxu0 0.0
        %976 = vmatpush1.msra.mxu0 0.0
        %977 = vmatprep.subr.mxu0 0.0
        %978 = vmatpush1.msra.mxu0 0.0
        %979 = vmatprep.subr.mxu0 0.0
        %980 = vmatpush1.msra.mxu0 0.0
        %981 = vmatprep.subr.mxu0 0.0
        %982 = vmatpush1.msra.mxu0 0.0
        %983 = vmatprep.subr.mxu0 0.0
        %984 = vmatpush1.msra.mxu0 0.0
        %985 = vmatprep.mubr.f32.mxu0 0.0
        %986 = vmatmul.mubr.f32.gmra.mrb[0].mxu0 %v682
        %v987 = vpop.f32.mrb[0].mxu0
        %v988 = vadd.f32 %v920, %v987
        %v989 = vpop.f32.mrb[0].mxu0
        %990 = vmatprep.mubr.f32.mxu0 0.0
        %991 = vmatmul.mubr.f32.gmra.mrb[0].mxu0 %v683
        %v992 = vpop.f32.mrb[0].mxu0
        %v993 = vadd.f32 %v920, %v992
        %v994 = vpop.f32.mrb[0].mxu0
        %995 = vdwg.mxu0
        %v996 = vmul.f32 %v835, 0.17677669
        %vm997 = vcmask 261120
        %v999 = vsel %vm997, %v996, 0
        %v1002 = vsel %vm997, %v909, 0
        %v1005 = vsel %vm997, %v914, 0
        %1007 = vmatprep.subr.mxu0 0.0
        %1008 = vmatpush1.xpose.msra.mxu0 %v1002
        %1009 = vmatprep.subr.mxu0 0.0
        %1010 = vmatpush1.xpose.msra.mxu0 %v1005
        %1011 = vmatprep.subr.mxu0 0.0
        %1012 = vmatpush1.xpose.msra.mxu0 0.0
        %1013 = vmatprep.subr.mxu0 0.0
        %1014 = vmatpush1.xpose.msra.mxu0 0.0
        %1015 = vmatprep.subr.mxu0 0.0
        %1016 = vmatpush1.xpose.msra.mxu0 0.0
        %1017 = vmatprep.subr.mxu0 0.0
        %1018 = vmatpush1.xpose.msra.mxu0 0.0
        %1019 = vmatprep.subr.mxu0 0.0
        %1020 = vmatpush1.xpose.msra.mxu0 0.0
        %1021 = vmatprep.subr.mxu0 0.0
        %1022 = vmatpush1.xpose.msra.mxu0 0.0
        %1023 = vmatprep.subr.mxu0 0.0
        %1024 = vmatpush1.xpose.msra.mxu0 0.0
        %1025 = vmatprep.subr.mxu0 0.0
        %1026 = vmatpush1.xpose.msra.mxu0 0.0
        %1027 = vmatprep.subr.mxu0 0.0
        %1028 = vmatpush1.xpose.msra.mxu0 0.0
        %1029 = vmatprep.subr.mxu0 0.0
        %1030 = vmatpush1.xpose.msra.mxu0 0.0
        %1031 = vmatprep.subr.mxu0 0.0
        %1032 = vmatpush1.xpose.msra.mxu0 0.0
        %1033 = vmatprep.subr.mxu0 0.0
        %1034 = vmatpush1.xpose.msra.mxu0 0.0
        %1035 = vmatprep.subr.mxu0 0.0
        %1036 = vmatpush1.xpose.msra.mxu0 0.0
        %1037 = vmatprep.subr.mxu0 0.0
        %1038 = vmatpush1.xpose.msra.mxu0 0.0
        %1039 = vmatprep.subr.mxu0 0.0
        %1040 = vmatpush1.xpose.msra.mxu0 0.0
        %1041 = vmatprep.subr.mxu0 0.0
        %1042 = vmatpush1.xpose.msra.mxu0 0.0
        %1043 = vmatprep.subr.mxu0 0.0
        %1044 = vmatpush1.xpose.msra.mxu0 0.0
        %1045 = vmatprep.subr.mxu0 0.0
        %1046 = vmatpush1.xpose.msra.mxu0 0.0
        %1047 = vmatprep.subr.mxu0 0.0
        %1048 = vmatpush1.xpose.msra.mxu0 0.0
        %1049 = vmatprep.subr.mxu0 0.0
        %1050 = vmatpush1.xpose.msra.mxu0 0.0
        %1051 = vmatprep.subr.mxu0 0.0
        %1052 = vmatpush1.xpose.msra.mxu0 0.0
        %1053 = vmatprep.subr.mxu0 0.0
        %1054 = vmatpush1.xpose.msra.mxu0 0.0
        %1055 = vmatprep.subr.mxu0 0.0
        %1056 = vmatpush1.xpose.msra.mxu0 0.0
        %1057 = vmatprep.subr.mxu0 0.0
        %1058 = vmatpush1.xpose.msra.mxu0 0.0
        %1059 = vmatprep.subr.mxu0 0.0
        %1060 = vmatpush1.xpose.msra.mxu0 0.0
        %1061 = vmatprep.subr.mxu0 0.0
        %1062 = vmatpush1.xpose.msra.mxu0 0.0
        %1063 = vmatprep.subr.mxu0 0.0
        %1064 = vmatpush1.xpose.msra.mxu0 0.0
        %1065 = vmatprep.subr.mxu0 0.0
        %1066 = vmatpush1.xpose.msra.mxu0 0.0
        %1067 = vmatprep.subr.mxu0 0.0
        %1068 = vmatpush1.xpose.msra.mxu0 0.0
        %1069 = vmatprep.subr.mxu0 0.0
        %1070 = vmatpush1.xpose.msra.mxu0 0.0
        %1071 = vmatprep.mubr.f32.mxu0 0.0
        %1072 = vmatmul.mubr.f32.gmra.mrb[0].mxu0 %v999
        %v1073 = vpop.f32.mrb[0].mxu0
        %v1074 = vadd.f32 0.0, %v1073
        %v1075 = vpop.f32.mrb[0].mxu0
        %1076 = vdwg.mxu0
        %v1077 = vsel %vm692, %v1074, -1e+30
        %vm1078 = vcmask 130048
        %v1079 = vsel %vm1078, %v1077, -inf
        %1080 = vmax.xlane.f32.xlu0 %v1079
        %v1081 = vpop.xlane.xlu0 %1080
        %v1082 = vsub.f32 %v1077, %v1081
        %v1083 = vmul.f32 %v1082, 1.442695
        %v1084 = vpow.pop %v1083
        %v1085 = vsel %vm1078, %v1084, 0.0
        %1086 = vadd.xlane.f32.xlu0 %v1085
        %v1087 = vpop.xlane.xlu0 %1086
        %v1089 = vsel %vm1078, %v1084, 0
        %1091 = vmatprep.subr.mxu0 0.0
        %1092 = vmatpush1.msra.mxu0 %v988
        %1093 = vmatprep.subr.mxu0 0.0
        %1094 = vmatpush1.msra.mxu0 %v993
        %1095 = vmatprep.subr.mxu0 0.0
        %1096 = vmatpush1.msra.mxu0 0.0
        %1097 = vmatprep.subr.mxu0 0.0
        %1098 = vmatpush1.msra.mxu0 0.0
        %1099 = vmatprep.subr.mxu0 0.0
        %1100 = vmatpush1.msra.mxu0 0.0
        %1101 = vmatprep.subr.mxu0 0.0
        %1102 = vmatpush1.msra.mxu0 0.0
        %1103 = vmatprep.subr.mxu0 0.0
        %1104 = vmatpush1.msra.mxu0 0.0
        %1105 = vmatprep.subr.mxu0 0.0
        %1106 = vmatpush1.msra.mxu0 0.0
        %1107 = vmatprep.subr.mxu0 0.0
        %1108 = vmatpush1.msra.mxu0 0.0
        %1109 = vmatprep.subr.mxu0 0.0
        %1110 = vmatpush1.msra.mxu0 0.0
        %1111 = vmatprep.subr.mxu0 0.0
        %1112 = vmatpush1.msra.mxu0 0.0
        %1113 = vmatprep.subr.mxu0 0.0
        %1114 = vmatpush1.msra.mxu0 0.0
        %1115 = vmatprep.subr.mxu0 0.0
        %1116 = vmatpush1.msra.mxu0 0.0
        %1117 = vmatprep.subr.mxu0 0.0
        %1118 = vmatpush1.msra.mxu0 0.0
        %1119 = vmatprep.subr.mxu0 0.0
        %1120 = vmatpush1.msra.mxu0 0.0
        %1121 = vmatprep.subr.mxu0 0.0
        %1122 = vmatpush1.msra.mxu0 0.0
        %1123 = vmatprep.subr.mxu0 0.0
        %1124 = vmatpush1.msra.mxu0 0.0
        %1125 = vmatprep.subr.mxu0 0.0
        %1126 = vmatpush1.msra.mxu0 0.0
        %1127 = vmatprep.subr.mxu0 0.0
        %1128 = vmatpush1.msra.mxu0 0.0
        %1129 = vmatprep.subr.mxu0 0.0
        %1130 = vmatpush1.msra.mxu0 0.0
        %1131 = vmatprep.subr.mxu0 0.0
        %1132 = vmatpush1.msra.mxu0 0.0
        %1133 = vmatprep.subr.mxu0 0.0
        %1134 = vmatpush1.msra.mxu0 0.0
        %1135 = vmatprep.subr.mxu0 0.0
        %1136 = vmatpush1.msra.mxu0 0.0
        %1137 = vmatprep.subr.mxu0 0.0
        %1138 = vmatpush1.msra.mxu0 0.0
        %1139 = vmatprep.subr.mxu0 0.0
        %1140 = vmatpush1.msra.mxu0 0.0
        %1141 = vmatprep.subr.mxu0 0.0
        %1142 = vmatpush1.msra.mxu0 0.0
        %1143 = vmatprep.subr.mxu0 0.0
        %1144 = vmatpush1.msra.mxu0 0.0
        %1145 = vmatprep.subr.mxu0 0.0
        %1146 = vmatpush1.msra.mxu0 0.0
        %1147 = vmatprep.subr.mxu0 0.0
        %1148 = vmatpush1.msra.mxu0 0.0
        %1149 = vmatprep.subr.mxu0 0.0
        %1150 = vmatpush1.msra.mxu0 0.0
        %1151 = vmatprep.subr.mxu0 0.0
        %1152 = vmatpush1.msra.mxu0 0.0
        %1153 = vmatprep.subr.mxu0 0.0
        %1154 = vmatpush1.msra.mxu0 0.0
        %1155 = vmatprep.mubr.f32.mxu0 0.0
        %1156 = vmatmul.mubr.f32.gmra.mrb[0].mxu0 %v1089
        %v1157 = vpop.f32.mrb[0].mxu0
        %v1158 = vadd.f32 0.0, %v1157
        %v1159 = vpop.f32.mrb[0].mxu0
        %1160 = vdwg.mxu0
        %v1161 = vrcp.pop %v1087
        %v1162 = vmul.f32 %v1158, %v1161
        %1163 = vrot.lane.b32.xlu0 %v996, 96
        %v1164 = vpop.permute.xlu0 %1163
        %1165 = vrot.lane.b32.xlu0 %v909, 96
        %v1166 = vpop.permute.xlu0 %1165
        %1167 = vrot.lane.b32.xlu0 %v914, 96
        %v1168 = vpop.permute.xlu0 %1167
        %v1169 = vsel %vm997, %v1164, 0
        %v1171 = vsel %vm997, %v1166, 0
        %v1173 = vsel %vm997, %v1168, 0
        %1175 = vmatprep.subr.mxu0 0.0
        %1176 = vmatpush1.xpose.msra.mxu0 %v1171
        %1177 = vmatprep.subr.mxu0 0.0
        %1178 = vmatpush1.xpose.msra.mxu0 %v1173
        %1179 = vmatprep.subr.mxu0 0.0
        %1180 = vmatpush1.xpose.msra.mxu0 0.0
        %1181 = vmatprep.subr.mxu0 0.0
        %1182 = vmatpush1.xpose.msra.mxu0 0.0
        %1183 = vmatprep.subr.mxu0 0.0
        %1184 = vmatpush1.xpose.msra.mxu0 0.0
        %1185 = vmatprep.subr.mxu0 0.0
        %1186 = vmatpush1.xpose.msra.mxu0 0.0
        %1187 = vmatprep.subr.mxu0 0.0
        %1188 = vmatpush1.xpose.msra.mxu0 0.0
        %1189 = vmatprep.subr.mxu0 0.0
        %1190 = vmatpush1.xpose.msra.mxu0 0.0
        %1191 = vmatprep.subr.mxu0 0.0
        %1192 = vmatpush1.xpose.msra.mxu0 0.0
        %1193 = vmatprep.subr.mxu0 0.0
        %1194 = vmatpush1.xpose.msra.mxu0 0.0
        %1195 = vmatprep.subr.mxu0 0.0
        %1196 = vmatpush1.xpose.msra.mxu0 0.0
        %1197 = vmatprep.subr.mxu0 0.0
        %1198 = vmatpush1.xpose.msra.mxu0 0.0
        %1199 = vmatprep.subr.mxu0 0.0
        %1200 = vmatpush1.xpose.msra.mxu0 0.0
        %1201 = vmatprep.subr.mxu0 0.0
        %1202 = vmatpush1.xpose.msra.mxu0 0.0
        %1203 = vmatprep.subr.mxu0 0.0
        %1204 = vmatpush1.xpose.msra.mxu0 0.0
        %1205 = vmatprep.subr.mxu0 0.0
        %1206 = vmatpush1.xpose.msra.mxu0 0.0
        %1207 = vmatprep.subr.mxu0 0.0
        %1208 = vmatpush1.xpose.msra.mxu0 0.0
        %1209 = vmatprep.subr.mxu0 0.0
        %1210 = vmatpush1.xpose.msra.mxu0 0.0
        %1211 = vmatprep.subr.mxu0 0.0
        %1212 = vmatpush1.xpose.msra.mxu0 0.0
        %1213 = vmatprep.subr.mxu0 0.0
        %1214 = vmatpush1.xpose.msra.mxu0 0.0
        %1215 = vmatprep.subr.mxu0 0.0
        %1216 = vmatpush1.xpose.msra.mxu0 0.0
        %1217 = vmatprep.subr.mxu0 0.0
        %1218 = vmatpush1.xpose.msra.mxu0 0.0
        %1219 = vmatprep.subr.mxu0 0.0
        %1220 = vmatpush1.xpose.msra.mxu0 0.0
        %1221 = vmatprep.subr.mxu0 0.0
        %1222 = vmatpush1.xpose.msra.mxu0 0.0
        %1223 = vmatprep.subr.mxu0 0.0
        %1224 = vmatpush1.xpose.msra.mxu0 0.0
        %1225 = vmatprep.subr.mxu0 0.0
        %1226 = vmatpush1.xpose.msra.mxu0 0.0
        %1227 = vmatprep.subr.mxu0 0.0
        %1228 = vmatpush1.xpose.msra.mxu0 0.0
        %1229 = vmatprep.subr.mxu0 0.0
        %1230 = vmatpush1.xpose.msra.mxu0 0.0
        %1231 = vmatprep.subr.mxu0 0.0
        %1232 = vmatpush1.xpose.msra.mxu0 0.0
        %1233 = vmatprep.subr.mxu0 0.0
        %1234 = vmatpush1.xpose.msra.mxu0 0.0
        %1235 = vmatprep.subr.mxu0 0.0
        %1236 = vmatpush1.xpose.msra.mxu0 0.0
        %1237 = vmatprep.subr.mxu0 0.0
        %1238 = vmatpush1.xpose.msra.mxu0 0.0
        %1239 = vmatprep.mubr.f32.mxu0 0.0
        %1240 = vmatmul.mubr.f32.gmra.mrb[0].mxu0 %v1169
        %v1241 = vpop.f32.mrb[0].mxu0
        %v1242 = vadd.f32 0.0, %v1241
        %v1243 = vpop.f32.mrb[0].mxu0
        %1244 = vdwg.mxu0
        %v1245 = vsel %vm692, %v1242, -1e+30
        %v1246 = vsel %vm1078, %v1245, -inf
        %1247 = vmax.xlane.f32.xlu0 %v1246
        %v1248 = vpop.xlane.xlu0 %1247
        %v1249 = vsub.f32 %v1245, %v1248
        %v1250 = vmul.f32 %v1249, 1.442695
        %v1251 = vpow.pop %v1250
        %v1252 = vsel %vm1078, %v1251, 0.0
        %1253 = vadd.xlane.f32.xlu0 %v1252
        %v1254 = vpop.xlane.xlu0 %1253
        %1257 = vrot.lane.b32.xlu0 %v988, 96
        %v1258 = vpop.permute.xlu0 %1257
        %1259 = vrot.lane.b32.xlu0 %v993, 96
        %v1260 = vpop.permute.xlu0 %1259
        %v1264 = vsel %vm1078, %v1251, 0
        %1266 = vmatprep.subr.mxu0 0.0
        %1267 = vmatpush1.msra.mxu0 %v1258
        %1268 = vmatprep.subr.mxu0 0.0
        %1269 = vmatpush1.msra.mxu0 %v1260
        %1270 = vmatprep.subr.mxu0 0.0
        %1271 = vmatpush1.msra.mxu0 0.0
        %1272 = vmatprep.subr.mxu0 0.0
        %1273 = vmatpush1.msra.mxu0 0.0
        %1274 = vmatprep.subr.mxu0 0.0
        %1275 = vmatpush1.msra.mxu0 0.0
        %1276 = vmatprep.subr.mxu0 0.0
        %1277 = vmatpush1.msra.mxu0 0.0
        %1278 = vmatprep.subr.mxu0 0.0
        %1279 = vmatpush1.msra.mxu0 0.0
        %1280 = vmatprep.subr.mxu0 0.0
        %1281 = vmatpush1.msra.mxu0 0.0
        %1282 = vmatprep.subr.mxu0 0.0
        %1283 = vmatpush1.msra.mxu0 0.0
        %1284 = vmatprep.subr.mxu0 0.0
        %1285 = vmatpush1.msra.mxu0 0.0
        %1286 = vmatprep.subr.mxu0 0.0
        %1287 = vmatpush1.msra.mxu0 0.0
        %1288 = vmatprep.subr.mxu0 0.0
        %1289 = vmatpush1.msra.mxu0 0.0
        %1290 = vmatprep.subr.mxu0 0.0
        %1291 = vmatpush1.msra.mxu0 0.0
        %1292 = vmatprep.subr.mxu0 0.0
        %1293 = vmatpush1.msra.mxu0 0.0
        %1294 = vmatprep.subr.mxu0 0.0
        %1295 = vmatpush1.msra.mxu0 0.0
        %1296 = vmatprep.subr.mxu0 0.0
        %1297 = vmatpush1.msra.mxu0 0.0
        %1298 = vmatprep.subr.mxu0 0.0
        %1299 = vmatpush1.msra.mxu0 0.0
        %1300 = vmatprep.subr.mxu0 0.0
        %1301 = vmatpush1.msra.mxu0 0.0
        %1302 = vmatprep.subr.mxu0 0.0
        %1303 = vmatpush1.msra.mxu0 0.0
        %1304 = vmatprep.subr.mxu0 0.0
        %1305 = vmatpush1.msra.mxu0 0.0
        %1306 = vmatprep.subr.mxu0 0.0
        %1307 = vmatpush1.msra.mxu0 0.0
        %1308 = vmatprep.subr.mxu0 0.0
        %1309 = vmatpush1.msra.mxu0 0.0
        %1310 = vmatprep.subr.mxu0 0.0
        %1311 = vmatpush1.msra.mxu0 0.0
        %1312 = vmatprep.subr.mxu0 0.0
        %1313 = vmatpush1.msra.mxu0 0.0
        %1314 = vmatprep.subr.mxu0 0.0
        %1315 = vmatpush1.msra.mxu0 0.0
        %1316 = vmatprep.subr.mxu0 0.0
        %1317 = vmatpush1.msra.mxu0 0.0
        %1318 = vmatprep.subr.mxu0 0.0
        %1319 = vmatpush1.msra.mxu0 0.0
        %1320 = vmatprep.subr.mxu0 0.0
        %1321 = vmatpush1.msra.mxu0 0.0
        %1322 = vmatprep.subr.mxu0 0.0
        %1323 = vmatpush1.msra.mxu0 0.0
        %1324 = vmatprep.subr.mxu0 0.0
        %1325 = vmatpush1.msra.mxu0 0.0
        %1326 = vmatprep.subr.mxu0 0.0
        %1327 = vmatpush1.msra.mxu0 0.0
        %1328 = vmatprep.subr.mxu0 0.0
        %1329 = vmatpush1.msra.mxu0 0.0
        %1330 = vmatprep.mubr.f32.mxu0 0.0
        %1331 = vmatmul.mubr.f32.gmra.mrb[0].mxu0 %v1264
        %v1332 = vpop.f32.mrb[0].mxu0
        %v1333 = vadd.f32 0.0, %v1332
        %v1334 = vpop.f32.mrb[0].mxu0
        %1335 = vdwg.mxu0
        %v1336 = vrcp.pop %v1254
        %v1337 = vmul.f32 %v1333, %v1336
        %v1339 = vsel %vm997, %v1337, 0
        %1341 = vmatprep.subr.mxu0 0.0
        %1342 = vmatpush1.msra.mxu0 %v748
        %1343 = vmatprep.subr.mxu0 0.0
        %1344 = vmatpush1.msra.mxu0 %v749
        %1345 = vmatprep.subr.mxu0 0.0
        %1346 = vmatpush1.msra.mxu0 %v750
        %1347 = vmatprep.subr.mxu0 0.0
        %1348 = vmatpush1.msra.mxu0 %v751
        %1349 = vmatprep.subr.mxu0 0.0
        %1350 = vmatpush1.msra.mxu0 0.0
        %1351 = vmatprep.subr.mxu0 0.0
        %1352 = vmatpush1.msra.mxu0 0.0
        %1353 = vmatprep.subr.mxu0 0.0
        %1354 = vmatpush1.msra.mxu0 0.0
        %1355 = vmatprep.subr.mxu0 0.0
        %1356 = vmatpush1.msra.mxu0 0.0
        %1357 = vmatprep.subr.mxu0 0.0
        %1358 = vmatpush1.msra.mxu0 0.0
        %1359 = vmatprep.subr.mxu0 0.0
        %1360 = vmatpush1.msra.mxu0 0.0
        %1361 = vmatprep.subr.mxu0 0.0
        %1362 = vmatpush1.msra.mxu0 0.0
        %1363 = vmatprep.subr.mxu0 0.0
        %1364 = vmatpush1.msra.mxu0 0.0
        %1365 = vmatprep.subr.mxu0 0.0
        %1366 = vmatpush1.msra.mxu0 0.0
        %1367 = vmatprep.subr.mxu0 0.0
        %1368 = vmatpush1.msra.mxu0 0.0
        %1369 = vmatprep.subr.mxu0 0.0
        %1370 = vmatpush1.msra.mxu0 0.0
        %1371 = vmatprep.subr.mxu0 0.0
        %1372 = vmatpush1.msra.mxu0 0.0
        %1373 = vmatprep.subr.mxu0 0.0
        %1374 = vmatpush1.msra.mxu0 0.0
        %1375 = vmatprep.subr.mxu0 0.0
        %1376 = vmatpush1.msra.mxu0 0.0
        %1377 = vmatprep.subr.mxu0 0.0
        %1378 = vmatpush1.msra.mxu0 0.0
        %1379 = vmatprep.subr.mxu0 0.0
        %1380 = vmatpush1.msra.mxu0 0.0
        %1381 = vmatprep.subr.mxu0 0.0
        %1382 = vmatpush1.msra.mxu0 0.0
        %1383 = vmatprep.subr.mxu0 0.0
        %1384 = vmatpush1.msra.mxu0 0.0
        %1385 = vmatprep.subr.mxu0 0.0
        %1386 = vmatpush1.msra.mxu0 0.0
        %1387 = vmatprep.subr.mxu0 0.0
        %1388 = vmatpush1.msra.mxu0 0.0
        %1389 = vmatprep.subr.mxu0 0.0
        %1390 = vmatpush1.msra.mxu0 0.0
        %1391 = vmatprep.subr.mxu0 0.0
        %1392 = vmatpush1.msra.mxu0 0.0
        %1393 = vmatprep.subr.mxu0 0.0
        %1394 = vmatpush1.msra.mxu0 0.0
        %1395 = vmatprep.subr.mxu0 0.0
        %1396 = vmatpush1.msra.mxu0 0.0
        %1397 = vmatprep.subr.mxu0 0.0
        %1398 = vmatpush1.msra.mxu0 0.0
        %1399 = vmatprep.subr.mxu0 0.0
        %1400 = vmatpush1.msra.mxu0 0.0
        %1401 = vmatprep.subr.mxu0 0.0
        %1402 = vmatpush1.msra.mxu0 0.0
        %1403 = vmatprep.subr.mxu0 0.0
        %1404 = vmatpush1.msra.mxu0 0.0
        %1405 = vmatprep.mubr.f32.mxu0 0.0
        %1406 = vmatmul.mubr.f32.gmra.mrb[0].mxu0 %v1339
        %v1407 = vpop.f32.mrb[0].mxu0
        %v1408 = vadd.f32 0.0, %v1407
        %v1409 = vpop.f32.mrb[0].mxu0
        %1410 = vdwg.mxu0
        %v1412 = vsel %vm997, %v1162, 0
        %1414 = vmatprep.subr.mxu0 0.0
        %1415 = vmatpush1.msra.mxu0 %v744
        %1416 = vmatprep.subr.mxu0 0.0
        %1417 = vmatpush1.msra.mxu0 %v745
        %1418 = vmatprep.subr.mxu0 0.0
        %1419 = vmatpush1.msra.mxu0 %v746
        %1420 = vmatprep.subr.mxu0 0.0
        %1421 = vmatpush1.msra.mxu0 %v747
        %1422 = vmatprep.subr.mxu0 0.0
        %1423 = vmatpush1.msra.mxu0 0.0
        %1424 = vmatprep.subr.mxu0 0.0
        %1425 = vmatpush1.msra.mxu0 0.0
        %1426 = vmatprep.subr.mxu0 0.0
        %1427 = vmatpush1.msra.mxu0 0.0
        %1428 = vmatprep.subr.mxu0 0.0
        %1429 = vmatpush1.msra.mxu0 0.0
        %1430 = vmatprep.subr.mxu0 0.0
        %1431 = vmatpush1.msra.mxu0 0.0
        %1432 = vmatprep.subr.mxu0 0.0
        %1433 = vmatpush1.msra.mxu0 0.0
        %1434 = vmatprep.subr.mxu0 0.0
        %1435 = vmatpush1.msra.mxu0 0.0
        %1436 = vmatprep.subr.mxu0 0.0
        %1437 = vmatpush1.msra.mxu0 0.0
        %1438 = vmatprep.subr.mxu0 0.0
        %1439 = vmatpush1.msra.mxu0 0.0
        %1440 = vmatprep.subr.mxu0 0.0
        %1441 = vmatpush1.msra.mxu0 0.0
        %1442 = vmatprep.subr.mxu0 0.0
        %1443 = vmatpush1.msra.mxu0 0.0
        %1444 = vmatprep.subr.mxu0 0.0
        %1445 = vmatpush1.msra.mxu0 0.0
        %1446 = vmatprep.subr.mxu0 0.0
        %1447 = vmatpush1.msra.mxu0 0.0
        %1448 = vmatprep.subr.mxu0 0.0
        %1449 = vmatpush1.msra.mxu0 0.0
        %1450 = vmatprep.subr.mxu0 0.0
        %1451 = vmatpush1.msra.mxu0 0.0
        %1452 = vmatprep.subr.mxu0 0.0
        %1453 = vmatpush1.msra.mxu0 0.0
        %1454 = vmatprep.subr.mxu0 0.0
        %1455 = vmatpush1.msra.mxu0 0.0
        %1456 = vmatprep.subr.mxu0 0.0
        %1457 = vmatpush1.msra.mxu0 0.0
        %1458 = vmatprep.subr.mxu0 0.0
        %1459 = vmatpush1.msra.mxu0 0.0
        %1460 = vmatprep.subr.mxu0 0.0
        %1461 = vmatpush1.msra.mxu0 0.0
        %1462 = vmatprep.subr.mxu0 0.0
        %1463 = vmatpush1.msra.mxu0 0.0
        %1464 = vmatprep.subr.mxu0 0.0
        %1465 = vmatpush1.msra.mxu0 0.0
        %1466 = vmatprep.subr.mxu0 0.0
        %1467 = vmatpush1.msra.mxu0 0.0
        %1468 = vmatprep.subr.mxu0 0.0
        %1469 = vmatpush1.msra.mxu0 0.0
        %1470 = vmatprep.subr.mxu0 0.0
        %1471 = vmatpush1.msra.mxu0 0.0
        %1472 = vmatprep.subr.mxu0 0.0
        %1473 = vmatpush1.msra.mxu0 0.0
        %1474 = vmatprep.subr.mxu0 0.0
        %1475 = vmatpush1.msra.mxu0 0.0
        %1476 = vmatprep.subr.mxu0 0.0
        %1477 = vmatpush1.msra.mxu0 0.0
        %1478 = vmatprep.mubr.f32.mxu0 0.0
        %1479 = vmatmul.mubr.f32.gmra.mrb[0].mxu0 %v1412
        %v1480 = vpop.f32.mrb[0].mxu0
        %v1481 = vadd.f32 %v1408, %v1480
        %v1482 = vpop.f32.mrb[0].mxu0
        %1483 = vdwg.mxu0
        %1484 = vrot.lane.b32.xlu0 %v996, 64
        %v1485 = vpop.permute.xlu0 %1484
        %1486 = vrot.lane.b32.xlu0 %v909, 64
        %v1487 = vpop.permute.xlu0 %1486
        %1488 = vrot.lane.b32.xlu0 %v914, 64
        %v1489 = vpop.permute.xlu0 %1488
        %v1490 = vsel %vm997, %v1485, 0
        %v1492 = vsel %vm997, %v1487, 0
        %v1494 = vsel %vm997, %v1489, 0
        %1496 = vmatprep.subr.mxu0 0.0
        %1497 = vmatpush1.xpose.msra.mxu0 %v1492
        %1498 = vmatprep.subr.mxu0 0.0
        %1499 = vmatpush1.xpose.msra.mxu0 %v1494
        %1500 = vmatprep.subr.mxu0 0.0
        %1501 = vmatpush1.xpose.msra.mxu0 0.0
        %1502 = vmatprep.subr.mxu0 0.0
        %1503 = vmatpush1.xpose.msra.mxu0 0.0
        %1504 = vmatprep.subr.mxu0 0.0
        %1505 = vmatpush1.xpose.msra.mxu0 0.0
        %1506 = vmatprep.subr.mxu0 0.0
        %1507 = vmatpush1.xpose.msra.mxu0 0.0
        %1508 = vmatprep.subr.mxu0 0.0
        %1509 = vmatpush1.xpose.msra.mxu0 0.0
        %1510 = vmatprep.subr.mxu0 0.0
        %1511 = vmatpush1.xpose.msra.mxu0 0.0
        %1512 = vmatprep.subr.mxu0 0.0
        %1513 = vmatpush1.xpose.msra.mxu0 0.0
        %1514 = vmatprep.subr.mxu0 0.0
        %1515 = vmatpush1.xpose.msra.mxu0 0.0
        %1516 = vmatprep.subr.mxu0 0.0
        %1517 = vmatpush1.xpose.msra.mxu0 0.0
        %1518 = vmatprep.subr.mxu0 0.0
        %1519 = vmatpush1.xpose.msra.mxu0 0.0
        %1520 = vmatprep.subr.mxu0 0.0
        %1521 = vmatpush1.xpose.msra.mxu0 0.0
        %1522 = vmatprep.subr.mxu0 0.0
        %1523 = vmatpush1.xpose.msra.mxu0 0.0
        %1524 = vmatprep.subr.mxu0 0.0
        %1525 = vmatpush1.xpose.msra.mxu0 0.0
        %1526 = vmatprep.subr.mxu0 0.0
        %1527 = vmatpush1.xpose.msra.mxu0 0.0
        %1528 = vmatprep.subr.mxu0 0.0
        %1529 = vmatpush1.xpose.msra.mxu0 0.0
        %1530 = vmatprep.subr.mxu0 0.0
        %1531 = vmatpush1.xpose.msra.mxu0 0.0
        %1532 = vmatprep.subr.mxu0 0.0
        %1533 = vmatpush1.xpose.msra.mxu0 0.0
        %1534 = vmatprep.subr.mxu0 0.0
        %1535 = vmatpush1.xpose.msra.mxu0 0.0
        %1536 = vmatprep.subr.mxu0 0.0
        %1537 = vmatpush1.xpose.msra.mxu0 0.0
        %1538 = vmatprep.subr.mxu0 0.0
        %1539 = vmatpush1.xpose.msra.mxu0 0.0
        %1540 = vmatprep.subr.mxu0 0.0
        %1541 = vmatpush1.xpose.msra.mxu0 0.0
        %1542 = vmatprep.subr.mxu0 0.0
        %1543 = vmatpush1.xpose.msra.mxu0 0.0
        %1544 = vmatprep.subr.mxu0 0.0
        %1545 = vmatpush1.xpose.msra.mxu0 0.0
        %1546 = vmatprep.subr.mxu0 0.0
        %1547 = vmatpush1.xpose.msra.mxu0 0.0
        %1548 = vmatprep.subr.mxu0 0.0
        %1549 = vmatpush1.xpose.msra.mxu0 0.0
        %1550 = vmatprep.subr.mxu0 0.0
        %1551 = vmatpush1.xpose.msra.mxu0 0.0
        %1552 = vmatprep.subr.mxu0 0.0
        %1553 = vmatpush1.xpose.msra.mxu0 0.0
        %1554 = vmatprep.subr.mxu0 0.0
        %1555 = vmatpush1.xpose.msra.mxu0 0.0
        %1556 = vmatprep.subr.mxu0 0.0
        %1557 = vmatpush1.xpose.msra.mxu0 0.0
        %1558 = vmatprep.subr.mxu0 0.0
        %1559 = vmatpush1.xpose.msra.mxu0 0.0
        %1560 = vmatprep.mubr.f32.mxu0 0.0
        %1561 = vmatmul.mubr.f32.gmra.mrb[0].mxu0 %v1490
        %v1562 = vpop.f32.mrb[0].mxu0
        %v1563 = vadd.f32 0.0, %v1562
        %v1564 = vpop.f32.mrb[0].mxu0
        %1565 = vdwg.mxu0
        %v1566 = vsel %vm692, %v1563, -1e+30
        %v1567 = vsel %vm1078, %v1566, -inf
        %1568 = vmax.xlane.f32.xlu0 %v1567
        %v1569 = vpop.xlane.xlu0 %1568
        %v1570 = vsub.f32 %v1566, %v1569
        %v1571 = vmul.f32 %v1570, 1.442695
        %v1572 = vpow.pop %v1571
        %v1573 = vsel %vm1078, %v1572, 0.0
        %1574 = vadd.xlane.f32.xlu0 %v1573
        %v1575 = vpop.xlane.xlu0 %1574
        %1576 = vrot.lane.b32.xlu0 %v988, 64
        %v1577 = vpop.permute.xlu0 %1576
        %1578 = vrot.lane.b32.xlu0 %v993, 64
        %v1579 = vpop.permute.xlu0 %1578
        %v1583 = vsel %vm1078, %v1572, 0
        %1585 = vmatprep.subr.mxu0 0.0
        %1586 = vmatpush1.msra.mxu0 %v1577
        %1587 = vmatprep.subr.mxu0 0.0
        %1588 = vmatpush1.msra.mxu0 %v1579
        %1589 = vmatprep.subr.mxu0 0.0
        %1590 = vmatpush1.msra.mxu0 0.0
        %1591 = vmatprep.subr.mxu0 0.0
        %1592 = vmatpush1.msra.mxu0 0.0
        %1593 = vmatprep.subr.mxu0 0.0
        %1594 = vmatpush1.msra.mxu0 0.0
        %1595 = vmatprep.subr.mxu0 0.0
        %1596 = vmatpush1.msra.mxu0 0.0
        %1597 = vmatprep.subr.mxu0 0.0
        %1598 = vmatpush1.msra.mxu0 0.0
        %1599 = vmatprep.subr.mxu0 0.0
        %1600 = vmatpush1.msra.mxu0 0.0
        %1601 = vmatprep.subr.mxu0 0.0
        %1602 = vmatpush1.msra.mxu0 0.0
        %1603 = vmatprep.subr.mxu0 0.0
        %1604 = vmatpush1.msra.mxu0 0.0
        %1605 = vmatprep.subr.mxu0 0.0
        %1606 = vmatpush1.msra.mxu0 0.0
        %1607 = vmatprep.subr.mxu0 0.0
        %1608 = vmatpush1.msra.mxu0 0.0
        %1609 = vmatprep.subr.mxu0 0.0
        %1610 = vmatpush1.msra.mxu0 0.0
        %1611 = vmatprep.subr.mxu0 0.0
        %1612 = vmatpush1.msra.mxu0 0.0
        %1613 = vmatprep.subr.mxu0 0.0
        %1614 = vmatpush1.msra.mxu0 0.0
        %1615 = vmatprep.subr.mxu0 0.0
        %1616 = vmatpush1.msra.mxu0 0.0
        %1617 = vmatprep.subr.mxu0 0.0
        %1618 = vmatpush1.msra.mxu0 0.0
        %1619 = vmatprep.subr.mxu0 0.0
        %1620 = vmatpush1.msra.mxu0 0.0
        %1621 = vmatprep.subr.mxu0 0.0
        %1622 = vmatpush1.msra.mxu0 0.0
        %1623 = vmatprep.subr.mxu0 0.0
        %1624 = vmatpush1.msra.mxu0 0.0
        %1625 = vmatprep.subr.mxu0 0.0
        %1626 = vmatpush1.msra.mxu0 0.0
        %1627 = vmatprep.subr.mxu0 0.0
        %1628 = vmatpush1.msra.mxu0 0.0
        %1629 = vmatprep.subr.mxu0 0.0
        %1630 = vmatpush1.msra.mxu0 0.0
        %1631 = vmatprep.subr.mxu0 0.0
        %1632 = vmatpush1.msra.mxu0 0.0
        %1633 = vmatprep.subr.mxu0 0.0
        %1634 = vmatpush1.msra.mxu0 0.0
        %1635 = vmatprep.subr.mxu0 0.0
        %1636 = vmatpush1.msra.mxu0 0.0
        %1637 = vmatprep.subr.mxu0 0.0
        %1638 = vmatpush1.msra.mxu0 0.0
        %1639 = vmatprep.subr.mxu0 0.0
        %1640 = vmatpush1.msra.mxu0 0.0
        %1641 = vmatprep.subr.mxu0 0.0
        %1642 = vmatpush1.msra.mxu0 0.0
        %1643 = vmatprep.subr.mxu0 0.0
        %1644 = vmatpush1.msra.mxu0 0.0
        %1645 = vmatprep.subr.mxu0 0.0
        %1646 = vmatpush1.msra.mxu0 0.0
        %1647 = vmatprep.subr.mxu0 0.0
        %1648 = vmatpush1.msra.mxu0 0.0
        %1649 = vmatprep.mubr.f32.mxu0 0.0
        %1650 = vmatmul.mubr.f32.gmra.mrb[0].mxu0 %v1583
        %v1651 = vpop.f32.mrb[0].mxu0
        %v1652 = vadd.f32 0.0, %v1651
        %v1653 = vpop.f32.mrb[0].mxu0
        %1654 = vdwg.mxu0
        %v1655 = vrcp.pop %v1575
        %v1656 = vmul.f32 %v1652, %v1655
        %v1658 = vsel %vm997, %v1656, 0
        %1660 = vmatprep.subr.mxu0 0.0
        %1661 = vmatpush1.msra.mxu0 %v752
        %1662 = vmatprep.subr.mxu0 0.0
        %1663 = vmatpush1.msra.mxu0 %v753
        %1664 = vmatprep.subr.mxu0 0.0
        %1665 = vmatpush1.msra.mxu0 %v754
        %1666 = vmatprep.subr.mxu0 0.0
        %1667 = vmatpush1.msra.mxu0 %v755
        %1668 = vmatprep.subr.mxu0 0.0
        %1669 = vmatpush1.msra.mxu0 0.0
        %1670 = vmatprep.subr.mxu0 0.0
        %1671 = vmatpush1.msra.mxu0 0.0
        %1672 = vmatprep.subr.mxu0 0.0
        %1673 = vmatpush1.msra.mxu0 0.0
        %1674 = vmatprep.subr.mxu0 0.0
        %1675 = vmatpush1.msra.mxu0 0.0
        %1676 = vmatprep.subr.mxu0 0.0
        %1677 = vmatpush1.msra.mxu0 0.0
        %1678 = vmatprep.subr.mxu0 0.0
        %1679 = vmatpush1.msra.mxu0 0.0
        %1680 = vmatprep.subr.mxu0 0.0
        %1681 = vmatpush1.msra.mxu0 0.0
        %1682 = vmatprep.subr.mxu0 0.0
        %1683 = vmatpush1.msra.mxu0 0.0
        %1684 = vmatprep.subr.mxu0 0.0
        %1685 = vmatpush1.msra.mxu0 0.0
        %1686 = vmatprep.subr.mxu0 0.0
        %1687 = vmatpush1.msra.mxu0 0.0
        %1688 = vmatprep.subr.mxu0 0.0
        %1689 = vmatpush1.msra.mxu0 0.0
        %1690 = vmatprep.subr.mxu0 0.0
        %1691 = vmatpush1.msra.mxu0 0.0
        %1692 = vmatprep.subr.mxu0 0.0
        %1693 = vmatpush1.msra.mxu0 0.0
        %1694 = vmatprep.subr.mxu0 0.0
        %1695 = vmatpush1.msra.mxu0 0.0
        %1696 = vmatprep.subr.mxu0 0.0
        %1697 = vmatpush1.msra.mxu0 0.0
        %1698 = vmatprep.subr.mxu0 0.0
        %1699 = vmatpush1.msra.mxu0 0.0
        %1700 = vmatprep.subr.mxu0 0.0
        %1701 = vmatpush1.msra.mxu0 0.0
        %1702 = vmatprep.subr.mxu0 0.0
        %1703 = vmatpush1.msra.mxu0 0.0
        %1704 = vmatprep.subr.mxu0 0.0
        %1705 = vmatpush1.msra.mxu0 0.0
        %1706 = vmatprep.subr.mxu0 0.0
        %1707 = vmatpush1.msra.mxu0 0.0
        %1708 = vmatprep.subr.mxu0 0.0
        %1709 = vmatpush1.msra.mxu0 0.0
        %1710 = vmatprep.subr.mxu0 0.0
        %1711 = vmatpush1.msra.mxu0 0.0
        %1712 = vmatprep.subr.mxu0 0.0
        %1713 = vmatpush1.msra.mxu0 0.0
        %1714 = vmatprep.subr.mxu0 0.0
        %1715 = vmatpush1.msra.mxu0 0.0
        %1716 = vmatprep.subr.mxu0 0.0
        %1717 = vmatpush1.msra.mxu0 0.0
        %1718 = vmatprep.subr.mxu0 0.0
        %1719 = vmatpush1.msra.mxu0 0.0
        %1720 = vmatprep.subr.mxu0 0.0
        %1721 = vmatpush1.msra.mxu0 0.0
        %1722 = vmatprep.subr.mxu0 0.0
        %1723 = vmatpush1.msra.mxu0 0.0
        %1724 = vmatprep.mubr.f32.mxu0 0.0
        %1725 = vmatmul.mubr.f32.gmra.mrb[0].mxu0 %v1658
        %v1726 = vpop.f32.mrb[0].mxu0
        %v1727 = vadd.f32 0.0, %v1726
        %v1728 = vpop.f32.mrb[0].mxu0
        %1729 = vdwg.mxu0
        %v1730 = vadd.f32 %v1481, %v1727
        %1731 = vrot.lane.b32.xlu0 %v996, 32
        %v1732 = vpop.permute.xlu0 %1731
        %1733 = vrot.lane.b32.xlu0 %v909, 32
        %v1734 = vpop.permute.xlu0 %1733
        %1735 = vrot.lane.b32.xlu0 %v914, 32
        %v1736 = vpop.permute.xlu0 %1735
        %v1737 = vsel %vm997, %v1732, 0
        %v1739 = vsel %vm997, %v1734, 0
        %v1741 = vsel %vm997, %v1736, 0
        %1743 = vmatprep.subr.mxu0 0.0
        %1744 = vmatpush1.xpose.msra.mxu0 %v1739
        %1745 = vmatprep.subr.mxu0 0.0
        %1746 = vmatpush1.xpose.msra.mxu0 %v1741
        %1747 = vmatprep.subr.mxu0 0.0
        %1748 = vmatpush1.xpose.msra.mxu0 0.0
        %1749 = vmatprep.subr.mxu0 0.0
        %1750 = vmatpush1.xpose.msra.mxu0 0.0
        %1751 = vmatprep.subr.mxu0 0.0
        %1752 = vmatpush1.xpose.msra.mxu0 0.0
        %1753 = vmatprep.subr.mxu0 0.0
        %1754 = vmatpush1.xpose.msra.mxu0 0.0
        %1755 = vmatprep.subr.mxu0 0.0
        %1756 = vmatpush1.xpose.msra.mxu0 0.0
        %1757 = vmatprep.subr.mxu0 0.0
        %1758 = vmatpush1.xpose.msra.mxu0 0.0
        %1759 = vmatprep.subr.mxu0 0.0
        %1760 = vmatpush1.xpose.msra.mxu0 0.0
        %1761 = vmatprep.subr.mxu0 0.0
        %1762 = vmatpush1.xpose.msra.mxu0 0.0
        %1763 = vmatprep.subr.mxu0 0.0
        %1764 = vmatpush1.xpose.msra.mxu0 0.0
        %1765 = vmatprep.subr.mxu0 0.0
        %1766 = vmatpush1.xpose.msra.mxu0 0.0
        %1767 = vmatprep.subr.mxu0 0.0
        %1768 = vmatpush1.xpose.msra.mxu0 0.0
        %1769 = vmatprep.subr.mxu0 0.0
        %1770 = vmatpush1.xpose.msra.mxu0 0.0
        %1771 = vmatprep.subr.mxu0 0.0
        %1772 = vmatpush1.xpose.msra.mxu0 0.0
        %1773 = vmatprep.subr.mxu0 0.0
        %1774 = vmatpush1.xpose.msra.mxu0 0.0
        %1775 = vmatprep.subr.mxu0 0.0
        %1776 = vmatpush1.xpose.msra.mxu0 0.0
        %1777 = vmatprep.subr.mxu0 0.0
        %1778 = vmatpush1.xpose.msra.mxu0 0.0
        %1779 = vmatprep.subr.mxu0 0.0
        %1780 = vmatpush1.xpose.msra.mxu0 0.0
        %1781 = vmatprep.subr.mxu0 0.0
        %1782 = vmatpush1.xpose.msra.mxu0 0.0
        %1783 = vmatprep.subr.mxu0 0.0
        %1784 = vmatpush1.xpose.msra.mxu0 0.0
        %1785 = vmatprep.subr.mxu0 0.0
        %1786 = vmatpush1.xpose.msra.mxu0 0.0
        %1787 = vmatprep.subr.mxu0 0.0
        %1788 = vmatpush1.xpose.msra.mxu0 0.0
        %1789 = vmatprep.subr.mxu0 0.0
        %1790 = vmatpush1.xpose.msra.mxu0 0.0
        %1791 = vmatprep.subr.mxu0 0.0
        %1792 = vmatpush1.xpose.msra.mxu0 0.0
        %1793 = vmatprep.subr.mxu0 0.0
        %1794 = vmatpush1.xpose.msra.mxu0 0.0
        %1795 = vmatprep.subr.mxu0 0.0
        %1796 = vmatpush1.xpose.msra.mxu0 0.0
        %1797 = vmatprep.subr.mxu0 0.0
        %1798 = vmatpush1.xpose.msra.mxu0 0.0
        %1799 = vmatprep.subr.mxu0 0.0
        %1800 = vmatpush1.xpose.msra.mxu0 0.0
        %1801 = vmatprep.subr.mxu0 0.0
        %1802 = vmatpush1.xpose.msra.mxu0 0.0
        %1803 = vmatprep.subr.mxu0 0.0
        %1804 = vmatpush1.xpose.msra.mxu0 0.0
        %1805 = vmatprep.subr.mxu0 0.0
        %1806 = vmatpush1.xpose.msra.mxu0 0.0
        %1807 = vmatprep.mubr.f32.mxu0 0.0
        %1808 = vmatmul.mubr.f32.gmra.mrb[0].mxu0 %v1737
        %v1809 = vpop.f32.mrb[0].mxu0
        %v1810 = vadd.f32 0.0, %v1809
        %v1811 = vpop.f32.mrb[0].mxu0
        %1812 = vdwg.mxu0
        %v1813 = vsel %vm692, %v1810, -1e+30
        %v1814 = vsel %vm1078, %v1813, -inf
        %1815 = vmax.xlane.f32.xlu0 %v1814
        %v1816 = vpop.xlane.xlu0 %1815
        %v1817 = vsub.f32 %v1813, %v1816
        %v1818 = vmul.f32 %v1817, 1.442695
        %v1819 = vpow.pop %v1818
        %v1820 = vsel %vm1078, %v1819, 0.0
        %1821 = vadd.xlane.f32.xlu0 %v1820
        %v1822 = vpop.xlane.xlu0 %1821
        %1823 = vrot.lane.b32.xlu0 %v988, 32
        %v1824 = vpop.permute.xlu0 %1823
        %1825 = vrot.lane.b32.xlu0 %v993, 32
        %v1826 = vpop.permute.xlu0 %1825
        %v1830 = vsel %vm1078, %v1819, 0
        %1832 = vmatprep.subr.mxu0 0.0
        %1833 = vmatpush1.msra.mxu0 %v1824
        %1834 = vmatprep.subr.mxu0 0.0
        %1835 = vmatpush1.msra.mxu0 %v1826
        %1836 = vmatprep.subr.mxu0 0.0
        %1837 = vmatpush1.msra.mxu0 0.0
        %1838 = vmatprep.subr.mxu0 0.0
        %1839 = vmatpush1.msra.mxu0 0.0
        %1840 = vmatprep.subr.mxu0 0.0
        %1841 = vmatpush1.msra.mxu0 0.0
        %1842 = vmatprep.subr.mxu0 0.0
        %1843 = vmatpush1.msra.mxu0 0.0
        %1844 = vmatprep.subr.mxu0 0.0
        %1845 = vmatpush1.msra.mxu0 0.0
        %1846 = vmatprep.subr.mxu0 0.0
        %1847 = vmatpush1.msra.mxu0 0.0
        %1848 = vmatprep.subr.mxu0 0.0
        %1849 = vmatpush1.msra.mxu0 0.0
        %1850 = vmatprep.subr.mxu0 0.0
        %1851 = vmatpush1.msra.mxu0 0.0
        %1852 = vmatprep.subr.mxu0 0.0
        %1853 = vmatpush1.msra.mxu0 0.0
        %1854 = vmatprep.subr.mxu0 0.0
        %1855 = vmatpush1.msra.mxu0 0.0
        %1856 = vmatprep.subr.mxu0 0.0
        %1857 = vmatpush1.msra.mxu0 0.0
        %1858 = vmatprep.subr.mxu0 0.0
        %1859 = vmatpush1.msra.mxu0 0.0
        %1860 = vmatprep.subr.mxu0 0.0
        %1861 = vmatpush1.msra.mxu0 0.0
        %1862 = vmatprep.subr.mxu0 0.0
        %1863 = vmatpush1.msra.mxu0 0.0
        %1864 = vmatprep.subr.mxu0 0.0
        %1865 = vmatpush1.msra.mxu0 0.0
        %1866 = vmatprep.subr.mxu0 0.0
        %1867 = vmatpush1.msra.mxu0 0.0
        %1868 = vmatprep.subr.mxu0 0.0
        %1869 = vmatpush1.msra.mxu0 0.0
        %1870 = vmatprep.subr.mxu0 0.0
        %1871 = vmatpush1.msra.mxu0 0.0
        %1872 = vmatprep.subr.mxu0 0.0
        %1873 = vmatpush1.msra.mxu0 0.0
        %1874 = vmatprep.subr.mxu0 0.0
        %1875 = vmatpush1.msra.mxu0 0.0
        %1876 = vmatprep.subr.mxu0 0.0
        %1877 = vmatpush1.msra.mxu0 0.0
        %1878 = vmatprep.subr.mxu0 0.0
        %1879 = vmatpush1.msra.mxu0 0.0
        %1880 = vmatprep.subr.mxu0 0.0
        %1881 = vmatpush1.msra.mxu0 0.0
        %1882 = vmatprep.subr.mxu0 0.0
        %1883 = vmatpush1.msra.mxu0 0.0
        %1884 = vmatprep.subr.mxu0 0.0
        %1885 = vmatpush1.msra.mxu0 0.0
        %1886 = vmatprep.subr.mxu0 0.0
        %1887 = vmatpush1.msra.mxu0 0.0
        %1888 = vmatprep.subr.mxu0 0.0
        %1889 = vmatpush1.msra.mxu0 0.0
        %1890 = vmatprep.subr.mxu0 0.0
        %1891 = vmatpush1.msra.mxu0 0.0
        %1892 = vmatprep.subr.mxu0 0.0
        %1893 = vmatpush1.msra.mxu0 0.0
        %1894 = vmatprep.subr.mxu0 0.0
        %1895 = vmatpush1.msra.mxu0 0.0
        %1896 = vmatprep.mubr.f32.mxu0 0.0
        %1897 = vmatmul.mubr.f32.gmra.mrb[0].mxu0 %v1830
        %v1898 = vpop.f32.mrb[0].mxu0
        %v1899 = vadd.f32 0.0, %v1898
        %v1900 = vpop.f32.mrb[0].mxu0
        %1901 = vdwg.mxu0
        %v1902 = vrcp.pop %v1822
        %v1903 = vmul.f32 %v1899, %v1902
        %v1905 = vsel %vm997, %v1903, 0
        %1907 = vmatprep.subr.mxu0 0.0
        %1908 = vmatpush1.msra.mxu0 %v756
        %1909 = vmatprep.subr.mxu0 0.0
        %1910 = vmatpush1.msra.mxu0 %v757
        %1911 = vmatprep.subr.mxu0 0.0
        %1912 = vmatpush1.msra.mxu0 %v758
        %1913 = vmatprep.subr.mxu0 0.0
        %1914 = vmatpush1.msra.mxu0 %v759
        %1915 = vmatprep.subr.mxu0 0.0
        %1916 = vmatpush1.msra.mxu0 0.0
        %1917 = vmatprep.subr.mxu0 0.0
        %1918 = vmatpush1.msra.mxu0 0.0
        %1919 = vmatprep.subr.mxu0 0.0
        %1920 = vmatpush1.msra.mxu0 0.0
        %1921 = vmatprep.subr.mxu0 0.0
        %1922 = vmatpush1.msra.mxu0 0.0
        %1923 = vmatprep.subr.mxu0 0.0
        %1924 = vmatpush1.msra.mxu0 0.0
        %1925 = vmatprep.subr.mxu0 0.0
        %1926 = vmatpush1.msra.mxu0 0.0
        %1927 = vmatprep.subr.mxu0 0.0
        %1928 = vmatpush1.msra.mxu0 0.0
        %1929 = vmatprep.subr.mxu0 0.0
        %1930 = vmatpush1.msra.mxu0 0.0
        %1931 = vmatprep.subr.mxu0 0.0
        %1932 = vmatpush1.msra.mxu0 0.0
        %1933 = vmatprep.subr.mxu0 0.0
        %1934 = vmatpush1.msra.mxu0 0.0
        %1935 = vmatprep.subr.mxu0 0.0
        %1936 = vmatpush1.msra.mxu0 0.0
        %1937 = vmatprep.subr.mxu0 0.0
        %1938 = vmatpush1.msra.mxu0 0.0
        %1939 = vmatprep.subr.mxu0 0.0
        %1940 = vmatpush1.msra.mxu0 0.0
        %1941 = vmatprep.subr.mxu0 0.0
        %1942 = vmatpush1.msra.mxu0 0.0
        %1943 = vmatprep.subr.mxu0 0.0
        %1944 = vmatpush1.msra.mxu0 0.0
        %1945 = vmatprep.subr.mxu0 0.0
        %1946 = vmatpush1.msra.mxu0 0.0
        %1947 = vmatprep.subr.mxu0 0.0
        %1948 = vmatpush1.msra.mxu0 0.0
        %1949 = vmatprep.subr.mxu0 0.0
        %1950 = vmatpush1.msra.mxu0 0.0
        %1951 = vmatprep.subr.mxu0 0.0
        %1952 = vmatpush1.msra.mxu0 0.0
        %1953 = vmatprep.subr.mxu0 0.0
        %1954 = vmatpush1.msra.mxu0 0.0
        %1955 = vmatprep.subr.mxu0 0.0
        %1956 = vmatpush1.msra.mxu0 0.0
        %1957 = vmatprep.subr.mxu0 0.0
        %1958 = vmatpush1.msra.mxu0 0.0
        %1959 = vmatprep.subr.mxu0 0.0
        %1960 = vmatpush1.msra.mxu0 0.0
        %1961 = vmatprep.subr.mxu0 0.0
        %1962 = vmatpush1.msra.mxu0 0.0
        %1963 = vmatprep.subr.mxu0 0.0
        %1964 = vmatpush1.msra.mxu0 0.0
        %1965 = vmatprep.subr.mxu0 0.0
        %1966 = vmatpush1.msra.mxu0 0.0
        %1967 = vmatprep.subr.mxu0 0.0
        %1968 = vmatpush1.msra.mxu0 0.0
        %1969 = vmatprep.subr.mxu0 0.0
        %1970 = vmatpush1.msra.mxu0 0.0
        %1971 = vmatprep.mubr.f32.mxu0 0.0
        %1972 = vmatmul.mubr.f32.gmra.mrb[0].mxu0 %v1905
        %v1973 = vpop.f32.mrb[0].mxu0
        %v1974 = vadd.f32 0.0, %v1973
        %v1975 = vpop.f32.mrb[0].mxu0
        %1976 = vdwg.mxu0
        %v1977 = vadd.f32 %v1730, %v1974
        %v1978 = vlaneseq
        %v1979 = vshrl.u32 %v1978, 7
        %v1980 = vsub.s32 0, %v1979
        %v1981 = vrot.slane %v763, %v1980
        %v1982 = vadd.f32 %v1977, %v1981
        %v1983 = vadd.f32 %v681, %v1982
        %v1984 = vld [vmem:[#allocation20] sm:$0x1]
        %v1985 = vld [vmem:[#allocation22] sm:$0x1]
        %1986 = vadd.xlane.f32.xlu0 %v1983
        %v1987 = vpop.xlane.xlu0 %1986
        %v1988 = vrcp.pop 128.0
        %v1989 = vmul.f32 %v1987, %v1988
        %v1990 = vsub.f32 %v1983, %v1989
        %v1991 = vmul.f32 %v1990, %v1990
        %1992 = vadd.xlane.f32.xlu0 %v1991
        %v1993 = vpop.xlane.xlu0 %1992
        %v1994 = vmul.f32 %v1993, %v1988
        %v1995 = vadd.f32 %v1994, 1e-06
        %v1996 = vrsqrt.pop %v1995
        %v1997 = vmul.f32 %v1990, %v1996
        %v1998 = vlaneseq
        %v1999 = vshrl.u32 %v1998, 7
        %v2000 = vsub.s32 0, %v1999
        %v2001 = vrot.slane %v1984, %v2000
        %v2002 = vmul.f32 %v1997, %v2001
        %v2003 = vlaneseq
        %v2004 = vshrl.u32 %v2003, 7
        %v2005 = vsub.s32 0, %v2004
        %v2006 = vrot.slane %v1985, %v2005
        %v2007 = vadd.f32 %v2002, %v2006
        %v2008 = vld [vmem:[#allocation11] sm:$0xff]
        %v2009 = vld [vmem:[#allocation11 + $0x8] sm:$0xff]
        %v2010 = vld [vmem:[#allocation11 + $0x10] sm:$0xff]
        %v2011 = vld [vmem:[#allocation11 + $0x18] sm:$0xff]
        %v2012 = vld [vmem:[#allocation11 + $0x20] sm:$0xff]
        %v2013 = vld [vmem:[#allocation11 + $0x28] sm:$0xff]
        %v2014 = vld [vmem:[#allocation11 + $0x30] sm:$0xff]
        %v2015 = vld [vmem:[#allocation11 + $0x38] sm:$0xff]
        %v2016 = vld [vmem:[#allocation11 + $0x40] sm:$0xff]
        %v2017 = vld [vmem:[#allocation11 + $0x48] sm:$0xff]
        %v2018 = vld [vmem:[#allocation11 + $0x50] sm:$0xff]
        %v2019 = vld [vmem:[#allocation11 + $0x58] sm:$0xff]
        %v2020 = vld [vmem:[#allocation11 + $0x60] sm:$0xff]
        %v2021 = vld [vmem:[#allocation11 + $0x68] sm:$0xff]
        %v2022 = vld [vmem:[#allocation11 + $0x70] sm:$0xff]
        %v2023 = vld [vmem:[#allocation11 + $0x78] sm:$0xff]
        %s2024 = scalar_lea.vmem [#allocation11], 128
        %v2025 = vld [vmem:[%s2024] sm:$0xff]
        %v2026 = vld [vmem:[%s2024 + $0x8] sm:$0xff]
        %v2027 = vld [vmem:[%s2024 + $0x10] sm:$0xff]
        %v2028 = vld [vmem:[%s2024 + $0x18] sm:$0xff]
        %v2029 = vld [vmem:[%s2024 + $0x20] sm:$0xff]
        %v2030 = vld [vmem:[%s2024 + $0x28] sm:$0xff]
        %v2031 = vld [vmem:[%s2024 + $0x30] sm:$0xff]
        %v2032 = vld [vmem:[%s2024 + $0x38] sm:$0xff]
        %v2033 = vld [vmem:[%s2024 + $0x40] sm:$0xff]
        %v2034 = vld [vmem:[%s2024 + $0x48] sm:$0xff]
        %v2035 = vld [vmem:[%s2024 + $0x50] sm:$0xff]
        %v2036 = vld [vmem:[%s2024 + $0x58] sm:$0xff]
        %v2037 = vld [vmem:[%s2024 + $0x60] sm:$0xff]
        %v2038 = vld [vmem:[%s2024 + $0x68] sm:$0xff]
        %v2039 = vld [vmem:[%s2024 + $0x70] sm:$0xff]
        %v2040 = vld [vmem:[%s2024 + $0x78] sm:$0xff]
        %s2041 = scalar_lea.vmem [#allocation11], 256
        %v2042 = vld [vmem:[%s2041] sm:$0xff]
        %v2043 = vld [vmem:[%s2041 + $0x8] sm:$0xff]
        %v2044 = vld [vmem:[%s2041 + $0x10] sm:$0xff]
        %v2045 = vld [vmem:[%s2041 + $0x18] sm:$0xff]
        %v2046 = vld [vmem:[%s2041 + $0x20] sm:$0xff]
        %v2047 = vld [vmem:[%s2041 + $0x28] sm:$0xff]
        %v2048 = vld [vmem:[%s2041 + $0x30] sm:$0xff]
        %v2049 = vld [vmem:[%s2041 + $0x38] sm:$0xff]
        %v2050 = vld [vmem:[%s2041 + $0x40] sm:$0xff]
        %v2051 = vld [vmem:[%s2041 + $0x48] sm:$0xff]
        %v2052 = vld [vmem:[%s2041 + $0x50] sm:$0xff]
        %v2053 = vld [vmem:[%s2041 + $0x58] sm:$0xff]
        %v2054 = vld [vmem:[%s2041 + $0x60] sm:$0xff]
        %v2055 = vld [vmem:[%s2041 + $0x68] sm:$0xff]
        %v2056 = vld [vmem:[%s2041 + $0x70] sm:$0xff]
        %v2057 = vld [vmem:[%s2041 + $0x78] sm:$0xff]
        %s2058 = scalar_lea.vmem [#allocation11], 384
        %v2059 = vld [vmem:[%s2058] sm:$0xff]
        %v2060 = vld [vmem:[%s2058 + $0x8] sm:$0xff]
        %v2061 = vld [vmem:[%s2058 + $0x10] sm:$0xff]
        %v2062 = vld [vmem:[%s2058 + $0x18] sm:$0xff]
        %v2063 = vld [vmem:[%s2058 + $0x20] sm:$0xff]
        %v2064 = vld [vmem:[%s2058 + $0x28] sm:$0xff]
        %v2065 = vld [vmem:[%s2058 + $0x30] sm:$0xff]
        %v2066 = vld [vmem:[%s2058 + $0x38] sm:$0xff]
        %v2067 = vld [vmem:[%s2058 + $0x40] sm:$0xff]
        %v2068 = vld [vmem:[%s2058 + $0x48] sm:$0xff]
        %v2069 = vld [vmem:[%s2058 + $0x50] sm:$0xff]
        %v2070 = vld [vmem:[%s2058 + $0x58] sm:$0xff]
        %v2071 = vld [vmem:[%s2058 + $0x60] sm:$0xff]
        %v2072 = vld [vmem:[%s2058 + $0x68] sm:$0xff]
        %v2073 = vld [vmem:[%s2058 + $0x70] sm:$0xff]
        %v2074 = vld [vmem:[%s2058 + $0x78] sm:$0xff]
        %v2075 = vld [vmem:[#allocation13] sm:$0x1]
        %v2076 = vld [vmem:[#allocation13 + $0x1] sm:$0x1]
        %v2077 = vld [vmem:[#allocation13 + $0x2] sm:$0x1]
        %v2078 = vld [vmem:[#allocation13 + $0x3] sm:$0x1]
        %v2079 = vlaneseq
        %v2080 = vshrl.u32 %v2079, 7
        %v2081 = vsub.s32 0, %v2080
        %v2082 = vrot.slane %v2075, %v2081
        %2083 = vmatprep.subr.mxu0 0.0
        %2084 = vmatpush1.msra.mxu0 %v2008
        %2085 = vmatprep.subr.mxu0 0.0
        %2086 = vmatpush1.msra.mxu0 %v2009
        %2087 = vmatprep.subr.mxu0 0.0
        %2088 = vmatpush1.msra.mxu0 %v2010
        %2089 = vmatprep.subr.mxu0 0.0
        %2090 = vmatpush1.msra.mxu0 %v2011
        %2091 = vmatprep.subr.mxu0 0.0
        %2092 = vmatpush1.msra.mxu0 %v2012
        %2093 = vmatprep.subr.mxu0 0.0
        %2094 = vmatpush1.msra.mxu0 %v2013
        %2095 = vmatprep.subr.mxu0 0.0
        %2096 = vmatpush1.msra.mxu0 %v2014
        %2097 = vmatprep.subr.mxu0 0.0
        %2098 = vmatpush1.msra.mxu0 %v2015
        %2099 = vmatprep.subr.mxu0 0.0
        %2100 = vmatpush1.msra.mxu0 %v2016
        %2101 = vmatprep.subr.mxu0 0.0
        %2102 = vmatpush1.msra.mxu0 %v2017
        %2103 = vmatprep.subr.mxu0 0.0
        %2104 = vmatpush1.msra.mxu0 %v2018
        %2105 = vmatprep.subr.mxu0 0.0
        %2106 = vmatpush1.msra.mxu0 %v2019
        %2107 = vmatprep.subr.mxu0 0.0
        %2108 = vmatpush1.msra.mxu0 %v2020
        %2109 = vmatprep.subr.mxu0 0.0
        %2110 = vmatpush1.msra.mxu0 %v2021
        %2111 = vmatprep.subr.mxu0 0.0
        %2112 = vmatpush1.msra.mxu0 %v2022
        %2113 = vmatprep.subr.mxu0 0.0
        %2114 = vmatpush1.msra.mxu0 %v2023
        %2115 = vmatprep.subr.mxu0 0.0
        %2116 = vmatpush1.msra.mxu0 0.0
        %2117 = vmatprep.subr.mxu0 0.0
        %2118 = vmatpush1.msra.mxu0 0.0
        %2119 = vmatprep.subr.mxu0 0.0
        %2120 = vmatpush1.msra.mxu0 0.0
        %2121 = vmatprep.subr.mxu0 0.0
        %2122 = vmatpush1.msra.mxu0 0.0
        %2123 = vmatprep.subr.mxu0 0.0
        %2124 = vmatpush1.msra.mxu0 0.0
        %2125 = vmatprep.subr.mxu0 0.0
        %2126 = vmatpush1.msra.mxu0 0.0
        %2127 = vmatprep.subr.mxu0 0.0
        %2128 = vmatpush1.msra.mxu0 0.0
        %2129 = vmatprep.subr.mxu0 0.0
        %2130 = vmatpush1.msra.mxu0 0.0
        %2131 = vmatprep.subr.mxu0 0.0
        %2132 = vmatpush1.msra.mxu0 0.0
        %2133 = vmatprep.subr.mxu0 0.0
        %2134 = vmatpush1.msra.mxu0 0.0
        %2135 = vmatprep.subr.mxu0 0.0
        %2136 = vmatpush1.msra.mxu0 0.0
        %2137 = vmatprep.subr.mxu0 0.0
        %2138 = vmatpush1.msra.mxu0 0.0
        %2139 = vmatprep.subr.mxu0 0.0
        %2140 = vmatpush1.msra.mxu0 0.0
        %2141 = vmatprep.subr.mxu0 0.0
        %2142 = vmatpush1.msra.mxu0 0.0
        %2143 = vmatprep.subr.mxu0 0.0
        %2144 = vmatpush1.msra.mxu0 0.0
        %2145 = vmatprep.subr.mxu0 0.0
        %2146 = vmatpush1.msra.mxu0 0.0
        %2147 = vmatprep.mubr.f32.mxu0 0.0
        %2148 = vmatmul.mubr.f32.gmra.mrb[0].mxu0 %v2007
        %v2149 = vpop.f32.mrb[0].mxu0
        %v2150 = vadd.f32 %v2082, %v2149
        %v2151 = vpop.f32.mrb[0].mxu0
        %2152 = vdwg.mxu0
        %v2153 = vlaneseq
        %v2154 = vshrl.u32 %v2153, 7
        %v2155 = vsub.s32 0, %v2154
        %v2156 = vrot.slane %v2076, %v2155
        %2157 = vmatprep.subr.mxu0 0.0
        %2158 = vmatpush1.msra.mxu0 %v2025
        %2159 = vmatprep.subr.mxu0 0.0
        %2160 = vmatpush1.msra.mxu0 %v2026
        %2161 = vmatprep.subr.mxu0 0.0
        %2162 = vmatpush1.msra.mxu0 %v2027
        %2163 = vmatprep.subr.mxu0 0.0
        %2164 = vmatpush1.msra.mxu0 %v2028
        %2165 = vmatprep.subr.mxu0 0.0
        %2166 = vmatpush1.msra.mxu0 %v2029
        %2167 = vmatprep.subr.mxu0 0.0
        %2168 = vmatpush1.msra.mxu0 %v2030
        %2169 = vmatprep.subr.mxu0 0.0
        %2170 = vmatpush1.msra.mxu0 %v2031
        %2171 = vmatprep.subr.mxu0 0.0
        %2172 = vmatpush1.msra.mxu0 %v2032
        %2173 = vmatprep.subr.mxu0 0.0
        %2174 = vmatpush1.msra.mxu0 %v2033
        %2175 = vmatprep.subr.mxu0 0.0
        %2176 = vmatpush1.msra.mxu0 %v2034
        %2177 = vmatprep.subr.mxu0 0.0
        %2178 = vmatpush1.msra.mxu0 %v2035
        %2179 = vmatprep.subr.mxu0 0.0
        %2180 = vmatpush1.msra.mxu0 %v2036
        %2181 = vmatprep.subr.mxu0 0.0
        %2182 = vmatpush1.msra.mxu0 %v2037
        %2183 = vmatprep.subr.mxu0 0.0
        %2184 = vmatpush1.msra.mxu0 %v2038
        %2185 = vmatprep.subr.mxu0 0.0
        %2186 = vmatpush1.msra.mxu0 %v2039
        %2187 = vmatprep.subr.mxu0 0.0
        %2188 = vmatpush1.msra.mxu0 %v2040
        %2189 = vmatprep.subr.mxu0 0.0
        %2190 = vmatpush1.msra.mxu0 0.0
        %2191 = vmatprep.subr.mxu0 0.0
        %2192 = vmatpush1.msra.mxu0 0.0
        %2193 = vmatprep.subr.mxu0 0.0
        %2194 = vmatpush1.msra.mxu0 0.0
        %2195 = vmatprep.subr.mxu0 0.0
        %2196 = vmatpush1.msra.mxu0 0.0
        %2197 = vmatprep.subr.mxu0 0.0
        %2198 = vmatpush1.msra.mxu0 0.0
        %2199 = vmatprep.subr.mxu0 0.0
        %2200 = vmatpush1.msra.mxu0 0.0
        %2201 = vmatprep.subr.mxu0 0.0
        %2202 = vmatpush1.msra.mxu0 0.0
        %2203 = vmatprep.subr.mxu0 0.0
        %2204 = vmatpush1.msra.mxu0 0.0
        %2205 = vmatprep.subr.mxu0 0.0
        %2206 = vmatpush1.msra.mxu0 0.0
        %2207 = vmatprep.subr.mxu0 0.0
        %2208 = vmatpush1.msra.mxu0 0.0
        %2209 = vmatprep.subr.mxu0 0.0
        %2210 = vmatpush1.msra.mxu0 0.0
        %2211 = vmatprep.subr.mxu0 0.0
        %2212 = vmatpush1.msra.mxu0 0.0
        %2213 = vmatprep.subr.mxu0 0.0
        %2214 = vmatpush1.msra.mxu0 0.0
        %2215 = vmatprep.subr.mxu0 0.0
        %2216 = vmatpush1.msra.mxu0 0.0
        %2217 = vmatprep.subr.mxu0 0.0
        %2218 = vmatpush1.msra.mxu0 0.0
        %2219 = vmatprep.subr.mxu0 0.0
        %2220 = vmatpush1.msra.mxu0 0.0
        %2221 = vmatprep.mubr.f32.mxu0 0.0
        %2222 = vmatmul.mubr.f32.gmra.mrb[0].mxu0 %v684
        %v2223 = vpop.f32.mrb[0].mxu0
        %v2224 = vadd.f32 %v2156, %v2223
        %v2225 = vpop.f32.mrb[0].mxu0
        %2226 = vdwg.mxu0
        %v2227 = vlaneseq
        %v2228 = vshrl.u32 %v2227, 7
        %v2229 = vsub.s32 0, %v2228
        %v2230 = vrot.slane %v2077, %v2229
        %2231 = vmatprep.subr.mxu0 0.0
        %2232 = vmatpush1.msra.mxu0 %v2042
        %2233 = vmatprep.subr.mxu0 0.0
        %2234 = vmatpush1.msra.mxu0 %v2043
        %2235 = vmatprep.subr.mxu0 0.0
        %2236 = vmatpush1.msra.mxu0 %v2044
        %2237 = vmatprep.subr.mxu0 0.0
        %2238 = vmatpush1.msra.mxu0 %v2045
        %2239 = vmatprep.subr.mxu0 0.0
        %2240 = vmatpush1.msra.mxu0 %v2046
        %2241 = vmatprep.subr.mxu0 0.0
        %2242 = vmatpush1.msra.mxu0 %v2047
        %2243 = vmatprep.subr.mxu0 0.0
        %2244 = vmatpush1.msra.mxu0 %v2048
        %2245 = vmatprep.subr.mxu0 0.0
        %2246 = vmatpush1.msra.mxu0 %v2049
        %2247 = vmatprep.subr.mxu0 0.0
        %2248 = vmatpush1.msra.mxu0 %v2050
        %2249 = vmatprep.subr.mxu0 0.0
        %2250 = vmatpush1.msra.mxu0 %v2051
        %2251 = vmatprep.subr.mxu0 0.0
        %2252 = vmatpush1.msra.mxu0 %v2052
        %2253 = vmatprep.subr.mxu0 0.0
        %2254 = vmatpush1.msra.mxu0 %v2053
        %2255 = vmatprep.subr.mxu0 0.0
        %2256 = vmatpush1.msra.mxu0 %v2054
        %2257 = vmatprep.subr.mxu0 0.0
        %2258 = vmatpush1.msra.mxu0 %v2055
        %2259 = vmatprep.subr.mxu0 0.0
        %2260 = vmatpush1.msra.mxu0 %v2056
        %2261 = vmatprep.subr.mxu0 0.0
        %2262 = vmatpush1.msra.mxu0 %v2057
        %2263 = vmatprep.subr.mxu0 0.0
        %2264 = vmatpush1.msra.mxu0 0.0
        %2265 = vmatprep.subr.mxu0 0.0
        %2266 = vmatpush1.msra.mxu0 0.0
        %2267 = vmatprep.subr.mxu0 0.0
        %2268 = vmatpush1.msra.mxu0 0.0
        %2269 = vmatprep.subr.mxu0 0.0
        %2270 = vmatpush1.msra.mxu0 0.0
        %2271 = vmatprep.subr.mxu0 0.0
        %2272 = vmatpush1.msra.mxu0 0.0
        %2273 = vmatprep.subr.mxu0 0.0
        %2274 = vmatpush1.msra.mxu0 0.0
        %2275 = vmatprep.subr.mxu0 0.0
        %2276 = vmatpush1.msra.mxu0 0.0
        %2277 = vmatprep.subr.mxu0 0.0
        %2278 = vmatpush1.msra.mxu0 0.0
        %2279 = vmatprep.subr.mxu0 0.0
        %2280 = vmatpush1.msra.mxu0 0.0
        %2281 = vmatprep.subr.mxu0 0.0
        %2282 = vmatpush1.msra.mxu0 0.0
        %2283 = vmatprep.subr.mxu0 0.0
        %2284 = vmatpush1.msra.mxu0 0.0
        %2285 = vmatprep.subr.mxu0 0.0
        %2286 = vmatpush1.msra.mxu0 0.0
        %2287 = vmatprep.subr.mxu0 0.0
        %2288 = vmatpush1.msra.mxu0 0.0
        %2289 = vmatprep.subr.mxu0 0.0
        %2290 = vmatpush1.msra.mxu0 0.0
        %2291 = vmatprep.subr.mxu0 0.0
        %2292 = vmatpush1.msra.mxu0 0.0
        %2293 = vmatprep.subr.mxu0 0.0
        %2294 = vmatpush1.msra.mxu0 0.0
        %2295 = vmatprep.mubr.f32.mxu0 0.0
        %2296 = vmatmul.mubr.f32.gmra.mrb[0].mxu0 %v684
        %v2297 = vpop.f32.mrb[0].mxu0
        %v2298 = vadd.f32 %v2230, %v2297
        %v2299 = vpop.f32.mrb[0].mxu0
        %2300 = vdwg.mxu0
        %v2301 = vmul.f32 %v2150, 0.17677669
        %v2303 = vsel %vm997, %v2301, 0
        %v2306 = vsel %vm997, %v2224, 0
        %2308 = vmatprep.subr.mxu0 0.0
        %2309 = vmatpush1.xpose.msra.mxu0 %v2306
        %2310 = vmatprep.subr.mxu0 0.0
        %2311 = vmatpush1.xpose.msra.mxu0 0.0
        %2312 = vmatprep.subr.mxu0 0.0
        %2313 = vmatpush1.xpose.msra.mxu0 0.0
        %2314 = vmatprep.subr.mxu0 0.0
        %2315 = vmatpush1.xpose.msra.mxu0 0.0
        %2316 = vmatprep.subr.mxu0 0.0
        %2317 = vmatpush1.xpose.msra.mxu0 0.0
        %2318 = vmatprep.subr.mxu0 0.0
        %2319 = vmatpush1.xpose.msra.mxu0 0.0
        %2320 = vmatprep.subr.mxu0 0.0
        %2321 = vmatpush1.xpose.msra.mxu0 0.0
        %2322 = vmatprep.subr.mxu0 0.0
        %2323 = vmatpush1.xpose.msra.mxu0 0.0
        %2324 = vmatprep.subr.mxu0 0.0
        %2325 = vmatpush1.xpose.msra.mxu0 0.0
        %2326 = vmatprep.subr.mxu0 0.0
        %2327 = vmatpush1.xpose.msra.mxu0 0.0
        %2328 = vmatprep.subr.mxu0 0.0
        %2329 = vmatpush1.xpose.msra.mxu0 0.0
        %2330 = vmatprep.subr.mxu0 0.0
        %2331 = vmatpush1.xpose.msra.mxu0 0.0
        %2332 = vmatprep.subr.mxu0 0.0
        %2333 = vmatpush1.xpose.msra.mxu0 0.0
        %2334 = vmatprep.subr.mxu0 0.0
        %2335 = vmatpush1.xpose.msra.mxu0 0.0
        %2336 = vmatprep.subr.mxu0 0.0
        %2337 = vmatpush1.xpose.msra.mxu0 0.0
        %2338 = vmatprep.subr.mxu0 0.0
        %2339 = vmatpush1.xpose.msra.mxu0 0.0
        %2340 = vmatprep.subr.mxu0 0.0
        %2341 = vmatpush1.xpose.msra.mxu0 0.0
        %2342 = vmatprep.subr.mxu0 0.0
        %2343 = vmatpush1.xpose.msra.mxu0 0.0
        %2344 = vmatprep.subr.mxu0 0.0
        %2345 = vmatpush1.xpose.msra.mxu0 0.0
        %2346 = vmatprep.subr.mxu0 0.0
        %2347 = vmatpush1.xpose.msra.mxu0 0.0
        %2348 = vmatprep.subr.mxu0 0.0
        %2349 = vmatpush1.xpose.msra.mxu0 0.0
        %2350 = vmatprep.subr.mxu0 0.0
        %2351 = vmatpush1.xpose.msra.mxu0 0.0
        %2352 = vmatprep.subr.mxu0 0.0
        %2353 = vmatpush1.xpose.msra.mxu0 0.0
        %2354 = vmatprep.subr.mxu0 0.0
        %2355 = vmatpush1.xpose.msra.mxu0 0.0
        %2356 = vmatprep.subr.mxu0 0.0
        %2357 = vmatpush1.xpose.msra.mxu0 0.0
        %2358 = vmatprep.subr.mxu0 0.0
        %2359 = vmatpush1.xpose.msra.mxu0 0.0
        %2360 = vmatprep.subr.mxu0 0.0
        %2361 = vmatpush1.xpose.msra.mxu0 0.0
        %2362 = vmatprep.subr.mxu0 0.0
        %2363 = vmatpush1.xpose.msra.mxu0 0.0
        %2364 = vmatprep.subr.mxu0 0.0
        %2365 = vmatpush1.xpose.msra.mxu0 0.0
        %2366 = vmatprep.subr.mxu0 0.0
        %2367 = vmatpush1.xpose.msra.mxu0 0.0
        %2368 = vmatprep.subr.mxu0 0.0
        %2369 = vmatpush1.xpose.msra.mxu0 0.0
        %2370 = vmatprep.subr.mxu0 0.0
        %2371 = vmatpush1.xpose.msra.mxu0 0.0
        %2372 = vmatprep.mubr.f32.mxu0 0.0
        %2373 = vmatmul.mubr.f32.gmra.mrb[0].mxu0 %v2303
        %v2374 = vpop.f32.mrb[0].mxu0
        %v2375 = vadd.f32 0.0, %v2374
        %v2376 = vpop.f32.mrb[0].mxu0
        %2377 = vdwg.mxu0
        %vm2378 = vcmask 64512
        %v2379 = vsel %vm2378, %v2375, -inf
        %2380 = vmax.xlane.f32.xlu0 %v2379
        %v2381 = vpop.xlane.xlu0 %2380
        %v2382 = vsub.f32 %v2375, %v2381
        %v2383 = vmul.f32 %v2382, 1.442695
        %v2384 = vpow.pop %v2383
        %v2385 = vsel %vm2378, %v2384, 0.0
        %2386 = vadd.xlane.f32.xlu0 %v2385
        %v2387 = vpop.xlane.xlu0 %2386
        %v2389 = vsel %vm2378, %v2384, 0
        %2391 = vmatprep.subr.mxu0 0.0
        %2392 = vmatpush1.msra.mxu0 %v2298
        %2393 = vmatprep.subr.mxu0 0.0
        %2394 = vmatpush1.msra.mxu0 0.0
        %2395 = vmatprep.subr.mxu0 0.0
        %2396 = vmatpush1.msra.mxu0 0.0
        %2397 = vmatprep.subr.mxu0 0.0
        %2398 = vmatpush1.msra.mxu0 0.0
        %2399 = vmatprep.subr.mxu0 0.0
        %2400 = vmatpush1.msra.mxu0 0.0
        %2401 = vmatprep.subr.mxu0 0.0
        %2402 = vmatpush1.msra.mxu0 0.0
        %2403 = vmatprep.subr.mxu0 0.0
        %2404 = vmatpush1.msra.mxu0 0.0
        %2405 = vmatprep.subr.mxu0 0.0
        %2406 = vmatpush1.msra.mxu0 0.0
        %2407 = vmatprep.subr.mxu0 0.0
        %2408 = vmatpush1.msra.mxu0 0.0
        %2409 = vmatprep.subr.mxu0 0.0
        %2410 = vmatpush1.msra.mxu0 0.0
        %2411 = vmatprep.subr.mxu0 0.0
        %2412 = vmatpush1.msra.mxu0 0.0
        %2413 = vmatprep.subr.mxu0 0.0
        %2414 = vmatpush1.msra.mxu0 0.0
        %2415 = vmatprep.subr.mxu0 0.0
        %2416 = vmatpush1.msra.mxu0 0.0
        %2417 = vmatprep.subr.mxu0 0.0
        %2418 = vmatpush1.msra.mxu0 0.0
        %2419 = vmatprep.subr.mxu0 0.0
        %2420 = vmatpush1.msra.mxu0 0.0
        %2421 = vmatprep.subr.mxu0 0.0
        %2422 = vmatpush1.msra.mxu0 0.0
        %2423 = vmatprep.subr.mxu0 0.0
        %2424 = vmatpush1.msra.mxu0 0.0
        %2425 = vmatprep.subr.mxu0 0.0
        %2426 = vmatpush1.msra.mxu0 0.0
        %2427 = vmatprep.subr.mxu0 0.0
        %2428 = vmatpush1.msra.mxu0 0.0
        %2429 = vmatprep.subr.mxu0 0.0
        %2430 = vmatpush1.msra.mxu0 0.0
        %2431 = vmatprep.subr.mxu0 0.0
        %2432 = vmatpush1.msra.mxu0 0.0
        %2433 = vmatprep.subr.mxu0 0.0
        %2434 = vmatpush1.msra.mxu0 0.0
        %2435 = vmatprep.subr.mxu0 0.0
        %2436 = vmatpush1.msra.mxu0 0.0
        %2437 = vmatprep.subr.mxu0 0.0
        %2438 = vmatpush1.msra.mxu0 0.0
        %2439 = vmatprep.subr.mxu0 0.0
        %2440 = vmatpush1.msra.mxu0 0.0
        %2441 = vmatprep.subr.mxu0 0.0
        %2442 = vmatpush1.msra.mxu0 0.0
        %2443 = vmatprep.subr.mxu0 0.0
        %2444 = vmatpush1.msra.mxu0 0.0
        %2445 = vmatprep.subr.mxu0 0.0
        %2446 = vmatpush1.msra.mxu0 0.0
        %2447 = vmatprep.subr.mxu0 0.0
        %2448 = vmatpush1.msra.mxu0 0.0
        %2449 = vmatprep.subr.mxu0 0.0
        %2450 = vmatpush1.msra.mxu0 0.0
        %2451 = vmatprep.subr.mxu0 0.0
        %2452 = vmatpush1.msra.mxu0 0.0
        %2453 = vmatprep.subr.mxu0 0.0
        %2454 = vmatpush1.msra.mxu0 0.0
        %2455 = vmatprep.mubr.f32.mxu0 0.0
        %2456 = vmatmul.mubr.f32.gmra.mrb[0].mxu0 %v2389
        %v2457 = vpop.f32.mrb[0].mxu0
        %v2458 = vadd.f32 0.0, %v2457
        %v2459 = vpop.f32.mrb[0].mxu0
        %2460 = vdwg.mxu0
        %v2461 = vrcp.pop %v2387
        %v2462 = vmul.f32 %v2458, %v2461
        %2463 = vrot.lane.b32.xlu0 %v2301, 96
        %v2464 = vpop.permute.xlu0 %2463
        %2465 = vrot.lane.b32.xlu0 %v2224, 96
        %v2466 = vpop.permute.xlu0 %2465
        %v2467 = vsel %vm997, %v2464, 0
        %v2469 = vsel %vm997, %v2466, 0
        %2471 = vmatprep.subr.mxu0 0.0
        %2472 = vmatpush1.xpose.msra.mxu0 %v2469
        %2473 = vmatprep.subr.mxu0 0.0
        %2474 = vmatpush1.xpose.msra.mxu0 0.0
        %2475 = vmatprep.subr.mxu0 0.0
        %2476 = vmatpush1.xpose.msra.mxu0 0.0
        %2477 = vmatprep.subr.mxu0 0.0
        %2478 = vmatpush1.xpose.msra.mxu0 0.0
        %2479 = vmatprep.subr.mxu0 0.0
        %2480 = vmatpush1.xpose.msra.mxu0 0.0
        %2481 = vmatprep.subr.mxu0 0.0
        %2482 = vmatpush1.xpose.msra.mxu0 0.0
        %2483 = vmatprep.subr.mxu0 0.0
        %2484 = vmatpush1.xpose.msra.mxu0 0.0
        %2485 = vmatprep.subr.mxu0 0.0
        %2486 = vmatpush1.xpose.msra.mxu0 0.0
        %2487 = vmatprep.subr.mxu0 0.0
        %2488 = vmatpush1.xpose.msra.mxu0 0.0
        %2489 = vmatprep.subr.mxu0 0.0
        %2490 = vmatpush1.xpose.msra.mxu0 0.0
        %2491 = vmatprep.subr.mxu0 0.0
        %2492 = vmatpush1.xpose.msra.mxu0 0.0
        %2493 = vmatprep.subr.mxu0 0.0
        %2494 = vmatpush1.xpose.msra.mxu0 0.0
        %2495 = vmatprep.subr.mxu0 0.0
        %2496 = vmatpush1.xpose.msra.mxu0 0.0
        %2497 = vmatprep.subr.mxu0 0.0
        %2498 = vmatpush1.xpose.msra.mxu0 0.0
        %2499 = vmatprep.subr.mxu0 0.0
        %2500 = vmatpush1.xpose.msra.mxu0 0.0
        %2501 = vmatprep.subr.mxu0 0.0
        %2502 = vmatpush1.xpose.msra.mxu0 0.0
        %2503 = vmatprep.subr.mxu0 0.0
        %2504 = vmatpush1.xpose.msra.mxu0 0.0
        %2505 = vmatprep.subr.mxu0 0.0
        %2506 = vmatpush1.xpose.msra.mxu0 0.0
        %2507 = vmatprep.subr.mxu0 0.0
        %2508 = vmatpush1.xpose.msra.mxu0 0.0
        %2509 = vmatprep.subr.mxu0 0.0
        %2510 = vmatpush1.xpose.msra.mxu0 0.0
        %2511 = vmatprep.subr.mxu0 0.0
        %2512 = vmatpush1.xpose.msra.mxu0 0.0
        %2513 = vmatprep.subr.mxu0 0.0
        %2514 = vmatpush1.xpose.msra.mxu0 0.0
        %2515 = vmatprep.subr.mxu0 0.0
        %2516 = vmatpush1.xpose.msra.mxu0 0.0
        %2517 = vmatprep.subr.mxu0 0.0
        %2518 = vmatpush1.xpose.msra.mxu0 0.0
        %2519 = vmatprep.subr.mxu0 0.0
        %2520 = vmatpush1.xpose.msra.mxu0 0.0
        %2521 = vmatprep.subr.mxu0 0.0
        %2522 = vmatpush1.xpose.msra.mxu0 0.0
        %2523 = vmatprep.subr.mxu0 0.0
        %2524 = vmatpush1.xpose.msra.mxu0 0.0
        %2525 = vmatprep.subr.mxu0 0.0
        %2526 = vmatpush1.xpose.msra.mxu0 0.0
        %2527 = vmatprep.subr.mxu0 0.0
        %2528 = vmatpush1.xpose.msra.mxu0 0.0
        %2529 = vmatprep.subr.mxu0 0.0
        %2530 = vmatpush1.xpose.msra.mxu0 0.0
        %2531 = vmatprep.subr.mxu0 0.0
        %2532 = vmatpush1.xpose.msra.mxu0 0.0
        %2533 = vmatprep.subr.mxu0 0.0
        %2534 = vmatpush1.xpose.msra.mxu0 0.0
        %2535 = vmatprep.mubr.f32.mxu0 0.0
        %2536 = vmatmul.mubr.f32.gmra.mrb[0].mxu0 %v2467
        %v2537 = vpop.f32.mrb[0].mxu0
        %v2538 = vadd.f32 0.0, %v2537
        %v2539 = vpop.f32.mrb[0].mxu0
        %2540 = vdwg.mxu0
        %v2541 = vsel %vm2378, %v2538, -inf
        %2542 = vmax.xlane.f32.xlu0 %v2541
        %v2543 = vpop.xlane.xlu0 %2542
        %v2544 = vsub.f32 %v2538, %v2543
        %v2545 = vmul.f32 %v2544, 1.442695
        %v2546 = vpow.pop %v2545
        %v2547 = vsel %vm2378, %v2546, 0.0
        %2548 = vadd.xlane.f32.xlu0 %v2547
        %v2549 = vpop.xlane.xlu0 %2548
        %2551 = vrot.lane.b32.xlu0 %v2298, 96
        %v2552 = vpop.permute.xlu0 %2551
        %v2555 = vsel %vm2378, %v2546, 0
        %2557 = vmatprep.subr.mxu0 0.0
        %2558 = vmatpush1.msra.mxu0 %v2552
        %2559 = vmatprep.subr.mxu0 0.0
        %2560 = vmatpush1.msra.mxu0 0.0
        %2561 = vmatprep.subr.mxu0 0.0
        %2562 = vmatpush1.msra.mxu0 0.0
        %2563 = vmatprep.subr.mxu0 0.0
        %2564 = vmatpush1.msra.mxu0 0.0
        %2565 = vmatprep.subr.mxu0 0.0
        %2566 = vmatpush1.msra.mxu0 0.0
        %2567 = vmatprep.subr.mxu0 0.0
        %2568 = vmatpush1.msra.mxu0 0.0
        %2569 = vmatprep.subr.mxu0 0.0
        %2570 = vmatpush1.msra.mxu0 0.0
        %2571 = vmatprep.subr.mxu0 0.0
        %2572 = vmatpush1.msra.mxu0 0.0
        %2573 = vmatprep.subr.mxu0 0.0
        %2574 = vmatpush1.msra.mxu0 0.0
        %2575 = vmatprep.subr.mxu0 0.0
        %2576 = vmatpush1.msra.mxu0 0.0
        %2577 = vmatprep.subr.mxu0 0.0
        %2578 = vmatpush1.msra.mxu0 0.0
        %2579 = vmatprep.subr.mxu0 0.0
        %2580 = vmatpush1.msra.mxu0 0.0
        %2581 = vmatprep.subr.mxu0 0.0
        %2582 = vmatpush1.msra.mxu0 0.0
        %2583 = vmatprep.subr.mxu0 0.0
        %2584 = vmatpush1.msra.mxu0 0.0
        %2585 = vmatprep.subr.mxu0 0.0
        %2586 = vmatpush1.msra.mxu0 0.0
        %2587 = vmatprep.subr.mxu0 0.0
        %2588 = vmatpush1.msra.mxu0 0.0
        %2589 = vmatprep.subr.mxu0 0.0
        %2590 = vmatpush1.msra.mxu0 0.0
        %2591 = vmatprep.subr.mxu0 0.0
        %2592 = vmatpush1.msra.mxu0 0.0
        %2593 = vmatprep.subr.mxu0 0.0
        %2594 = vmatpush1.msra.mxu0 0.0
        %2595 = vmatprep.subr.mxu0 0.0
        %2596 = vmatpush1.msra.mxu0 0.0
        %2597 = vmatprep.subr.mxu0 0.0
        %2598 = vmatpush1.msra.mxu0 0.0
        %2599 = vmatprep.subr.mxu0 0.0
        %2600 = vmatpush1.msra.mxu0 0.0
        %2601 = vmatprep.subr.mxu0 0.0
        %2602 = vmatpush1.msra.mxu0 0.0
        %2603 = vmatprep.subr.mxu0 0.0
        %2604 = vmatpush1.msra.mxu0 0.0
        %2605 = vmatprep.subr.mxu0 0.0
        %2606 = vmatpush1.msra.mxu0 0.0
        %2607 = vmatprep.subr.mxu0 0.0
        %2608 = vmatpush1.msra.mxu0 0.0
        %2609 = vmatprep.subr.mxu0 0.0
        %2610 = vmatpush1.msra.mxu0 0.0
        %2611 = vmatprep.subr.mxu0 0.0
        %2612 = vmatpush1.msra.mxu0 0.0
        %2613 = vmatprep.subr.mxu0 0.0
        %2614 = vmatpush1.msra.mxu0 0.0
        %2615 = vmatprep.subr.mxu0 0.0
        %2616 = vmatpush1.msra.mxu0 0.0
        %2617 = vmatprep.subr.mxu0 0.0
        %2618 = vmatpush1.msra.mxu0 0.0
        %2619 = vmatprep.subr.mxu0 0.0
        %2620 = vmatpush1.msra.mxu0 0.0
        %2621 = vmatprep.mubr.f32.mxu0 0.0
        %2622 = vmatmul.mubr.f32.gmra.mrb[0].mxu0 %v2555
        %v2623 = vpop.f32.mrb[0].mxu0
        %v2624 = vadd.f32 0.0, %v2623
        %v2625 = vpop.f32.mrb[0].mxu0
        %2626 = vdwg.mxu0
        %v2627 = vrcp.pop %v2549
        %v2628 = vmul.f32 %v2624, %v2627
        %v2630 = vsel %vm997, %v2628, 0
        %2632 = vmatprep.subr.mxu0 0.0
        %2633 = vmatpush1.msra.mxu0 %v2063
        %2634 = vmatprep.subr.mxu0 0.0
        %2635 = vmatpush1.msra.mxu0 %v2064
        %2636 = vmatprep.subr.mxu0 0.0
        %2637 = vmatpush1.msra.mxu0 %v2065
        %2638 = vmatprep.subr.mxu0 0.0
        %2639 = vmatpush1.msra.mxu0 %v2066
        %2640 = vmatprep.subr.mxu0 0.0
        %2641 = vmatpush1.msra.mxu0 0.0
        %2642 = vmatprep.subr.mxu0 0.0
        %2643 = vmatpush1.msra.mxu0 0.0
        %2644 = vmatprep.subr.mxu0 0.0
        %2645 = vmatpush1.msra.mxu0 0.0
        %2646 = vmatprep.subr.mxu0 0.0
        %2647 = vmatpush1.msra.mxu0 0.0
        %2648 = vmatprep.subr.mxu0 0.0
        %2649 = vmatpush1.msra.mxu0 0.0
        %2650 = vmatprep.subr.mxu0 0.0
        %2651 = vmatpush1.msra.mxu0 0.0
        %2652 = vmatprep.subr.mxu0 0.0
        %2653 = vmatpush1.msra.mxu0 0.0
        %2654 = vmatprep.subr.mxu0 0.0
        %2655 = vmatpush1.msra.mxu0 0.0
        %2656 = vmatprep.subr.mxu0 0.0
        %2657 = vmatpush1.msra.mxu0 0.0
        %2658 = vmatprep.subr.mxu0 0.0
        %2659 = vmatpush1.msra.mxu0 0.0
        %2660 = vmatprep.subr.mxu0 0.0
        %2661 = vmatpush1.msra.mxu0 0.0
        %2662 = vmatprep.subr.mxu0 0.0
        %2663 = vmatpush1.msra.mxu0 0.0
        %2664 = vmatprep.subr.mxu0 0.0
        %2665 = vmatpush1.msra.mxu0 0.0
        %2666 = vmatprep.subr.mxu0 0.0
        %2667 = vmatpush1.msra.mxu0 0.0
        %2668 = vmatprep.subr.mxu0 0.0
        %2669 = vmatpush1.msra.mxu0 0.0
        %2670 = vmatprep.subr.mxu0 0.0
        %2671 = vmatpush1.msra.mxu0 0.0
        %2672 = vmatprep.subr.mxu0 0.0
        %2673 = vmatpush1.msra.mxu0 0.0
        %2674 = vmatprep.subr.mxu0 0.0
        %2675 = vmatpush1.msra.mxu0 0.0
        %2676 = vmatprep.subr.mxu0 0.0
        %2677 = vmatpush1.msra.mxu0 0.0
        %2678 = vmatprep.subr.mxu0 0.0
        %2679 = vmatpush1.msra.mxu0 0.0
        %2680 = vmatprep.subr.mxu0 0.0
        %2681 = vmatpush1.msra.mxu0 0.0
        %2682 = vmatprep.subr.mxu0 0.0
        %2683 = vmatpush1.msra.mxu0 0.0
        %2684 = vmatprep.subr.mxu0 0.0
        %2685 = vmatpush1.msra.mxu0 0.0
        %2686 = vmatprep.subr.mxu0 0.0
        %2687 = vmatpush1.msra.mxu0 0.0
        %2688 = vmatprep.subr.mxu0 0.0
        %2689 = vmatpush1.msra.mxu0 0.0
        %2690 = vmatprep.subr.mxu0 0.0
        %2691 = vmatpush1.msra.mxu0 0.0
        %2692 = vmatprep.subr.mxu0 0.0
        %2693 = vmatpush1.msra.mxu0 0.0
        %2694 = vmatprep.subr.mxu0 0.0
        %2695 = vmatpush1.msra.mxu0 0.0
        %2696 = vmatprep.mubr.f32.mxu0 0.0
        %2697 = vmatmul.mubr.f32.gmra.mrb[0].mxu0 %v2630
        %v2698 = vpop.f32.mrb[0].mxu0
        %v2699 = vadd.f32 0.0, %v2698
        %v2700 = vpop.f32.mrb[0].mxu0
        %2701 = vdwg.mxu0
        %v2703 = vsel %vm997, %v2462, 0
        %2705 = vmatprep.subr.mxu0 0.0
        %2706 = vmatpush1.msra.mxu0 %v2059
        %2707 = vmatprep.subr.mxu0 0.0
        %2708 = vmatpush1.msra.mxu0 %v2060
        %2709 = vmatprep.subr.mxu0 0.0
        %2710 = vmatpush1.msra.mxu0 %v2061
        %2711 = vmatprep.subr.mxu0 0.0
        %2712 = vmatpush1.msra.mxu0 %v2062
        %2713 = vmatprep.subr.mxu0 0.0
        %2714 = vmatpush1.msra.mxu0 0.0
        %2715 = vmatprep.subr.mxu0 0.0
        %2716 = vmatpush1.msra.mxu0 0.0
        %2717 = vmatprep.subr.mxu0 0.0
        %2718 = vmatpush1.msra.mxu0 0.0
        %2719 = vmatprep.subr.mxu0 0.0
        %2720 = vmatpush1.msra.mxu0 0.0
        %2721 = vmatprep.subr.mxu0 0.0
        %2722 = vmatpush1.msra.mxu0 0.0
        %2723 = vmatprep.subr.mxu0 0.0
        %2724 = vmatpush1.msra.mxu0 0.0
        %2725 = vmatprep.subr.mxu0 0.0
        %2726 = vmatpush1.msra.mxu0 0.0
        %2727 = vmatprep.subr.mxu0 0.0
        %2728 = vmatpush1.msra.mxu0 0.0
        %2729 = vmatprep.subr.mxu0 0.0
        %2730 = vmatpush1.msra.mxu0 0.0
        %2731 = vmatprep.subr.mxu0 0.0
        %2732 = vmatpush1.msra.mxu0 0.0
        %2733 = vmatprep.subr.mxu0 0.0
        %2734 = vmatpush1.msra.mxu0 0.0
        %2735 = vmatprep.subr.mxu0 0.0
        %2736 = vmatpush1.msra.mxu0 0.0
        %2737 = vmatprep.subr.mxu0 0.0
        %2738 = vmatpush1.msra.mxu0 0.0
        %2739 = vmatprep.subr.mxu0 0.0
        %2740 = vmatpush1.msra.mxu0 0.0
        %2741 = vmatprep.subr.mxu0 0.0
        %2742 = vmatpush1.msra.mxu0 0.0
        %2743 = vmatprep.subr.mxu0 0.0
        %2744 = vmatpush1.msra.mxu0 0.0
        %2745 = vmatprep.subr.mxu0 0.0
        %2746 = vmatpush1.msra.mxu0 0.0
        %2747 = vmatprep.subr.mxu0 0.0
        %2748 = vmatpush1.msra.mxu0 0.0
        %2749 = vmatprep.subr.mxu0 0.0
        %2750 = vmatpush1.msra.mxu0 0.0
        %2751 = vmatprep.subr.mxu0 0.0
        %2752 = vmatpush1.msra.mxu0 0.0
        %2753 = vmatprep.subr.mxu0 0.0
        %2754 = vmatpush1.msra.mxu0 0.0
        %2755 = vmatprep.subr.mxu0 0.0
        %2756 = vmatpush1.msra.mxu0 0.0
        %2757 = vmatprep.subr.mxu0 0.0
        %2758 = vmatpush1.msra.mxu0 0.0
        %2759 = vmatprep.subr.mxu0 0.0
        %2760 = vmatpush1.msra.mxu0 0.0
        %2761 = vmatprep.subr.mxu0 0.0
        %2762 = vmatpush1.msra.mxu0 0.0
        %2763 = vmatprep.subr.mxu0 0.0
        %2764 = vmatpush1.msra.mxu0 0.0
        %2765 = vmatprep.subr.mxu0 0.0
        %2766 = vmatpush1.msra.mxu0 0.0
        %2767 = vmatprep.subr.mxu0 0.0
        %2768 = vmatpush1.msra.mxu0 0.0
        %2769 = vmatprep.mubr.f32.mxu0 0.0
        %2770 = vmatmul.mubr.f32.gmra.mrb[0].mxu0 %v2703
        %v2771 = vpop.f32.mrb[0].mxu0
        %v2772 = vadd.f32 %v2699, %v2771
        %v2773 = vpop.f32.mrb[0].mxu0
        %2774 = vdwg.mxu0
        %2775 = vrot.lane.b32.xlu0 %v2301, 64
        %v2776 = vpop.permute.xlu0 %2775
        %2777 = vrot.lane.b32.xlu0 %v2224, 64
        %v2778 = vpop.permute.xlu0 %2777
        %v2779 = vsel %vm997, %v2776, 0
        %v2781 = vsel %vm997, %v2778, 0
        %2783 = vmatprep.subr.mxu0 0.0
        %2784 = vmatpush1.xpose.msra.mxu0 %v2781
        %2785 = vmatprep.subr.mxu0 0.0
        %2786 = vmatpush1.xpose.msra.mxu0 0.0
        %2787 = vmatprep.subr.mxu0 0.0
        %2788 = vmatpush1.xpose.msra.mxu0 0.0
        %2789 = vmatprep.subr.mxu0 0.0
        %2790 = vmatpush1.xpose.msra.mxu0 0.0
        %2791 = vmatprep.subr.mxu0 0.0
        %2792 = vmatpush1.xpose.msra.mxu0 0.0
        %2793 = vmatprep.subr.mxu0 0.0
        %2794 = vmatpush1.xpose.msra.mxu0 0.0
        %2795 = vmatprep.subr.mxu0 0.0
        %2796 = vmatpush1.xpose.msra.mxu0 0.0
        %2797 = vmatprep.subr.mxu0 0.0
        %2798 = vmatpush1.xpose.msra.mxu0 0.0
        %2799 = vmatprep.subr.mxu0 0.0
        %2800 = vmatpush1.xpose.msra.mxu0 0.0
        %2801 = vmatprep.subr.mxu0 0.0
        %2802 = vmatpush1.xpose.msra.mxu0 0.0
        %2803 = vmatprep.subr.mxu0 0.0
        %2804 = vmatpush1.xpose.msra.mxu0 0.0
        %2805 = vmatprep.subr.mxu0 0.0
        %2806 = vmatpush1.xpose.msra.mxu0 0.0
        %2807 = vmatprep.subr.mxu0 0.0
        %2808 = vmatpush1.xpose.msra.mxu0 0.0
        %2809 = vmatprep.subr.mxu0 0.0
        %2810 = vmatpush1.xpose.msra.mxu0 0.0
        %2811 = vmatprep.subr.mxu0 0.0
        %2812 = vmatpush1.xpose.msra.mxu0 0.0
        %2813 = vmatprep.subr.mxu0 0.0
        %2814 = vmatpush1.xpose.msra.mxu0 0.0
        %2815 = vmatprep.subr.mxu0 0.0
        %2816 = vmatpush1.xpose.msra.mxu0 0.0
        %2817 = vmatprep.subr.mxu0 0.0
        %2818 = vmatpush1.xpose.msra.mxu0 0.0
        %2819 = vmatprep.subr.mxu0 0.0
        %2820 = vmatpush1.xpose.msra.mxu0 0.0
        %2821 = vmatprep.subr.mxu0 0.0
        %2822 = vmatpush1.xpose.msra.mxu0 0.0
        %2823 = vmatprep.subr.mxu0 0.0
        %2824 = vmatpush1.xpose.msra.mxu0 0.0
        %2825 = vmatprep.subr.mxu0 0.0
        %2826 = vmatpush1.xpose.msra.mxu0 0.0
        %2827 = vmatprep.subr.mxu0 0.0
        %2828 = vmatpush1.xpose.msra.mxu0 0.0
        %2829 = vmatprep.subr.mxu0 0.0
        %2830 = vmatpush1.xpose.msra.mxu0 0.0
        %2831 = vmatprep.subr.mxu0 0.0
        %2832 = vmatpush1.xpose.msra.mxu0 0.0
        %2833 = vmatprep.subr.mxu0 0.0
        %2834 = vmatpush1.xpose.msra.mxu0 0.0
        %2835 = vmatprep.subr.mxu0 0.0
        %2836 = vmatpush1.xpose.msra.mxu0 0.0
        %2837 = vmatprep.subr.mxu0 0.0
        %2838 = vmatpush1.xpose.msra.mxu0 0.0
        %2839 = vmatprep.subr.mxu0 0.0
        %2840 = vmatpush1.xpose.msra.mxu0 0.0
        %2841 = vmatprep.subr.mxu0 0.0
        %2842 = vmatpush1.xpose.msra.mxu0 0.0
        %2843 = vmatprep.subr.mxu0 0.0
        %2844 = vmatpush1.xpose.msra.mxu0 0.0
        %2845 = vmatprep.subr.mxu0 0.0
        %2846 = vmatpush1.xpose.msra.mxu0 0.0
        %2847 = vmatprep.mubr.f32.mxu0 0.0
        %2848 = vmatmul.mubr.f32.gmra.mrb[0].mxu0 %v2779
        %v2849 = vpop.f32.mrb[0].mxu0
        %v2850 = vadd.f32 0.0, %v2849
        %v2851 = vpop.f32.mrb[0].mxu0
        %2852 = vdwg.mxu0
        %v2853 = vsel %vm2378, %v2850, -inf
        %2854 = vmax.xlane.f32.xlu0 %v2853
        %v2855 = vpop.xlane.xlu0 %2854
        %v2856 = vsub.f32 %v2850, %v2855
        %v2857 = vmul.f32 %v2856, 1.442695
        %v2858 = vpow.pop %v2857
        %v2859 = vsel %vm2378, %v2858, 0.0
        %2860 = vadd.xlane.f32.xlu0 %v2859
        %v2861 = vpop.xlane.xlu0 %2860
        %2862 = vrot.lane.b32.xlu0 %v2298, 64
        %v2863 = vpop.permute.xlu0 %2862
        %v2866 = vsel %vm2378, %v2858, 0
        %2868 = vmatprep.subr.mxu0 0.0
        %2869 = vmatpush1.msra.mxu0 %v2863
        %2870 = vmatprep.subr.mxu0 0.0
        %2871 = vmatpush1.msra.mxu0 0.0
        %2872 = vmatprep.subr.mxu0 0.0
        %2873 = vmatpush1.msra.mxu0 0.0
        %2874 = vmatprep.subr.mxu0 0.0
        %2875 = vmatpush1.msra.mxu0 0.0
        %2876 = vmatprep.subr.mxu0 0.0
        %2877 = vmatpush1.msra.mxu0 0.0
        %2878 = vmatprep.subr.mxu0 0.0
        %2879 = vmatpush1.msra.mxu0 0.0
        %2880 = vmatprep.subr.mxu0 0.0
        %2881 = vmatpush1.msra.mxu0 0.0
        %2882 = vmatprep.subr.mxu0 0.0
        %2883 = vmatpush1.msra.mxu0 0.0
        %2884 = vmatprep.subr.mxu0 0.0
        %2885 = vmatpush1.msra.mxu0 0.0
        %2886 = vmatprep.subr.mxu0 0.0
        %2887 = vmatpush1.msra.mxu0 0.0
        %2888 = vmatprep.subr.mxu0 0.0
        %2889 = vmatpush1.msra.mxu0 0.0
        %2890 = vmatprep.subr.mxu0 0.0
        %2891 = vmatpush1.msra.mxu0 0.0
        %2892 = vmatprep.subr.mxu0 0.0
        %2893 = vmatpush1.msra.mxu0 0.0
        %2894 = vmatprep.subr.mxu0 0.0
        %2895 = vmatpush1.msra.mxu0 0.0
        %2896 = vmatprep.subr.mxu0 0.0
        %2897 = vmatpush1.msra.mxu0 0.0
        %2898 = vmatprep.subr.mxu0 0.0
        %2899 = vmatpush1.msra.mxu0 0.0
        %2900 = vmatprep.subr.mxu0 0.0
        %2901 = vmatpush1.msra.mxu0 0.0
        %2902 = vmatprep.subr.mxu0 0.0
        %2903 = vmatpush1.msra.mxu0 0.0
        %2904 = vmatprep.subr.mxu0 0.0
        %2905 = vmatpush1.msra.mxu0 0.0
        %2906 = vmatprep.subr.mxu0 0.0
        %2907 = vmatpush1.msra.mxu0 0.0
        %2908 = vmatprep.subr.mxu0 0.0
        %2909 = vmatpush1.msra.mxu0 0.0
        %2910 = vmatprep.subr.mxu0 0.0
        %2911 = vmatpush1.msra.mxu0 0.0
        %2912 = vmatprep.subr.mxu0 0.0
        %2913 = vmatpush1.msra.mxu0 0.0
        %2914 = vmatprep.subr.mxu0 0.0
        %2915 = vmatpush1.msra.mxu0 0.0
        %2916 = vmatprep.subr.mxu0 0.0
        %2917 = vmatpush1.msra.mxu0 0.0
        %2918 = vmatprep.subr.mxu0 0.0
        %2919 = vmatpush1.msra.mxu0 0.0
        %2920 = vmatprep.subr.mxu0 0.0
        %2921 = vmatpush1.msra.mxu0 0.0
        %2922 = vmatprep.subr.mxu0 0.0
        %2923 = vmatpush1.msra.mxu0 0.0
        %2924 = vmatprep.subr.mxu0 0.0
        %2925 = vmatpush1.msra.mxu0 0.0
        %2926 = vmatprep.subr.mxu0 0.0
        %2927 = vmatpush1.msra.mxu0 0.0
        %2928 = vmatprep.subr.mxu0 0.0
        %2929 = vmatpush1.msra.mxu0 0.0
        %2930 = vmatprep.subr.mxu0 0.0
        %2931 = vmatpush1.msra.mxu0 0.0
        %2932 = vmatprep.mubr.f32.mxu0 0.0
        %2933 = vmatmul.mubr.f32.gmra.mrb[0].mxu0 %v2866
        %v2934 = vpop.f32.mrb[0].mxu0
        %v2935 = vadd.f32 0.0, %v2934
        %v2936 = vpop.f32.mrb[0].mxu0
        %2937 = vdwg.mxu0
        %v2938 = vrcp.pop %v2861
        %v2939 = vmul.f32 %v2935, %v2938
        %v2941 = vsel %vm997, %v2939, 0
        %2943 = vmatprep.subr.mxu0 0.0
        %2944 = vmatpush1.msra.mxu0 %v2067
        %2945 = vmatprep.subr.mxu0 0.0
        %2946 = vmatpush1.msra.mxu0 %v2068
        %2947 = vmatprep.subr.mxu0 0.0
        %2948 = vmatpush1.msra.mxu0 %v2069
        %2949 = vmatprep.subr.mxu0 0.0
        %2950 = vmatpush1.msra.mxu0 %v2070
        %2951 = vmatprep.subr.mxu0 0.0
        %2952 = vmatpush1.msra.mxu0 0.0
        %2953 = vmatprep.subr.mxu0 0.0
        %2954 = vmatpush1.msra.mxu0 0.0
        %2955 = vmatprep.subr.mxu0 0.0
        %2956 = vmatpush1.msra.mxu0 0.0
        %2957 = vmatprep.subr.mxu0 0.0
        %2958 = vmatpush1.msra.mxu0 0.0
        %2959 = vmatprep.subr.mxu0 0.0
        %2960 = vmatpush1.msra.mxu0 0.0
        %2961 = vmatprep.subr.mxu0 0.0
        %2962 = vmatpush1.msra.mxu0 0.0
        %2963 = vmatprep.subr.mxu0 0.0
        %2964 = vmatpush1.msra.mxu0 0.0
        %2965 = vmatprep.subr.mxu0 0.0
        %2966 = vmatpush1.msra.mxu0 0.0
        %2967 = vmatprep.subr.mxu0 0.0
        %2968 = vmatpush1.msra.mxu0 0.0
        %2969 = vmatprep.subr.mxu0 0.0
        %2970 = vmatpush1.msra.mxu0 0.0
        %2971 = vmatprep.subr.mxu0 0.0
        %2972 = vmatpush1.msra.mxu0 0.0
        %2973 = vmatprep.subr.mxu0 0.0
        %2974 = vmatpush1.msra.mxu0 0.0
        %2975 = vmatprep.subr.mxu0 0.0
        %2976 = vmatpush1.msra.mxu0 0.0
        %2977 = vmatprep.subr.mxu0 0.0
        %2978 = vmatpush1.msra.mxu0 0.0
        %2979 = vmatprep.subr.mxu0 0.0
        %2980 = vmatpush1.msra.mxu0 0.0
        %2981 = vmatprep.subr.mxu0 0.0
        %2982 = vmatpush1.msra.mxu0 0.0
        %2983 = vmatprep.subr.mxu0 0.0
        %2984 = vmatpush1.msra.mxu0 0.0
        %2985 = vmatprep.subr.mxu0 0.0
        %2986 = vmatpush1.msra.mxu0 0.0
        %2987 = vmatprep.subr.mxu0 0.0
        %2988 = vmatpush1.msra.mxu0 0.0
        %2989 = vmatprep.subr.mxu0 0.0
        %2990 = vmatpush1.msra.mxu0 0.0
        %2991 = vmatprep.subr.mxu0 0.0
        %2992 = vmatpush1.msra.mxu0 0.0
        %2993 = vmatprep.subr.mxu0 0.0
        %2994 = vmatpush1.msra.mxu0 0.0
        %2995 = vmatprep.subr.mxu0 0.0
        %2996 = vmatpush1.msra.mxu0 0.0
        %2997 = vmatprep.subr.mxu0 0.0
        %2998 = vmatpush1.msra.mxu0 0.0
        %2999 = vmatprep.subr.mxu0 0.0
        %3000 = vmatpush1.msra.mxu0 0.0
        %3001 = vmatprep.subr.mxu0 0.0
        %3002 = vmatpush1.msra.mxu0 0.0
        %3003 = vmatprep.subr.mxu0 0.0
        %3004 = vmatpush1.msra.mxu0 0.0
        %3005 = vmatprep.subr.mxu0 0.0
        %3006 = vmatpush1.msra.mxu0 0.0
        %3007 = vmatprep.mubr.f32.mxu0 0.0
        %3008 = vmatmul.mubr.f32.gmra.mrb[0].mxu0 %v2941
        %v3009 = vpop.f32.mrb[0].mxu0
        %v3010 = vadd.f32 0.0, %v3009
        %v3011 = vpop.f32.mrb[0].mxu0
        %3012 = vdwg.mxu0
        %v3013 = vadd.f32 %v2772, %v3010
        %3014 = vrot.lane.b32.xlu0 %v2301, 32
        %v3015 = vpop.permute.xlu0 %3014
        %3016 = vrot.lane.b32.xlu0 %v2224, 32
        %v3017 = vpop.permute.xlu0 %3016
        %v3018 = vsel %vm997, %v3015, 0
        %v3020 = vsel %vm997, %v3017, 0
        %3022 = vmatprep.subr.mxu0 0.0
        %3023 = vmatpush1.xpose.msra.mxu0 %v3020
        %3024 = vmatprep.subr.mxu0 0.0
        %3025 = vmatpush1.xpose.msra.mxu0 0.0
        %3026 = vmatprep.subr.mxu0 0.0
        %3027 = vmatpush1.xpose.msra.mxu0 0.0
        %3028 = vmatprep.subr.mxu0 0.0
        %3029 = vmatpush1.xpose.msra.mxu0 0.0
        %3030 = vmatprep.subr.mxu0 0.0
        %3031 = vmatpush1.xpose.msra.mxu0 0.0
        %3032 = vmatprep.subr.mxu0 0.0
        %3033 = vmatpush1.xpose.msra.mxu0 0.0
        %3034 = vmatprep.subr.mxu0 0.0
        %3035 = vmatpush1.xpose.msra.mxu0 0.0
        %3036 = vmatprep.subr.mxu0 0.0
        %3037 = vmatpush1.xpose.msra.mxu0 0.0
        %3038 = vmatprep.subr.mxu0 0.0
        %3039 = vmatpush1.xpose.msra.mxu0 0.0
        %3040 = vmatprep.subr.mxu0 0.0
        %3041 = vmatpush1.xpose.msra.mxu0 0.0
        %3042 = vmatprep.subr.mxu0 0.0
        %3043 = vmatpush1.xpose.msra.mxu0 0.0
        %3044 = vmatprep.subr.mxu0 0.0
        %3045 = vmatpush1.xpose.msra.mxu0 0.0
        %3046 = vmatprep.subr.mxu0 0.0
        %3047 = vmatpush1.xpose.msra.mxu0 0.0
        %3048 = vmatprep.subr.mxu0 0.0
        %3049 = vmatpush1.xpose.msra.mxu0 0.0
        %3050 = vmatprep.subr.mxu0 0.0
        %3051 = vmatpush1.xpose.msra.mxu0 0.0
        %3052 = vmatprep.subr.mxu0 0.0
        %3053 = vmatpush1.xpose.msra.mxu0 0.0
        %3054 = vmatprep.subr.mxu0 0.0
        %3055 = vmatpush1.xpose.msra.mxu0 0.0
        %3056 = vmatprep.subr.mxu0 0.0
        %3057 = vmatpush1.xpose.msra.mxu0 0.0
        %3058 = vmatprep.subr.mxu0 0.0
        %3059 = vmatpush1.xpose.msra.mxu0 0.0
        %3060 = vmatprep.subr.mxu0 0.0
        %3061 = vmatpush1.xpose.msra.mxu0 0.0
        %3062 = vmatprep.subr.mxu0 0.0
        %3063 = vmatpush1.xpose.msra.mxu0 0.0
        %3064 = vmatprep.subr.mxu0 0.0
        %3065 = vmatpush1.xpose.msra.mxu0 0.0
        %3066 = vmatprep.subr.mxu0 0.0
        %3067 = vmatpush1.xpose.msra.mxu0 0.0
        %3068 = vmatprep.subr.mxu0 0.0
        %3069 = vmatpush1.xpose.msra.mxu0 0.0
        %3070 = vmatprep.subr.mxu0 0.0
        %3071 = vmatpush1.xpose.msra.mxu0 0.0
        %3072 = vmatprep.subr.mxu0 0.0
        %3073 = vmatpush1.xpose.msra.mxu0 0.0
        %3074 = vmatprep.subr.mxu0 0.0
        %3075 = vmatpush1.xpose.msra.mxu0 0.0
        %3076 = vmatprep.subr.mxu0 0.0
        %3077 = vmatpush1.xpose.msra.mxu0 0.0
        %3078 = vmatprep.subr.mxu0 0.0
        %3079 = vmatpush1.xpose.msra.mxu0 0.0
        %3080 = vmatprep.subr.mxu0 0.0
        %3081 = vmatpush1.xpose.msra.mxu0 0.0
        %3082 = vmatprep.subr.mxu0 0.0
        %3083 = vmatpush1.xpose.msra.mxu0 0.0
        %3084 = vmatprep.subr.mxu0 0.0
        %3085 = vmatpush1.xpose.msra.mxu0 0.0
        %3086 = vmatprep.mubr.f32.mxu0 0.0
        %3087 = vmatmul.mubr.f32.gmra.mrb[0].mxu0 %v3018
        %v3088 = vpop.f32.mrb[0].mxu0
        %v3089 = vadd.f32 0.0, %v3088
        %v3090 = vpop.f32.mrb[0].mxu0
        %3091 = vdwg.mxu0
        %v3092 = vsel %vm2378, %v3089, -inf
        %3093 = vmax.xlane.f32.xlu0 %v3092
        %v3094 = vpop.xlane.xlu0 %3093
        %v3095 = vsub.f32 %v3089, %v3094
        %v3096 = vmul.f32 %v3095, 1.442695
        %v3097 = vpow.pop %v3096
        %v3098 = vsel %vm2378, %v3097, 0.0
        %3099 = vadd.xlane.f32.xlu0 %v3098
        %v3100 = vpop.xlane.xlu0 %3099
        %3101 = vrot.lane.b32.xlu0 %v2298, 32
        %v3102 = vpop.permute.xlu0 %3101
        %v3105 = vsel %vm2378, %v3097, 0
        %3107 = vmatprep.subr.mxu0 0.0
        %3108 = vmatpush1.msra.mxu0 %v3102
        %3109 = vmatprep.subr.mxu0 0.0
        %3110 = vmatpush1.msra.mxu0 0.0
        %3111 = vmatprep.subr.mxu0 0.0
        %3112 = vmatpush1.msra.mxu0 0.0
        %3113 = vmatprep.subr.mxu0 0.0
        %3114 = vmatpush1.msra.mxu0 0.0
        %3115 = vmatprep.subr.mxu0 0.0
        %3116 = vmatpush1.msra.mxu0 0.0
        %3117 = vmatprep.subr.mxu0 0.0
        %3118 = vmatpush1.msra.mxu0 0.0
        %3119 = vmatprep.subr.mxu0 0.0
        %3120 = vmatpush1.msra.mxu0 0.0
        %3121 = vmatprep.subr.mxu0 0.0
        %3122 = vmatpush1.msra.mxu0 0.0
        %3123 = vmatprep.subr.mxu0 0.0
        %3124 = vmatpush1.msra.mxu0 0.0
        %3125 = vmatprep.subr.mxu0 0.0
        %3126 = vmatpush1.msra.mxu0 0.0
        %3127 = vmatprep.subr.mxu0 0.0
        %3128 = vmatpush1.msra.mxu0 0.0
        %3129 = vmatprep.subr.mxu0 0.0
        %3130 = vmatpush1.msra.mxu0 0.0
        %3131 = vmatprep.subr.mxu0 0.0
        %3132 = vmatpush1.msra.mxu0 0.0
        %3133 = vmatprep.subr.mxu0 0.0
        %3134 = vmatpush1.msra.mxu0 0.0
        %3135 = vmatprep.subr.mxu0 0.0
        %3136 = vmatpush1.msra.mxu0 0.0
        %3137 = vmatprep.subr.mxu0 0.0
        %3138 = vmatpush1.msra.mxu0 0.0
        %3139 = vmatprep.subr.mxu0 0.0
        %3140 = vmatpush1.msra.mxu0 0.0
        %3141 = vmatprep.subr.mxu0 0.0
        %3142 = vmatpush1.msra.mxu0 0.0
        %3143 = vmatprep.subr.mxu0 0.0
        %3144 = vmatpush1.msra.mxu0 0.0
        %3145 = vmatprep.subr.mxu0 0.0
        %3146 = vmatpush1.msra.mxu0 0.0
        %3147 = vmatprep.subr.mxu0 0.0
        %3148 = vmatpush1.msra.mxu0 0.0
        %3149 = vmatprep.subr.mxu0 0.0
        %3150 = vmatpush1.msra.mxu0 0.0
        %3151 = vmatprep.subr.mxu0 0.0
        %3152 = vmatpush1.msra.mxu0 0.0
        %3153 = vmatprep.subr.mxu0 0.0
        %3154 = vmatpush1.msra.mxu0 0.0
        %3155 = vmatprep.subr.mxu0 0.0
        %3156 = vmatpush1.msra.mxu0 0.0
        %3157 = vmatprep.subr.mxu0 0.0
        %3158 = vmatpush1.msra.mxu0 0.0
        %3159 = vmatprep.subr.mxu0 0.0
        %3160 = vmatpush1.msra.mxu0 0.0
        %3161 = vmatprep.subr.mxu0 0.0
        %3162 = vmatpush1.msra.mxu0 0.0
        %3163 = vmatprep.subr.mxu0 0.0
        %3164 = vmatpush1.msra.mxu0 0.0
        %3165 = vmatprep.subr.mxu0 0.0
        %3166 = vmatpush1.msra.mxu0 0.0
        %3167 = vmatprep.subr.mxu0 0.0
        %3168 = vmatpush1.msra.mxu0 0.0
        %3169 = vmatprep.subr.mxu0 0.0
        %3170 = vmatpush1.msra.mxu0 0.0
        %3171 = vmatprep.mubr.f32.mxu0 0.0
        %3172 = vmatmul.mubr.f32.gmra.mrb[0].mxu0 %v3105
        %v3173 = vpop.f32.mrb[0].mxu0
        %v3174 = vadd.f32 0.0, %v3173
        %v3175 = vpop.f32.mrb[0].mxu0
        %3176 = vdwg.mxu0
        %v3177 = vrcp.pop %v3100
        %v3178 = vmul.f32 %v3174, %v3177
        %v3180 = vsel %vm997, %v3178, 0
        %3182 = vmatprep.subr.mxu0 0.0
        %3183 = vmatpush1.msra.mxu0 %v2071
        %3184 = vmatprep.subr.mxu0 0.0
        %3185 = vmatpush1.msra.mxu0 %v2072
        %3186 = vmatprep.subr.mxu0 0.0
        %3187 = vmatpush1.msra.mxu0 %v2073
        %3188 = vmatprep.subr.mxu0 0.0
        %3189 = vmatpush1.msra.mxu0 %v2074
        %3190 = vmatprep.subr.mxu0 0.0
        %3191 = vmatpush1.msra.mxu0 0.0
        %3192 = vmatprep.subr.mxu0 0.0
        %3193 = vmatpush1.msra.mxu0 0.0
        %3194 = vmatprep.subr.mxu0 0.0
        %3195 = vmatpush1.msra.mxu0 0.0
        %3196 = vmatprep.subr.mxu0 0.0
        %3197 = vmatpush1.msra.mxu0 0.0
        %3198 = vmatprep.subr.mxu0 0.0
        %3199 = vmatpush1.msra.mxu0 0.0
        %3200 = vmatprep.subr.mxu0 0.0
        %3201 = vmatpush1.msra.mxu0 0.0
        %3202 = vmatprep.subr.mxu0 0.0
        %3203 = vmatpush1.msra.mxu0 0.0
        %3204 = vmatprep.subr.mxu0 0.0
        %3205 = vmatpush1.msra.mxu0 0.0
        %3206 = vmatprep.subr.mxu0 0.0
        %3207 = vmatpush1.msra.mxu0 0.0
        %3208 = vmatprep.subr.mxu0 0.0
        %3209 = vmatpush1.msra.mxu0 0.0
        %3210 = vmatprep.subr.mxu0 0.0
        %3211 = vmatpush1.msra.mxu0 0.0
        %3212 = vmatprep.subr.mxu0 0.0
        %3213 = vmatpush1.msra.mxu0 0.0
        %3214 = vmatprep.subr.mxu0 0.0
        %3215 = vmatpush1.msra.mxu0 0.0
        %3216 = vmatprep.subr.mxu0 0.0
        %3217 = vmatpush1.msra.mxu0 0.0
        %3218 = vmatprep.subr.mxu0 0.0
        %3219 = vmatpush1.msra.mxu0 0.0
        %3220 = vmatprep.subr.mxu0 0.0
        %3221 = vmatpush1.msra.mxu0 0.0
        %3222 = vmatprep.subr.mxu0 0.0
        %3223 = vmatpush1.msra.mxu0 0.0
        %3224 = vmatprep.subr.mxu0 0.0
        %3225 = vmatpush1.msra.mxu0 0.0
        %3226 = vmatprep.subr.mxu0 0.0
        %3227 = vmatpush1.msra.mxu0 0.0
        %3228 = vmatprep.subr.mxu0 0.0
        %3229 = vmatpush1.msra.mxu0 0.0
        %3230 = vmatprep.subr.mxu0 0.0
        %3231 = vmatpush1.msra.mxu0 0.0
        %3232 = vmatprep.subr.mxu0 0.0
        %3233 = vmatpush1.msra.mxu0 0.0
        %3234 = vmatprep.subr.mxu0 0.0
        %3235 = vmatpush1.msra.mxu0 0.0
        %3236 = vmatprep.subr.mxu0 0.0
        %3237 = vmatpush1.msra.mxu0 0.0
        %3238 = vmatprep.subr.mxu0 0.0
        %3239 = vmatpush1.msra.mxu0 0.0
        %3240 = vmatprep.subr.mxu0 0.0
        %3241 = vmatpush1.msra.mxu0 0.0
        %3242 = vmatprep.subr.mxu0 0.0
        %3243 = vmatpush1.msra.mxu0 0.0
        %3244 = vmatprep.subr.mxu0 0.0
        %3245 = vmatpush1.msra.mxu0 0.0
        %3246 = vmatprep.mubr.f32.mxu0 0.0
        %3247 = vmatmul.mubr.f32.gmra.mrb[0].mxu0 %v3180
        %v3248 = vpop.f32.mrb[0].mxu0
        %v3249 = vadd.f32 0.0, %v3248
        %v3250 = vpop.f32.mrb[0].mxu0
        %3251 = vdwg.mxu0
        %v3252 = vadd.f32 %v3013, %v3249
        %v3253 = vlaneseq
        %v3254 = vshrl.u32 %v3253, 7
        %v3255 = vsub.s32 0, %v3254
        %v3256 = vrot.slane %v2078, %v3255
        %v3257 = vadd.f32 %v3252, %v3256
        %v3258 = vadd.f32 %v2007, %v3257
        %v3259 = vld [vmem:[#allocation20 + $0x1] sm:$0x1]
        %v3260 = vld [vmem:[#allocation22 + $0x1] sm:$0x1]
        %3261 = vadd.xlane.f32.xlu0 %v3258
        %v3262 = vpop.xlane.xlu0 %3261
        %v3263 = vmul.f32 %v3262, %v1988
        %v3264 = vsub.f32 %v3258, %v3263
        %v3265 = vmul.f32 %v3264, %v3264
        %3266 = vadd.xlane.f32.xlu0 %v3265
        %v3267 = vpop.xlane.xlu0 %3266
        %v3268 = vmul.f32 %v3267, %v1988
        %v3269 = vadd.f32 %v3268, 1e-05
        %v3270 = vrsqrt.pop %v3269
        %v3271 = vmul.f32 %v3264, %v3270
        %v3272 = vlaneseq
        %v3273 = vshrl.u32 %v3272, 7
        %v3274 = vsub.s32 0, %v3273
        %v3275 = vrot.slane %v3259, %v3274
        %v3276 = vmul.f32 %v3271, %v3275
        %v3277 = vlaneseq
        %v3278 = vshrl.u32 %v3277, 7
        %v3279 = vsub.s32 0, %v3278
        %v3280 = vrot.slane %v3260, %v3279
        %v3281 = vadd.f32 %v3276, %v3280
        %v3282 = vld [vmem:[#allocation14] sm:$0xff]
        %v3283 = vld [vmem:[#allocation14 + $0x8] sm:$0xff]
        %v3284 = vld [vmem:[#allocation14 + $0x10] sm:$0xff]
        %v3285 = vld [vmem:[#allocation14 + $0x18] sm:$0xff]
        %v3286 = vld [vmem:[#allocation14 + $0x20] sm:$0xff]
        %v3287 = vld [vmem:[#allocation14 + $0x28] sm:$0xff]
        %v3288 = vld [vmem:[#allocation14 + $0x30] sm:$0xff]
        %v3289 = vld [vmem:[#allocation14 + $0x38] sm:$0xff]
        %v3290 = vld [vmem:[#allocation14 + $0x40] sm:$0xff]
        %v3291 = vld [vmem:[#allocation14 + $0x48] sm:$0xff]
        %v3292 = vld [vmem:[#allocation14 + $0x50] sm:$0xff]
        %v3293 = vld [vmem:[#allocation14 + $0x58] sm:$0xff]
        %v3294 = vld [vmem:[#allocation14 + $0x60] sm:$0xff]
        %v3295 = vld [vmem:[#allocation14 + $0x68] sm:$0xff]
        %v3296 = vld [vmem:[#allocation14 + $0x70] sm:$0xff]
        %v3297 = vld [vmem:[#allocation14 + $0x78] sm:$0xff]
        %v3298 = vld [vmem:[#allocation14 + $0x80] sm:$0xff]
        %v3299 = vld [vmem:[#allocation14 + $0x88] sm:$0xff]
        %v3300 = vld [vmem:[#allocation14 + $0x90] sm:$0xff]
        %v3301 = vld [vmem:[#allocation14 + $0x98] sm:$0xff]
        %v3302 = vld [vmem:[#allocation14 + $0xa0] sm:$0xff]
        %v3303 = vld [vmem:[#allocation14 + $0xa8] sm:$0xff]
        %v3304 = vld [vmem:[#allocation14 + $0xb0] sm:$0xff]
        %v3305 = vld [vmem:[#allocation14 + $0xb8] sm:$0xff]
        %v3306 = vld [vmem:[#allocation14 + $0xc0] sm:$0xff]
        %v3307 = vld [vmem:[#allocation14 + $0xc8] sm:$0xff]
        %v3308 = vld [vmem:[#allocation14 + $0xd0] sm:$0xff]
        %v3309 = vld [vmem:[#allocation14 + $0xd8] sm:$0xff]
        %v3310 = vld [vmem:[#allocation14 + $0xe0] sm:$0xff]
        %v3311 = vld [vmem:[#allocation14 + $0xe8] sm:$0xff]
        %v3312 = vld [vmem:[#allocation14 + $0xf0] sm:$0xff]
        %v3313 = vld [vmem:[#allocation14 + $0xf8] sm:$0xff]
        %v3314 = vld [vmem:[#allocation16] sm:$0x3]
        %v3316 = vlaneseq
        %v3317 = vshrl.u32 %v3316, 7
        %v3318 = vsub.s32 0, %v3317
        %v3319 = vrot.slane %v3314, %v3318
        %v3320 = vlaneseq
        %v3321 = vshrl.u32 %v3320, 7
        %v3322 = vsub.s32 1, %v3321
        %v3323 = vrot.slane %v3314, %v3322
        %3326 = vmatprep.subr.mxu0 %v3283
        %3327 = vmatpush1.msra.mxu0 %v3282
        %3328 = vmatprep.subr.mxu0 %v3285
        %3329 = vmatpush1.msra.mxu0 %v3284
        %3330 = vmatprep.subr.mxu0 %v3287
        %3331 = vmatpush1.msra.mxu0 %v3286
        %3332 = vmatprep.subr.mxu0 %v3289
        %3333 = vmatpush1.msra.mxu0 %v3288
        %3334 = vmatprep.subr.mxu0 %v3291
        %3335 = vmatpush1.msra.mxu0 %v3290
        %3336 = vmatprep.subr.mxu0 %v3293
        %3337 = vmatpush1.msra.mxu0 %v3292
        %3338 = vmatprep.subr.mxu0 %v3295
        %3339 = vmatpush1.msra.mxu0 %v3294
        %3340 = vmatprep.subr.mxu0 %v3297
        %3341 = vmatpush1.msra.mxu0 %v3296
        %3342 = vmatprep.subr.mxu0 %v3299
        %3343 = vmatpush1.msra.mxu0 %v3298
        %3344 = vmatprep.subr.mxu0 %v3301
        %3345 = vmatpush1.msra.mxu0 %v3300
        %3346 = vmatprep.subr.mxu0 %v3303
        %3347 = vmatpush1.msra.mxu0 %v3302
        %3348 = vmatprep.subr.mxu0 %v3305
        %3349 = vmatpush1.msra.mxu0 %v3304
        %3350 = vmatprep.subr.mxu0 %v3307
        %3351 = vmatpush1.msra.mxu0 %v3306
        %3352 = vmatprep.subr.mxu0 %v3309
        %3353 = vmatpush1.msra.mxu0 %v3308
        %3354 = vmatprep.subr.mxu0 %v3311
        %3355 = vmatpush1.msra.mxu0 %v3310
        %3356 = vmatprep.subr.mxu0 %v3313
        %3357 = vmatpush1.msra.mxu0 %v3312
        %3358 = vmatprep.subr.mxu0 0.0
        %3359 = vmatpush1.msra.mxu0 0.0
        %3360 = vmatprep.subr.mxu0 0.0
        %3361 = vmatpush1.msra.mxu0 0.0
        %3362 = vmatprep.subr.mxu0 0.0
        %3363 = vmatpush1.msra.mxu0 0.0
        %3364 = vmatprep.subr.mxu0 0.0
        %3365 = vmatpush1.msra.mxu0 0.0
        %3366 = vmatprep.subr.mxu0 0.0
        %3367 = vmatpush1.msra.mxu0 0.0
        %3368 = vmatprep.subr.mxu0 0.0
        %3369 = vmatpush1.msra.mxu0 0.0
        %3370 = vmatprep.subr.mxu0 0.0
        %3371 = vmatpush1.msra.mxu0 0.0
        %3372 = vmatprep.subr.mxu0 0.0
        %3373 = vmatpush1.msra.mxu0 0.0
        %3374 = vmatprep.subr.mxu0 0.0
        %3375 = vmatpush1.msra.mxu0 0.0
        %3376 = vmatprep.subr.mxu0 0.0
        %3377 = vmatpush1.msra.mxu0 0.0
        %3378 = vmatprep.subr.mxu0 0.0
        %3379 = vmatpush1.msra.mxu0 0.0
        %3380 = vmatprep.subr.mxu0 0.0
        %3381 = vmatpush1.msra.mxu0 0.0
        %3382 = vmatprep.subr.mxu0 0.0
        %3383 = vmatpush1.msra.mxu0 0.0
        %3384 = vmatprep.subr.mxu0 0.0
        %3385 = vmatpush1.msra.mxu0 0.0
        %3386 = vmatprep.subr.mxu0 0.0
        %3387 = vmatpush1.msra.mxu0 0.0
        %3388 = vmatprep.subr.mxu0 0.0
        %3389 = vmatpush1.msra.mxu0 0.0
        %3390 = vmatprep.mubr.f32.mxu0 0.0
        %3391 = vmatmul.mubr.f32.gmra.mrb[0].mxu0 %v3281
        %v3392 = vpop.f32.mrb[0].mxu0
        %v3393 = vadd.f32 %v3319, %v3392
        %v3394 = vpop.f32.mrb[0].mxu0
        %v3395 = vadd.f32 %v3323, %v3394
        %3396 = vdwg.mxu0
        %v3397 = vmax.f32 %v3393, 0.0
        %v3398 = vmax.f32 %v3395, 0.0
        %v3399 = vld [vmem:[#allocation17] sm:$0xff]
        %v3400 = vld [vmem:[#allocation17 + $0x8] sm:$0xff]
        %v3401 = vld [vmem:[#allocation17 + $0x10] sm:$0xff]
        %v3402 = vld [vmem:[#allocation17 + $0x18] sm:$0xff]
        %v3403 = vld [vmem:[#allocation17 + $0x20] sm:$0xff]
        %v3404 = vld [vmem:[#allocation17 + $0x28] sm:$0xff]
        %v3405 = vld [vmem:[#allocation17 + $0x30] sm:$0xff]
        %v3406 = vld [vmem:[#allocation17 + $0x38] sm:$0xff]
        %v3407 = vld [vmem:[#allocation17 + $0x40] sm:$0xff]
        %v3408 = vld [vmem:[#allocation17 + $0x48] sm:$0xff]
        %v3409 = vld [vmem:[#allocation17 + $0x50] sm:$0xff]
        %v3410 = vld [vmem:[#allocation17 + $0x58] sm:$0xff]
        %v3411 = vld [vmem:[#allocation17 + $0x60] sm:$0xff]
        %v3412 = vld [vmem:[#allocation17 + $0x68] sm:$0xff]
        %v3413 = vld [vmem:[#allocation17 + $0x70] sm:$0xff]
        %v3414 = vld [vmem:[#allocation17 + $0x78] sm:$0xff]
        %v3415 = vld [vmem:[#allocation17 + $0x80] sm:$0xff]
        %v3416 = vld [vmem:[#allocation17 + $0x88] sm:$0xff]
        %v3417 = vld [vmem:[#allocation17 + $0x90] sm:$0xff]
        %v3418 = vld [vmem:[#allocation17 + $0x98] sm:$0xff]
        %v3419 = vld [vmem:[#allocation17 + $0xa0] sm:$0xff]
        %v3420 = vld [vmem:[#allocation17 + $0xa8] sm:$0xff]
        %v3421 = vld [vmem:[#allocation17 + $0xb0] sm:$0xff]
        %v3422 = vld [vmem:[#allocation17 + $0xb8] sm:$0xff]
        %v3423 = vld [vmem:[#allocation17 + $0xc0] sm:$0xff]
        %v3424 = vld [vmem:[#allocation17 + $0xc8] sm:$0xff]
        %v3425 = vld [vmem:[#allocation17 + $0xd0] sm:$0xff]
        %v3426 = vld [vmem:[#allocation17 + $0xd8] sm:$0xff]
        %v3427 = vld [vmem:[#allocation17 + $0xe0] sm:$0xff]
        %v3428 = vld [vmem:[#allocation17 + $0xe8] sm:$0xff]
        %v3429 = vld [vmem:[#allocation17 + $0xf0] sm:$0xff]
        %v3430 = vld [vmem:[#allocation17 + $0xf8] sm:$0xff]
        %v3431 = vld [vmem:[#allocation19] sm:$0x1]
        %v3433 = vlaneseq
        %v3434 = vshrl.u32 %v3433, 7
        %v3435 = vsub.s32 0, %v3434
        %v3436 = vrot.slane %v3431, %v3435
        %3438 = vmatprep.subr.mxu0 0.0
        %3439 = vmatpush1.msra.mxu0 %v3399
        %3440 = vmatprep.subr.mxu0 0.0
        %3441 = vmatpush1.msra.mxu0 %v3400
        %3442 = vmatprep.subr.mxu0 0.0
        %3443 = vmatpush1.msra.mxu0 %v3401
        %3444 = vmatprep.subr.mxu0 0.0
        %3445 = vmatpush1.msra.mxu0 %v3402
        %3446 = vmatprep.subr.mxu0 0.0
        %3447 = vmatpush1.msra.mxu0 %v3403
        %3448 = vmatprep.subr.mxu0 0.0
        %3449 = vmatpush1.msra.mxu0 %v3404
        %3450 = vmatprep.subr.mxu0 0.0
        %3451 = vmatpush1.msra.mxu0 %v3405
        %3452 = vmatprep.subr.mxu0 0.0
        %3453 = vmatpush1.msra.mxu0 %v3406
        %3454 = vmatprep.subr.mxu0 0.0
        %3455 = vmatpush1.msra.mxu0 %v3407
        %3456 = vmatprep.subr.mxu0 0.0
        %3457 = vmatpush1.msra.mxu0 %v3408
        %3458 = vmatprep.subr.mxu0 0.0
        %3459 = vmatpush1.msra.mxu0 %v3409
        %3460 = vmatprep.subr.mxu0 0.0
        %3461 = vmatpush1.msra.mxu0 %v3410
        %3462 = vmatprep.subr.mxu0 0.0
        %3463 = vmatpush1.msra.mxu0 %v3411
        %3464 = vmatprep.subr.mxu0 0.0
        %3465 = vmatpush1.msra.mxu0 %v3412
        %3466 = vmatprep.subr.mxu0 0.0
        %3467 = vmatpush1.msra.mxu0 %v3413
        %3468 = vmatprep.subr.mxu0 0.0
        %3469 = vmatpush1.msra.mxu0 %v3414
        %3470 = vmatprep.subr.mxu0 0.0
        %3471 = vmatpush1.msra.mxu0 %v3415
        %3472 = vmatprep.subr.mxu0 0.0
        %3473 = vmatpush1.msra.mxu0 %v3416
        %3474 = vmatprep.subr.mxu0 0.0
        %3475 = vmatpush1.msra.mxu0 %v3417
        %3476 = vmatprep.subr.mxu0 0.0
        %3477 = vmatpush1.msra.mxu0 %v3418
        %3478 = vmatprep.subr.mxu0 0.0
        %3479 = vmatpush1.msra.mxu0 %v3419
        %3480 = vmatprep.subr.mxu0 0.0
        %3481 = vmatpush1.msra.mxu0 %v3420
        %3482 = vmatprep.subr.mxu0 0.0
        %3483 = vmatpush1.msra.mxu0 %v3421
        %3484 = vmatprep.subr.mxu0 0.0
        %3485 = vmatpush1.msra.mxu0 %v3422
        %3486 = vmatprep.subr.mxu0 0.0
        %3487 = vmatpush1.msra.mxu0 %v3423
        %3488 = vmatprep.subr.mxu0 0.0
        %3489 = vmatpush1.msra.mxu0 %v3424
        %3490 = vmatprep.subr.mxu0 0.0
        %3491 = vmatpush1.msra.mxu0 %v3425
        %3492 = vmatprep.subr.mxu0 0.0
        %3493 = vmatpush1.msra.mxu0 %v3426
        %3494 = vmatprep.subr.mxu0 0.0
        %3495 = vmatpush1.msra.mxu0 %v3427
        %3496 = vmatprep.subr.mxu0 0.0
        %3497 = vmatpush1.msra.mxu0 %v3428
        %3498 = vmatprep.subr.mxu0 0.0
        %3499 = vmatpush1.msra.mxu0 %v3429
        %3500 = vmatprep.subr.mxu0 0.0
        %3501 = vmatpush1.msra.mxu0 %v3430
        %3502 = vmatprep.mubr.f32.mxu0 %v3398
        %3503 = vmatmul.mubr.f32.gmra.mrb[0].mxu0 %v3397
        %v3504 = vpop.f32.mrb[0].mxu0
        %v3505 = vadd.f32 %v3436, %v3504
        %v3506 = vpop.f32.mrb[0].mxu0
        %3507 = vdwg.mxu0
        %v3508 = vadd.f32 %v3281, %v3505
        %v3509 = vld [vmem:[#allocation20 + $0x2] sm:$0x1]
        %v3510 = vld [vmem:[#allocation22 + $0x2] sm:$0x1]
        %3511 = vadd.xlane.f32.xlu0 %v3508
        %v3512 = vpop.xlane.xlu0 %3511
        %v3513 = vmul.f32 %v3512, %v1988
        %v3514 = vsub.f32 %v3508, %v3513
        %v3515 = vmul.f32 %v3514, %v3514
        %3516 = vadd.xlane.f32.xlu0 %v3515
        %v3517 = vpop.xlane.xlu0 %3516
        %v3518 = vmul.f32 %v3517, %v1988
        %v3519 = vadd.f32 %v3518, 1e-06
        %v3520 = vrsqrt.pop %v3519
        %v3521 = vmul.f32 %v3514, %v3520
        %v3522 = vlaneseq
        %v3523 = vshrl.u32 %v3522, 7
        %v3524 = vsub.s32 0, %v3523
        %v3525 = vrot.slane %v3509, %v3524
        %v3526 = vmul.f32 %v3521, %v3525
        %v3527 = vlaneseq
        %v3528 = vshrl.u32 %v3527, 7
        %v3529 = vsub.s32 0, %v3528
        %v3530 = vrot.slane %v3510, %v3529
        %v3531 = vadd.f32 %v3526, %v3530
        %3532 = vst [vmem:[%s680] sm:$0xff] %v3531
        %s3533 = sand.u32 %s350, 1
        %s3534 = scalar_lea.sflag [#allocation4], %s3533
        %s3535 = sand.u32 %s350, 1
        %s3536 = smul.addr %s3535, 8
        %s3537 = scalar_lea.vmem [#allocation23], %s3536
        // Predicated region
        $region125: #{tpu_custom_call.1} parent=71 // pred_check
          %p3538 = pneg %p360
        $region126: #{tpu_custom_call.1} parent=71 // pred_check_branch
          %3540 = sbr.rel (%p3538) target = $region128
        $region127: #{tpu_custom_call.1} parent=71 // pred_region
          %s3542 = ssub.s32 128, 128
          %3543 = vsyncadd %s3534, %s3542
          %s3544 = smul.addr %s42, 2
          %s3545 = sadd.s32 %s43, %s3544
          %s3546 = smul.addr %s3545, 128
          %s3547 = scalar_lea.hbm %s13, %s3546
          %s3549 = sshll.u32 %s3537, 4
          %s3550 = int_to_ptr.vmem [resolvable:$true] %s3549
          %3552 = dma.vmem_to_hbm [thread:$0]  %s3550, 128, %s3547, %s3534
        $region128: #{tpu_custom_call.1} parent=71 // pred_fallthru
          _
      $region72: #{tpu_custom_call.1} parent=5 // pred_fallthru
        _
      %p3553 = scmp.le.s32.totalorder 2, %s33
      // Predicated region
      $region129: #{tpu_custom_call.1} parent=5 // pred_check
        %p3554 = pneg %p3553
      $region130: #{tpu_custom_call.1} parent=5 // pred_check_branch
        %3556 = sbr.rel (%p3554) target = $region132
      $region131: #{tpu_custom_call.1} parent=5 // pred_region
        %s3557 = ssub.s32 %s33, 2
        // Predicated region
        $region133: #{tpu_custom_call.1} parent=131 // pred_check
          %p3558 = pneg %p366
        $region134: #{tpu_custom_call.1} parent=131 // pred_check_branch
          %3560 = sbr.rel (%p3558) target = $region136
        $region135: #{tpu_custom_call.1} parent=131 // pred_region
          %s3561 = sand.u32 %s351, 1
          %s3562 = scalar_lea.sflag [#allocation4], %s3561
          %s3563 = sand.u32 %s351, 1
          %s3564 = smul.addr %s3563, 8
          %s3565 = scalar_lea.vmem [#allocation23], %s3564
          %3566 = dma.done %s3562, 128
        $region136: #{tpu_custom_call.1} parent=131 // pred_fallthru
          _
      $region132: #{tpu_custom_call.1} parent=5 // pred_fallthru
        _
    $region6: #{tpu_custom_call.1} parent=1 // loop_footer
      %s37 = sadd.s32 1, %s33
    $region7: #{tpu_custom_call.1} parent=1 // loop_footer_branch
      %32 = sbr.rel target = $region3
    $region8: #{tpu_custom_call.1} parent=1 // loop_exit
      _
    %3567 = vsyncpa [#allocation3], 1
    %s3568 = scalar_lea.sflag [#allocation3], 1
    %3569 = vsyncpa %s3568, 1
    %3570 = vsyncpa [#allocation6], 1
    %s3571 = scalar_lea.sflag [#allocation6], 1
    %3572 = vsyncpa %s3571, 1
    %3573 = vsyncpa [#allocation9], 1
    %3574 = vsyncpa [#allocation12], 1
    %3575 = vsyncpa [#allocation15], 1
    %3576 = vsyncpa [#allocation18], 1
    %3577 = vsyncpa [#allocation21], 1
    %3578 = vsyncpa [#allocation4], 1
    %s3579 = scalar_lea.sflag [#allocation4], 1
    %3580 = vsyncpa %s3579, 1

</llo_original>
